<compile_context>
chip_gen: v7x
topology: tpu7x:2x2x1
jax: 0.10.0
libtpu: 0.0.40
codegen_flags: <defaults>
</compile_context>

<pallas_src>
import math
import functools

import numpy as np
import jax
import jax.numpy as jnp
from jax.experimental import pallas as pl
from jax.experimental.pallas import tpu as pltpu

EPS_LN = 1e-5       # nn.LayerNorm default (inside transformer layers)
EPS_OUT = 1e-12     # parameter-free layer_norm() on the projected output
NEG_INF = -1e30     # additive padding mask (exp underflows to exactly 0)
PAD_IDX = 0

# -------------------- model hyper-parameters (small) --------------------
VOCAB_WD = 50
LAYERS = 2
EMBED_DIM = 32
FF_EMBED_DIM = 64
NUM_HEADS = 4
HEAD_DIM = EMBED_DIM // NUM_HEADS
OUTPUT_DIM = 16
SEQ_LEN = 8
BATCH = 2

# bf16 operands feed the MXU natively on v6e/v7x (f32 matmul is emulated);
# accumulation is always f32 via preferred_element_type. Set to jnp.float32
# for exact f32 matmuls.
MM_DTYPE = jnp.bfloat16


# ============================ Pallas kernel =============================

def _ln(x, gamma, beta, eps):
    u = jnp.mean(x, axis=-1, keepdims=True)
    s = jnp.mean((x - u) ** 2, axis=-1, keepdims=True)
    return (x - u) * jax.lax.rsqrt(s + eps) * gamma + beta


def _gelu(x):
    # tanh approximation of GELU (matches the gelu() used by the reference
    # transformer implementation).
    return 0.5 * x * (1.0 + jnp.tanh(math.sqrt(2.0 / math.pi)
                                     * (x + 0.044715 * x * x * x)))


def fused_encoder_kernel(x_ref, mask_ref,
                         w_qkv_ref, w_o_ref, w_f1_ref, w_f2_ref,
                         b_att_ref, vec_d_ref, b_f1_ref,
                         pw_ref, pb_ref,
                         out_ref, *, num_heads, num_layers):
    """Fused: L x transformer layer -> take token 0 -> proj -> layer_norm.

    x: (B, T, D) f32, mask: (B, 1, T) additive f32.
    w_qkv: (L, 3, H, D, hd) bf16 (head-major, x @ W layout)
    w_o:   (L, H, hd, D) bf16
    w_f1:  (L, D, F) bf16, w_f2: (L, F, D) bf16
    b_att: (L, 3, H, 1, hd) f32 (q/k/v biases, head-major)
    vec_d: (L, 6, D) f32  = [bo, ln1_g, ln1_b, b2, ln2_g, ln2_b]
    b_f1:  (L, 1, F) f32
    pw: (D, OUT) f32, pb: (1, OUT) f32 -> out: (B, OUT) f32
    """
    f32 = jnp.float32
    x3 = x_ref[...].astype(f32)                                # (B, T, D)
    B, T, D = x3.shape
    hd = D // num_heads
    scale = hd ** -0.5

    x2 = x3.reshape(B * T, D)                                  # (BT, D)
    # broadcast the additive key-padding mask ONCE (reused by every layer/head)
    mask_btt = jnp.broadcast_to(mask_ref[...].astype(f32), (B, T, T))

    for li in range(num_layers):                               # static unroll (2)
        vd = vec_d_ref[li]                                     # (6, D) f32
        bo, g1, be1, b2, g2, be2 = [vd[r:r + 1, :] for r in range(6)]

        xb = x2.astype(MM_DTYPE)

        # ---- multi-head self attention (head-major weights: no activation
        # lane-slicing; per-head contributions accumulated into the output
        # projection to avoid a lane-concat relayout at D=32) ----------------
        attn = jnp.zeros((B * T, D), f32)
        for h in range(num_heads):                             # static unroll (4)
            wq = w_qkv_ref[li, 0, h]                           # (D, hd) bf16
            wk = w_qkv_ref[li, 1, h]
            wv = w_qkv_ref[li, 2, h]
            bq = b_att_ref[li, 0, h]                           # (1, hd) f32
            bk = b_att_ref[li, 1, h]
            bv = b_att_ref[li, 2, h]

            qh = (jnp.dot(xb, wq, preferred_element_type=f32) + bq) * scale
            kh = jnp.dot(xb, wk, preferred_element_type=f32) + bk
            vh = jnp.dot(xb, wv, preferred_element_type=f32) + bv
            qh = qh.reshape(B, T, hd)
            kh = kh.reshape(B, T, hd)
            vh = vh.reshape(B, T, hd)

            s = jnp.einsum('btd,bsd->bts',
                           qh.astype(MM_DTYPE), kh.astype(MM_DTYPE),
                           preferred_element_type=f32)         # (B, T, T)
            s = s + mask_btt                                   # pre-broadcast mask
            s = s - jnp.max(s, axis=-1, keepdims=True)
            p = jnp.exp(s)
            p = p * pl.reciprocal(jnp.sum(p, axis=-1, keepdims=True), approx=True)
            ctx = jnp.einsum('bts,bsd->btd',
                             p.astype(MM_DTYPE), vh.astype(MM_DTYPE),
                             preferred_element_type=f32)       # (B, T, hd)
            attn = attn + jnp.dot(ctx.reshape(B * T, hd).astype(MM_DTYPE),
                                  w_o_ref[li, h],
                                  preferred_element_type=f32)
        attn = attn + bo

        # residual + post layer norm
        y = _ln(x2 + attn, g1, be1, EPS_LN)

        # ---- feed forward --------------------------------------------------
        h1 = jnp.dot(y.astype(MM_DTYPE), w_f1_ref[li],
                     preferred_element_type=f32) + b_f1_ref[li]
        h1 = _gelu(h1)
        h2 = jnp.dot(h1.astype(MM_DTYPE), w_f2_ref[li],
                     preferred_element_type=f32) + b2
        x2 = _ln(y + h2, g2, be2, EPS_LN)

    # ---- first token, projection, parameter-free layer norm ----------------
    ret = x2.reshape(B, T, D)[:, 0, :]                         # (B, D)
    y = jnp.dot(ret, pw_ref[...], preferred_element_type=f32) + pb_ref[...]
    u = jnp.mean(y, axis=-1, keepdims=True)
    v = jnp.mean((y - u) ** 2, axis=-1, keepdims=True)
    out_ref[...] = (y - u) * jax.lax.rsqrt(v + EPS_OUT)


# ============================ glue (plain JAX) ===========================

_VMEM = pl.BlockSpec(memory_space=pltpu.MemorySpace.VMEM)


def fused_forward(x, mask, params):
    """Single pallas_call for the whole encoder+proj forward.

    Everything (weights + activations) is ~100 KB, far below the scoped VMEM
    limit on every generation, so no grid is used.
    # TODO(synk): once batch/seq grow, add a parallel batch grid axis
    # (dimension_semantics=("parallel",)) for v7x's 2nd TensorCore and size
    # tiles against v7x's 64 MiB VMEM (set vmem_limit_bytes explicitly).
    """
    args = (x, mask,
            params['w_qkv'], params['w_o'], params['w_f1'], params['w_f2'],
            params['b_att'], params['vec_d'], params['b_f1'],
            params['proj_w'], params['proj_b'])
    return pl.pallas_call(
        functools.partial(fused_encoder_kernel,
                          num_heads=NUM_HEADS, num_layers=LAYERS),
        out_shape=jax.ShapeDtypeStruct((x.shape[0], OUTPUT_DIM), jnp.float32),
        in_specs=[_VMEM] * len(args),
        out_specs=_VMEM,
    )(*args)


@functools.lru_cache(maxsize=None)
def _pos_embedding_const(num_positions, dim):
    """Sinusoidal positional table; pure function of (T, dim), computed once on
    host (numpy) and embedded as a constant under jit."""
    half = dim // 2
    freq = np.exp(np.arange(half, dtype=np.float64)
                  * -(math.log(10000.0) / (half - 1)))
    args = np.arange(num_positions, dtype=np.float64)[:, None] * freq[None, :]
    emb = np.concatenate([np.sin(args), np.cos(args)], axis=1)
    if dim % 2 == 1:
        emb = np.concatenate([emb, np.zeros((num_positions, 1))], axis=1)
    return jnp.asarray(emb, jnp.float32)                        # (T, dim)


def init_params(key):
    """Random params in the packed / stacked / head-major layout the kernel uses."""
    std = 0.02
    ks = jax.random.split(key, 2 + LAYERS)

    tok = std * jax.random.normal(ks[0], (VOCAB_WD, EMBED_DIM), jnp.float32)
    tok = tok.at[PAD_IDX].set(0.0)                              # padding row zeroed

    w_qkv, w_o, w_f1, w_f2 = [], [], [], []
    for li in range(LAYERS):
        kq, kk, kv, ko, k1, k2 = jax.random.split(ks[1 + li], 6)
        wq = std * jax.random.normal(kq, (EMBED_DIM, EMBED_DIM), jnp.float32)
        wk = std * jax.random.normal(kk, (EMBED_DIM, EMBED_DIM), jnp.float32)
        wv = std * jax.random.normal(kv, (EMBED_DIM, EMBED_DIM), jnp.float32)
        wo = std * jax.random.normal(ko, (EMBED_DIM, EMBED_DIM), jnp.float32)
        # (in, out) layout; split the q/k/v *output* dim (and wo *input* dim)
        # into heads -> head-major weights, so the kernel never lane-slices.
        split = lambda w: w.reshape(EMBED_DIM, NUM_HEADS, HEAD_DIM).transpose(1, 0, 2)
        w_qkv.append(jnp.stack([split(wq), split(wk), split(wv)], axis=0))  # (3,H,D,hd)
        w_o.append(wo.reshape(NUM_HEADS, HEAD_DIM, EMBED_DIM))              # (H,hd,D)
        w_f1.append(std * jax.random.normal(k1, (EMBED_DIM, FF_EMBED_DIM), jnp.float32))
        w_f2.append(std * jax.random.normal(k2, (FF_EMBED_DIM, EMBED_DIM), jnp.float32))

    # per-layer D-length vectors: [bo, ln1_g, ln1_b, b2, ln2_g, ln2_b]
    vec_row = jnp.stack([jnp.zeros(EMBED_DIM), jnp.ones(EMBED_DIM),
                         jnp.zeros(EMBED_DIM), jnp.zeros(EMBED_DIM),
                         jnp.ones(EMBED_DIM), jnp.zeros(EMBED_DIM)], axis=0)

    proj_w = std * jax.random.normal(ks[-1], (EMBED_DIM, OUTPUT_DIM), jnp.float32)
    proj_b = jnp.zeros((1, OUTPUT_DIM), jnp.float32)

    return dict(
        tok_embed=tok,
        w_qkv=jnp.stack(w_qkv).astype(MM_DTYPE),                # (L,3,H,D,hd)
        w_o=jnp.stack(w_o).astype(MM_DTYPE),                    # (L,H,hd,D)
        w_f1=jnp.stack(w_f1).astype(MM_DTYPE),                  # (L,D,F)
        w_f2=jnp.stack(w_f2).astype(MM_DTYPE),                  # (L,F,D)
        b_att=jnp.zeros((LAYERS, 3, NUM_HEADS, 1, HEAD_DIM), jnp.float32),
        vec_d=jnp.tile(vec_row[None], (LAYERS, 1, 1)),          # (L,6,D)
        b_f1=jnp.zeros((LAYERS, 1, FF_EMBED_DIM), jnp.float32),
        proj_w=proj_w, proj_b=proj_b,
    )


@functools.partial(jax.jit, static_argnames=("batch_first",))
def proj_encoder_wd_forward(params, input_eq, input_wd, batch_first=False):
    """Forward pass (eval mode, dropout == identity). input_eq is unused by the
    reference forward; input_wd: int32 (T, B) (or (B, T) if batch_first)."""
    del input_eq
    if batch_first:
        input_wd = input_wd.T
    T, B = input_wd.shape

    # embedding gather + positional add (glue, not the hot path)
    tok = jnp.take(params['tok_embed'], input_wd, axis=0)       # (T, B, D)
    pos = _pos_embedding_const(T, EMBED_DIM)[:, None, :]        # (T, 1, D) const
    x = math.sqrt(EMBED_DIM) * tok + pos                        # (T, B, D)
    # F.dropout(training=False) -> identity

    pad = (input_wd == PAD_IDX)                                 # (T, B)
    x = jnp.transpose(x, (1, 0, 2)).astype(jnp.float32)         # (B, T, D)
    mask = jnp.where(pad.T, NEG_INF, 0.0).astype(jnp.float32)[:, None, :]  # (B,1,T)

    # one fused Pallas kernel: L transformer layers + first-token proj + LN
    return fused_forward(x, mask, params)                       # (B, output_dim)


# ================================ main ==================================

if __name__ == "__main__":
    key = jax.random.PRNGKey(0)
    kp, kd = jax.random.split(key)
    params = init_params(kp)

    # deterministic token ids (T, B), with a bit of padding in column 1
    input_wd = jax.random.randint(kd, (SEQ_LEN, BATCH), 1, VOCAB_WD, dtype=jnp.int32)
    input_wd = input_wd.at[-2:, 1].set(PAD_IDX)
    input_eq = jnp.zeros((SEQ_LEN, BATCH), jnp.int32)   # unused by forward()

    out = proj_encoder_wd_forward(params, input_eq, input_wd, batch_first=False)
    out = jax.block_until_ready(out)

    assert out.shape == (BATCH, OUTPUT_DIM)
    assert bool(jnp.all(jnp.isfinite(out)))
    # per-row mean ~ 0 (parameter-free layer norm on the output)
    assert bool(jnp.all(jnp.abs(jnp.mean(out, axis=-1)) < 1e-4))
    print("KERNEL_OK")
</pallas_src>

<mosaic_0001>
module attributes {stable_mosaic.version = 11 : i64} {
  func.func @fused_encoder_kernel(%arg0: memref<2x8x32xf32, #tpu.memory_space<vmem>>, %arg1: memref<2x1x8xf32, #tpu.memory_space<vmem>>, %arg2: memref<2x3x4x32x8xbf16, #tpu.memory_space<vmem>>, %arg3: memref<2x4x8x32xbf16, #tpu.memory_space<vmem>>, %arg4: memref<2x32x64xbf16, #tpu.memory_space<vmem>>, %arg5: memref<2x64x32xbf16, #tpu.memory_space<vmem>>, %arg6: memref<2x3x4x1x8xf32, #tpu.memory_space<vmem>>, %arg7: memref<2x6x32xf32, #tpu.memory_space<vmem>>, %arg8: memref<2x1x64xf32, #tpu.memory_space<vmem>>, %arg9: memref<32x16xf32, #tpu.memory_space<vmem>>, %arg10: memref<1x16xf32, #tpu.memory_space<vmem>>, %arg11: memref<2x16xf32, #tpu.memory_space<vmem>>) attributes {dimension_semantics = [], scalar_prefetch = 0 : i64, scratch_operands = 0 : i64, tpu.core_type = #tpu.core_type<tc>} {
    %c0 = arith.constant 0 : index
    %c0_0 = arith.constant 0 : index
    %c0_1 = arith.constant 0 : index
    %0 = vector.load %arg0[%c0, %c0_0, %c0_1] : memref<2x8x32xf32, #tpu.memory_space<vmem>>, vector<2x8x32xf32>
    %1 = vector.shape_cast %0 : vector<2x8x32xf32> to vector<16x32xf32>
    %c0_2 = arith.constant 0 : index
    %c0_3 = arith.constant 0 : index
    %c0_4 = arith.constant 0 : index
    %2 = vector.load %arg1[%c0_2, %c0_3, %c0_4] : memref<2x1x8xf32, #tpu.memory_space<vmem>>, vector<2x1x8xf32>
    %3 = vector.shape_cast %2 : vector<2x1x8xf32> to vector<2x1x8xf32>
    %4 = vector.broadcast %3 : vector<2x1x8xf32> to vector<2x8x8xf32>
    %c0_5 = arith.constant 0 : index
    %c0_6 = arith.constant 0 : index
    %c0_7 = arith.constant 0 : index
    %5 = vector.load %arg7[%c0_5, %c0_6, %c0_7] : memref<2x6x32xf32, #tpu.memory_space<vmem>>, vector<1x6x32xf32>
    %6 = vector.shape_cast %5 : vector<1x6x32xf32> to vector<6x32xf32>
    %7 = vector.extract_strided_slice %6 {offsets = [0, 0], sizes = [1, 32], strides = [1, 1]} : vector<6x32xf32> to vector<1x32xf32>
    %8 = vector.extract_strided_slice %6 {offsets = [1, 0], sizes = [1, 32], strides = [1, 1]} : vector<6x32xf32> to vector<1x32xf32>
    %9 = vector.extract_strided_slice %6 {offsets = [2, 0], sizes = [1, 32], strides = [1, 1]} : vector<6x32xf32> to vector<1x32xf32>
    %10 = vector.extract_strided_slice %6 {offsets = [3, 0], sizes = [1, 32], strides = [1, 1]} : vector<6x32xf32> to vector<1x32xf32>
    %11 = vector.extract_strided_slice %6 {offsets = [4, 0], sizes = [1, 32], strides = [1, 1]} : vector<6x32xf32> to vector<1x32xf32>
    %12 = vector.extract_strided_slice %6 {offsets = [5, 0], sizes = [1, 32], strides = [1, 1]} : vector<6x32xf32> to vector<1x32xf32>
    %13 = arith.truncf %1 : vector<16x32xf32> to vector<16x32xbf16>
    %cst = arith.constant 0.000000e+00 : f32
    %14 = vector.broadcast %cst : f32 to vector<16x32xf32>
    %c0_8 = arith.constant 0 : index
    %c0_9 = arith.constant 0 : index
    %c0_10 = arith.constant 0 : index
    %c0_11 = arith.constant 0 : index
    %c0_12 = arith.constant 0 : index
    %15 = vector.load %arg2[%c0_8, %c0_9, %c0_10, %c0_11, %c0_12] : memref<2x3x4x32x8xbf16, #tpu.memory_space<vmem>>, vector<1x1x1x32x8xbf16>
    %16 = vector.shape_cast %15 : vector<1x1x1x32x8xbf16> to vector<32x8xbf16>
    %c0_13 = arith.constant 0 : index
    %c1 = arith.constant 1 : index
    %c0_14 = arith.constant 0 : index
    %c0_15 = arith.constant 0 : index
    %c0_16 = arith.constant 0 : index
    %17 = vector.load %arg2[%c0_13, %c1, %c0_14, %c0_15, %c0_16] : memref<2x3x4x32x8xbf16, #tpu.memory_space<vmem>>, vector<1x1x1x32x8xbf16>
    %18 = vector.shape_cast %17 : vector<1x1x1x32x8xbf16> to vector<32x8xbf16>
    %c0_17 = arith.constant 0 : index
    %c2 = arith.constant 2 : index
    %c0_18 = arith.constant 0 : index
    %c0_19 = arith.constant 0 : index
    %c0_20 = arith.constant 0 : index
    %19 = vector.load %arg2[%c0_17, %c2, %c0_18, %c0_19, %c0_20] : memref<2x3x4x32x8xbf16, #tpu.memory_space<vmem>>, vector<1x1x1x32x8xbf16>
    %20 = vector.shape_cast %19 : vector<1x1x1x32x8xbf16> to vector<32x8xbf16>
    %c0_21 = arith.constant 0 : index
    %c0_22 = arith.constant 0 : index
    %c0_23 = arith.constant 0 : index
    %c0_24 = arith.constant 0 : index
    %c0_25 = arith.constant 0 : index
    %21 = vector.load %arg6[%c0_21, %c0_22, %c0_23, %c0_24, %c0_25] : memref<2x3x4x1x8xf32, #tpu.memory_space<vmem>>, vector<1x1x1x1x8xf32>
    %22 = vector.shape_cast %21 : vector<1x1x1x1x8xf32> to vector<1x8xf32>
    %c0_26 = arith.constant 0 : index
    %c1_27 = arith.constant 1 : index
    %c0_28 = arith.constant 0 : index
    %c0_29 = arith.constant 0 : index
    %c0_30 = arith.constant 0 : index
    %23 = vector.load %arg6[%c0_26, %c1_27, %c0_28, %c0_29, %c0_30] : memref<2x3x4x1x8xf32, #tpu.memory_space<vmem>>, vector<1x1x1x1x8xf32>
    %24 = vector.shape_cast %23 : vector<1x1x1x1x8xf32> to vector<1x8xf32>
    %c0_31 = arith.constant 0 : index
    %c2_32 = arith.constant 2 : index
    %c0_33 = arith.constant 0 : index
    %c0_34 = arith.constant 0 : index
    %c0_35 = arith.constant 0 : index
    %25 = vector.load %arg6[%c0_31, %c2_32, %c0_33, %c0_34, %c0_35] : memref<2x3x4x1x8xf32, #tpu.memory_space<vmem>>, vector<1x1x1x1x8xf32>
    %26 = vector.shape_cast %25 : vector<1x1x1x1x8xf32> to vector<1x8xf32>
    %cst_36 = arith.constant dense<0.000000e+00> : vector<16x8xf32>
    %27 = tpu.matmul %13, %16, %cst_36 {dimension_numbers = #tpu.dot_dimension_numbers<[1], [0], [0], [1], [0, 0, 1, 1], [], []>} : vector<16x32xbf16>, vector<32x8xbf16>, vector<16x8xf32> -> vector<16x8xf32>
    %28 = vector.broadcast %22 : vector<1x8xf32> to vector<16x8xf32>
    %29 = arith.addf %27, %28 : vector<16x8xf32>
    %cst_37 = arith.constant 0.353553385 : f32
    %30 = vector.broadcast %cst_37 : f32 to vector<16x8xf32>
    %31 = arith.mulf %29, %30 : vector<16x8xf32>
    %cst_38 = arith.constant dense<0.000000e+00> : vector<16x8xf32>
    %32 = tpu.matmul %13, %18, %cst_38 {dimension_numbers = #tpu.dot_dimension_numbers<[1], [0], [0], [1], [0, 0, 1, 1], [], []>} : vector<16x32xbf16>, vector<32x8xbf16>, vector<16x8xf32> -> vector<16x8xf32>
    %33 = vector.broadcast %24 : vector<1x8xf32> to vector<16x8xf32>
    %34 = arith.addf %32, %33 : vector<16x8xf32>
    %cst_39 = arith.constant dense<0.000000e+00> : vector<16x8xf32>
    %35 = tpu.matmul %13, %20, %cst_39 {dimension_numbers = #tpu.dot_dimension_numbers<[1], [0], [0], [1], [0, 0, 1, 1], [], []>} : vector<16x32xbf16>, vector<32x8xbf16>, vector<16x8xf32> -> vector<16x8xf32>
    %36 = vector.broadcast %26 : vector<1x8xf32> to vector<16x8xf32>
    %37 = arith.addf %35, %36 : vector<16x8xf32>
    %38 = vector.shape_cast %31 : vector<16x8xf32> to vector<2x8x8xf32>
    %39 = vector.shape_cast %34 : vector<16x8xf32> to vector<2x8x8xf32>
    %40 = vector.shape_cast %37 : vector<16x8xf32> to vector<2x8x8xf32>
    %41 = arith.truncf %38 : vector<2x8x8xf32> to vector<2x8x8xbf16>
    %42 = arith.truncf %39 : vector<2x8x8xf32> to vector<2x8x8xbf16>
    "tpu.trace_start"() <{level = 10 : i32, message = "btd,bsd->bts"}> : () -> ()
    %cst_40 = arith.constant dense<0.000000e+00> : vector<2x8x8xf32>
    %43 = tpu.matmul %41, %42, %cst_40 {dimension_numbers = #tpu.dot_dimension_numbers<[2], [2], [1], [1], [0, 0, 0, 1, 1, 1], [0], [0]>} : vector<2x8x8xbf16>, vector<2x8x8xbf16>, vector<2x8x8xf32> -> vector<2x8x8xf32>
    "tpu.trace_stop"() : () -> ()
    %44 = arith.addf %43, %4 : vector<2x8x8xf32>
    %cst_41 = arith.constant dense<0xFF800000> : vector<2x8xf32>
    %45 = vector.multi_reduction <maximumf>, %44, %cst_41 [2] : vector<2x8x8xf32> to vector<2x8xf32>
    %46 = vector.shape_cast %45 : vector<2x8xf32> to vector<2x8x1xf32>
    %47 = vector.broadcast %46 : vector<2x8x1xf32> to vector<2x8x8xf32>
    %48 = arith.subf %44, %47 : vector<2x8x8xf32>
    %49 = math.exp %48 : vector<2x8x8xf32>
    %cst_42 = arith.constant dense<0.000000e+00> : vector<2x8xf32>
    %50 = vector.multi_reduction <add>, %49, %cst_42 [2] : vector<2x8x8xf32> to vector<2x8xf32>
    %51 = vector.shape_cast %50 : vector<2x8xf32> to vector<2x8x1xf32>
    %52 = tpu.reciprocal %51 {approx = true} : vector<2x8x1xf32> -> vector<2x8x1xf32>
    %53 = vector.broadcast %52 : vector<2x8x1xf32> to vector<2x8x8xf32>
    %54 = arith.mulf %49, %53 : vector<2x8x8xf32>
    %55 = arith.truncf %54 : vector<2x8x8xf32> to vector<2x8x8xbf16>
    %56 = arith.truncf %40 : vector<2x8x8xf32> to vector<2x8x8xbf16>
    "tpu.trace_start"() <{level = 10 : i32, message = "bts,bsd->btd"}> : () -> ()
    %cst_43 = arith.constant dense<0.000000e+00> : vector<2x8x8xf32>
    %57 = tpu.matmul %55, %56, %cst_43 {dimension_numbers = #tpu.dot_dimension_numbers<[2], [1], [1], [2], [0, 0, 0, 1, 1, 2], [0], [0]>} : vector<2x8x8xbf16>, vector<2x8x8xbf16>, vector<2x8x8xf32> -> vector<2x8x8xf32>
    "tpu.trace_stop"() : () -> ()
    %58 = vector.shape_cast %57 : vector<2x8x8xf32> to vector<16x8xf32>
    %59 = arith.truncf %58 : vector<16x8xf32> to vector<16x8xbf16>
    %c0_44 = arith.constant 0 : index
    %c0_45 = arith.constant 0 : index
    %c0_46 = arith.constant 0 : index
    %c0_47 = arith.constant 0 : index
    %60 = vector.load %arg3[%c0_44, %c0_45, %c0_46, %c0_47] : memref<2x4x8x32xbf16, #tpu.memory_space<vmem>>, vector<1x1x8x32xbf16>
    %61 = vector.shape_cast %60 : vector<1x1x8x32xbf16> to vector<8x32xbf16>
    %cst_48 = arith.constant dense<0.000000e+00> : vector<16x32xf32>
    %62 = tpu.matmul %59, %61, %cst_48 {dimension_numbers = #tpu.dot_dimension_numbers<[1], [0], [0], [1], [0, 0, 1, 1], [], []>} : vector<16x8xbf16>, vector<8x32xbf16>, vector<16x32xf32> -> vector<16x32xf32>
    %63 = arith.addf %14, %62 : vector<16x32xf32>
    %c0_49 = arith.constant 0 : index
    %c0_50 = arith.constant 0 : index
    %c1_51 = arith.constant 1 : index
    %c0_52 = arith.constant 0 : index
    %c0_53 = arith.constant 0 : index
    %64 = vector.load %arg2[%c0_49, %c0_50, %c1_51, %c0_52, %c0_53] : memref<2x3x4x32x8xbf16, #tpu.memory_space<vmem>>, vector<1x1x1x32x8xbf16>
    %65 = vector.shape_cast %64 : vector<1x1x1x32x8xbf16> to vector<32x8xbf16>
    %c0_54 = arith.constant 0 : index
    %c1_55 = arith.constant 1 : index
    %c1_56 = arith.constant 1 : index
    %c0_57 = arith.constant 0 : index
    %c0_58 = arith.constant 0 : index
    %66 = vector.load %arg2[%c0_54, %c1_55, %c1_56, %c0_57, %c0_58] : memref<2x3x4x32x8xbf16, #tpu.memory_space<vmem>>, vector<1x1x1x32x8xbf16>
    %67 = vector.shape_cast %66 : vector<1x1x1x32x8xbf16> to vector<32x8xbf16>
    %c0_59 = arith.constant 0 : index
    %c2_60 = arith.constant 2 : index
    %c1_61 = arith.constant 1 : index
    %c0_62 = arith.constant 0 : index
    %c0_63 = arith.constant 0 : index
    %68 = vector.load %arg2[%c0_59, %c2_60, %c1_61, %c0_62, %c0_63] : memref<2x3x4x32x8xbf16, #tpu.memory_space<vmem>>, vector<1x1x1x32x8xbf16>
    %69 = vector.shape_cast %68 : vector<1x1x1x32x8xbf16> to vector<32x8xbf16>
    %c0_64 = arith.constant 0 : index
    %c0_65 = arith.constant 0 : index
    %c1_66 = arith.constant 1 : index
    %c0_67 = arith.constant 0 : index
    %c0_68 = arith.constant 0 : index
    %70 = vector.load %arg6[%c0_64, %c0_65, %c1_66, %c0_67, %c0_68] : memref<2x3x4x1x8xf32, #tpu.memory_space<vmem>>, vector<1x1x1x1x8xf32>
    %71 = vector.shape_cast %70 : vector<1x1x1x1x8xf32> to vector<1x8xf32>
    %c0_69 = arith.constant 0 : index
    %c1_70 = arith.constant 1 : index
    %c1_71 = arith.constant 1 : index
    %c0_72 = arith.constant 0 : index
    %c0_73 = arith.constant 0 : index
    %72 = vector.load %arg6[%c0_69, %c1_70, %c1_71, %c0_72, %c0_73] : memref<2x3x4x1x8xf32, #tpu.memory_space<vmem>>, vector<1x1x1x1x8xf32>
    %73 = vector.shape_cast %72 : vector<1x1x1x1x8xf32> to vector<1x8xf32>
    %c0_74 = arith.constant 0 : index
    %c2_75 = arith.constant 2 : index
    %c1_76 = arith.constant 1 : index
    %c0_77 = arith.constant 0 : index
    %c0_78 = arith.constant 0 : index
    %74 = vector.load %arg6[%c0_74, %c2_75, %c1_76, %c0_77, %c0_78] : memref<2x3x4x1x8xf32, #tpu.memory_space<vmem>>, vector<1x1x1x1x8xf32>
    %75 = vector.shape_cast %74 : vector<1x1x1x1x8xf32> to vector<1x8xf32>
    %cst_79 = arith.constant dense<0.000000e+00> : vector<16x8xf32>
    %76 = tpu.matmul %13, %65, %cst_79 {dimension_numbers = #tpu.dot_dimension_numbers<[1], [0], [0], [1], [0, 0, 1, 1], [], []>} : vector<16x32xbf16>, vector<32x8xbf16>, vector<16x8xf32> -> vector<16x8xf32>
    %77 = vector.broadcast %71 : vector<1x8xf32> to vector<16x8xf32>
    %78 = arith.addf %76, %77 : vector<16x8xf32>
    %cst_80 = arith.constant 0.353553385 : f32
    %79 = vector.broadcast %cst_80 : f32 to vector<16x8xf32>
    %80 = arith.mulf %78, %79 : vector<16x8xf32>
    %cst_81 = arith.constant dense<0.000000e+00> : vector<16x8xf32>
    %81 = tpu.matmul %13, %67, %cst_81 {dimension_numbers = #tpu.dot_dimension_numbers<[1], [0], [0], [1], [0, 0, 1, 1], [], []>} : vector<16x32xbf16>, vector<32x8xbf16>, vector<16x8xf32> -> vector<16x8xf32>
    %82 = vector.broadcast %73 : vector<1x8xf32> to vector<16x8xf32>
    %83 = arith.addf %81, %82 : vector<16x8xf32>
    %cst_82 = arith.constant dense<0.000000e+00> : vector<16x8xf32>
    %84 = tpu.matmul %13, %69, %cst_82 {dimension_numbers = #tpu.dot_dimension_numbers<[1], [0], [0], [1], [0, 0, 1, 1], [], []>} : vector<16x32xbf16>, vector<32x8xbf16>, vector<16x8xf32> -> vector<16x8xf32>
    %85 = vector.broadcast %75 : vector<1x8xf32> to vector<16x8xf32>
    %86 = arith.addf %84, %85 : vector<16x8xf32>
    %87 = vector.shape_cast %80 : vector<16x8xf32> to vector<2x8x8xf32>
    %88 = vector.shape_cast %83 : vector<16x8xf32> to vector<2x8x8xf32>
    %89 = vector.shape_cast %86 : vector<16x8xf32> to vector<2x8x8xf32>
    %90 = arith.truncf %87 : vector<2x8x8xf32> to vector<2x8x8xbf16>
    %91 = arith.truncf %88 : vector<2x8x8xf32> to vector<2x8x8xbf16>
    "tpu.trace_start"() <{level = 10 : i32, message = "btd,bsd->bts"}> : () -> ()
    %cst_83 = arith.constant dense<0.000000e+00> : vector<2x8x8xf32>
    %92 = tpu.matmul %90, %91, %cst_83 {dimension_numbers = #tpu.dot_dimension_numbers<[2], [2], [1], [1], [0, 0, 0, 1, 1, 1], [0], [0]>} : vector<2x8x8xbf16>, vector<2x8x8xbf16>, vector<2x8x8xf32> -> vector<2x8x8xf32>
    "tpu.trace_stop"() : () -> ()
    %93 = arith.addf %92, %4 : vector<2x8x8xf32>
    %cst_84 = arith.constant dense<0xFF800000> : vector<2x8xf32>
    %94 = vector.multi_reduction <maximumf>, %93, %cst_84 [2] : vector<2x8x8xf32> to vector<2x8xf32>
    %95 = vector.shape_cast %94 : vector<2x8xf32> to vector<2x8x1xf32>
    %96 = vector.broadcast %95 : vector<2x8x1xf32> to vector<2x8x8xf32>
    %97 = arith.subf %93, %96 : vector<2x8x8xf32>
    %98 = math.exp %97 : vector<2x8x8xf32>
    %cst_85 = arith.constant dense<0.000000e+00> : vector<2x8xf32>
    %99 = vector.multi_reduction <add>, %98, %cst_85 [2] : vector<2x8x8xf32> to vector<2x8xf32>
    %100 = vector.shape_cast %99 : vector<2x8xf32> to vector<2x8x1xf32>
    %101 = tpu.reciprocal %100 {approx = true} : vector<2x8x1xf32> -> vector<2x8x1xf32>
    %102 = vector.broadcast %101 : vector<2x8x1xf32> to vector<2x8x8xf32>
    %103 = arith.mulf %98, %102 : vector<2x8x8xf32>
    %104 = arith.truncf %103 : vector<2x8x8xf32> to vector<2x8x8xbf16>
    %105 = arith.truncf %89 : vector<2x8x8xf32> to vector<2x8x8xbf16>
    "tpu.trace_start"() <{level = 10 : i32, message = "bts,bsd->btd"}> : () -> ()
    %cst_86 = arith.constant dense<0.000000e+00> : vector<2x8x8xf32>
    %106 = tpu.matmul %104, %105, %cst_86 {dimension_numbers = #tpu.dot_dimension_numbers<[2], [1], [1], [2], [0, 0, 0, 1, 1, 2], [0], [0]>} : vector<2x8x8xbf16>, vector<2x8x8xbf16>, vector<2x8x8xf32> -> vector<2x8x8xf32>
    "tpu.trace_stop"() : () -> ()
    %107 = vector.shape_cast %106 : vector<2x8x8xf32> to vector<16x8xf32>
    %108 = arith.truncf %107 : vector<16x8xf32> to vector<16x8xbf16>
    %c0_87 = arith.constant 0 : index
    %c1_88 = arith.constant 1 : index
    %c0_89 = arith.constant 0 : index
    %c0_90 = arith.constant 0 : index
    %109 = vector.load %arg3[%c0_87, %c1_88, %c0_89, %c0_90] : memref<2x4x8x32xbf16, #tpu.memory_space<vmem>>, vector<1x1x8x32xbf16>
    %110 = vector.shape_cast %109 : vector<1x1x8x32xbf16> to vector<8x32xbf16>
    %cst_91 = arith.constant dense<0.000000e+00> : vector<16x32xf32>
    %111 = tpu.matmul %108, %110, %cst_91 {dimension_numbers = #tpu.dot_dimension_numbers<[1], [0], [0], [1], [0, 0, 1, 1], [], []>} : vector<16x8xbf16>, vector<8x32xbf16>, vector<16x32xf32> -> vector<16x32xf32>
    %112 = arith.addf %63, %111 : vector<16x32xf32>
    %c0_92 = arith.constant 0 : index
    %c0_93 = arith.constant 0 : index
    %c2_94 = arith.constant 2 : index
    %c0_95 = arith.constant 0 : index
    %c0_96 = arith.constant 0 : index
    %113 = vector.load %arg2[%c0_92, %c0_93, %c2_94, %c0_95, %c0_96] : memref<2x3x4x32x8xbf16, #tpu.memory_space<vmem>>, vector<1x1x1x32x8xbf16>
    %114 = vector.shape_cast %113 : vector<1x1x1x32x8xbf16> to vector<32x8xbf16>
    %c0_97 = arith.constant 0 : index
    %c1_98 = arith.constant 1 : index
    %c2_99 = arith.constant 2 : index
    %c0_100 = arith.constant 0 : index
    %c0_101 = arith.constant 0 : index
    %115 = vector.load %arg2[%c0_97, %c1_98, %c2_99, %c0_100, %c0_101] : memref<2x3x4x32x8xbf16, #tpu.memory_space<vmem>>, vector<1x1x1x32x8xbf16>
    %116 = vector.shape_cast %115 : vector<1x1x1x32x8xbf16> to vector<32x8xbf16>
    %c0_102 = arith.constant 0 : index
    %c2_103 = arith.constant 2 : index
    %c2_104 = arith.constant 2 : index
    %c0_105 = arith.constant 0 : index
    %c0_106 = arith.constant 0 : index
    %117 = vector.load %arg2[%c0_102, %c2_103, %c2_104, %c0_105, %c0_106] : memref<2x3x4x32x8xbf16, #tpu.memory_space<vmem>>, vector<1x1x1x32x8xbf16>
    %118 = vector.shape_cast %117 : vector<1x1x1x32x8xbf16> to vector<32x8xbf16>
    %c0_107 = arith.constant 0 : index
    %c0_108 = arith.constant 0 : index
    %c2_109 = arith.constant 2 : index
    %c0_110 = arith.constant 0 : index
    %c0_111 = arith.constant 0 : index
    %119 = vector.load %arg6[%c0_107, %c0_108, %c2_109, %c0_110, %c0_111] : memref<2x3x4x1x8xf32, #tpu.memory_space<vmem>>, vector<1x1x1x1x8xf32>
    %120 = vector.shape_cast %119 : vector<1x1x1x1x8xf32> to vector<1x8xf32>
    %c0_112 = arith.constant 0 : index
    %c1_113 = arith.constant 1 : index
    %c2_114 = arith.constant 2 : index
    %c0_115 = arith.constant 0 : index
    %c0_116 = arith.constant 0 : index
    %121 = vector.load %arg6[%c0_112, %c1_113, %c2_114, %c0_115, %c0_116] : memref<2x3x4x1x8xf32, #tpu.memory_space<vmem>>, vector<1x1x1x1x8xf32>
    %122 = vector.shape_cast %121 : vector<1x1x1x1x8xf32> to vector<1x8xf32>
    %c0_117 = arith.constant 0 : index
    %c2_118 = arith.constant 2 : index
    %c2_119 = arith.constant 2 : index
    %c0_120 = arith.constant 0 : index
    %c0_121 = arith.constant 0 : index
    %123 = vector.load %arg6[%c0_117, %c2_118, %c2_119, %c0_120, %c0_121] : memref<2x3x4x1x8xf32, #tpu.memory_space<vmem>>, vector<1x1x1x1x8xf32>
    %124 = vector.shape_cast %123 : vector<1x1x1x1x8xf32> to vector<1x8xf32>
    %cst_122 = arith.constant dense<0.000000e+00> : vector<16x8xf32>
    %125 = tpu.matmul %13, %114, %cst_122 {dimension_numbers = #tpu.dot_dimension_numbers<[1], [0], [0], [1], [0, 0, 1, 1], [], []>} : vector<16x32xbf16>, vector<32x8xbf16>, vector<16x8xf32> -> vector<16x8xf32>
    %126 = vector.broadcast %120 : vector<1x8xf32> to vector<16x8xf32>
    %127 = arith.addf %125, %126 : vector<16x8xf32>
    %cst_123 = arith.constant 0.353553385 : f32
    %128 = vector.broadcast %cst_123 : f32 to vector<16x8xf32>
    %129 = arith.mulf %127, %128 : vector<16x8xf32>
    %cst_124 = arith.constant dense<0.000000e+00> : vector<16x8xf32>
    %130 = tpu.matmul %13, %116, %cst_124 {dimension_numbers = #tpu.dot_dimension_numbers<[1], [0], [0], [1], [0, 0, 1, 1], [], []>} : vector<16x32xbf16>, vector<32x8xbf16>, vector<16x8xf32> -> vector<16x8xf32>
    %131 = vector.broadcast %122 : vector<1x8xf32> to vector<16x8xf32>
    %132 = arith.addf %130, %131 : vector<16x8xf32>
    %cst_125 = arith.constant dense<0.000000e+00> : vector<16x8xf32>
    %133 = tpu.matmul %13, %118, %cst_125 {dimension_numbers = #tpu.dot_dimension_numbers<[1], [0], [0], [1], [0, 0, 1, 1], [], []>} : vector<16x32xbf16>, vector<32x8xbf16>, vector<16x8xf32> -> vector<16x8xf32>
    %134 = vector.broadcast %124 : vector<1x8xf32> to vector<16x8xf32>
    %135 = arith.addf %133, %134 : vector<16x8xf32>
    %136 = vector.shape_cast %129 : vector<16x8xf32> to vector<2x8x8xf32>
    %137 = vector.shape_cast %132 : vector<16x8xf32> to vector<2x8x8xf32>
    %138 = vector.shape_cast %135 : vector<16x8xf32> to vector<2x8x8xf32>
    %139 = arith.truncf %136 : vector<2x8x8xf32> to vector<2x8x8xbf16>
    %140 = arith.truncf %137 : vector<2x8x8xf32> to vector<2x8x8xbf16>
    "tpu.trace_start"() <{level = 10 : i32, message = "btd,bsd->bts"}> : () -> ()
    %cst_126 = arith.constant dense<0.000000e+00> : vector<2x8x8xf32>
    %141 = tpu.matmul %139, %140, %cst_126 {dimension_numbers = #tpu.dot_dimension_numbers<[2], [2], [1], [1], [0, 0, 0, 1, 1, 1], [0], [0]>} : vector<2x8x8xbf16>, vector<2x8x8xbf16>, vector<2x8x8xf32> -> vector<2x8x8xf32>
    "tpu.trace_stop"() : () -> ()
    %142 = arith.addf %141, %4 : vector<2x8x8xf32>
    %cst_127 = arith.constant dense<0xFF800000> : vector<2x8xf32>
    %143 = vector.multi_reduction <maximumf>, %142, %cst_127 [2] : vector<2x8x8xf32> to vector<2x8xf32>
    %144 = vector.shape_cast %143 : vector<2x8xf32> to vector<2x8x1xf32>
    %145 = vector.broadcast %144 : vector<2x8x1xf32> to vector<2x8x8xf32>
    %146 = arith.subf %142, %145 : vector<2x8x8xf32>
    %147 = math.exp %146 : vector<2x8x8xf32>
    %cst_128 = arith.constant dense<0.000000e+00> : vector<2x8xf32>
    %148 = vector.multi_reduction <add>, %147, %cst_128 [2] : vector<2x8x8xf32> to vector<2x8xf32>
    %149 = vector.shape_cast %148 : vector<2x8xf32> to vector<2x8x1xf32>
    %150 = tpu.reciprocal %149 {approx = true} : vector<2x8x1xf32> -> vector<2x8x1xf32>
    %151 = vector.broadcast %150 : vector<2x8x1xf32> to vector<2x8x8xf32>
    %152 = arith.mulf %147, %151 : vector<2x8x8xf32>
    %153 = arith.truncf %152 : vector<2x8x8xf32> to vector<2x8x8xbf16>
    %154 = arith.truncf %138 : vector<2x8x8xf32> to vector<2x8x8xbf16>
    "tpu.trace_start"() <{level = 10 : i32, message = "bts,bsd->btd"}> : () -> ()
    %cst_129 = arith.constant dense<0.000000e+00> : vector<2x8x8xf32>
    %155 = tpu.matmul %153, %154, %cst_129 {dimension_numbers = #tpu.dot_dimension_numbers<[2], [1], [1], [2], [0, 0, 0, 1, 1, 2], [0], [0]>} : vector<2x8x8xbf16>, vector<2x8x8xbf16>, vector<2x8x8xf32> -> vector<2x8x8xf32>
    "tpu.trace_stop"() : () -> ()
    %156 = vector.shape_cast %155 : vector<2x8x8xf32> to vector<16x8xf32>
    %157 = arith.truncf %156 : vector<16x8xf32> to vector<16x8xbf16>
    %c0_130 = arith.constant 0 : index
    %c2_131 = arith.constant 2 : index
    %c0_132 = arith.constant 0 : index
    %c0_133 = arith.constant 0 : index
    %158 = vector.load %arg3[%c0_130, %c2_131, %c0_132, %c0_133] : memref<2x4x8x32xbf16, #tpu.memory_space<vmem>>, vector<1x1x8x32xbf16>
    %159 = vector.shape_cast %158 : vector<1x1x8x32xbf16> to vector<8x32xbf16>
    %cst_134 = arith.constant dense<0.000000e+00> : vector<16x32xf32>
    %160 = tpu.matmul %157, %159, %cst_134 {dimension_numbers = #tpu.dot_dimension_numbers<[1], [0], [0], [1], [0, 0, 1, 1], [], []>} : vector<16x8xbf16>, vector<8x32xbf16>, vector<16x32xf32> -> vector<16x32xf32>
    %161 = arith.addf %112, %160 : vector<16x32xf32>
    %c0_135 = arith.constant 0 : index
    %c0_136 = arith.constant 0 : index
    %c3 = arith.constant 3 : index
    %c0_137 = arith.constant 0 : index
    %c0_138 = arith.constant 0 : index
    %162 = vector.load %arg2[%c0_135, %c0_136, %c3, %c0_137, %c0_138] : memref<2x3x4x32x8xbf16, #tpu.memory_space<vmem>>, vector<1x1x1x32x8xbf16>
    %163 = vector.shape_cast %162 : vector<1x1x1x32x8xbf16> to vector<32x8xbf16>
    %c0_139 = arith.constant 0 : index
    %c1_140 = arith.constant 1 : index
    %c3_141 = arith.constant 3 : index
    %c0_142 = arith.constant 0 : index
    %c0_143 = arith.constant 0 : index
    %164 = vector.load %arg2[%c0_139, %c1_140, %c3_141, %c0_142, %c0_143] : memref<2x3x4x32x8xbf16, #tpu.memory_space<vmem>>, vector<1x1x1x32x8xbf16>
    %165 = vector.shape_cast %164 : vector<1x1x1x32x8xbf16> to vector<32x8xbf16>
    %c0_144 = arith.constant 0 : index
    %c2_145 = arith.constant 2 : index
    %c3_146 = arith.constant 3 : index
    %c0_147 = arith.constant 0 : index
    %c0_148 = arith.constant 0 : index
    %166 = vector.load %arg2[%c0_144, %c2_145, %c3_146, %c0_147, %c0_148] : memref<2x3x4x32x8xbf16, #tpu.memory_space<vmem>>, vector<1x1x1x32x8xbf16>
    %167 = vector.shape_cast %166 : vector<1x1x1x32x8xbf16> to vector<32x8xbf16>
    %c0_149 = arith.constant 0 : index
    %c0_150 = arith.constant 0 : index
    %c3_151 = arith.constant 3 : index
    %c0_152 = arith.constant 0 : index
    %c0_153 = arith.constant 0 : index
    %168 = vector.load %arg6[%c0_149, %c0_150, %c3_151, %c0_152, %c0_153] : memref<2x3x4x1x8xf32, #tpu.memory_space<vmem>>, vector<1x1x1x1x8xf32>
    %169 = vector.shape_cast %168 : vector<1x1x1x1x8xf32> to vector<1x8xf32>
    %c0_154 = arith.constant 0 : index
    %c1_155 = arith.constant 1 : index
    %c3_156 = arith.constant 3 : index
    %c0_157 = arith.constant 0 : index
    %c0_158 = arith.constant 0 : index
    %170 = vector.load %arg6[%c0_154, %c1_155, %c3_156, %c0_157, %c0_158] : memref<2x3x4x1x8xf32, #tpu.memory_space<vmem>>, vector<1x1x1x1x8xf32>
    %171 = vector.shape_cast %170 : vector<1x1x1x1x8xf32> to vector<1x8xf32>
    %c0_159 = arith.constant 0 : index
    %c2_160 = arith.constant 2 : index
    %c3_161 = arith.constant 3 : index
    %c0_162 = arith.constant 0 : index
    %c0_163 = arith.constant 0 : index
    %172 = vector.load %arg6[%c0_159, %c2_160, %c3_161, %c0_162, %c0_163] : memref<2x3x4x1x8xf32, #tpu.memory_space<vmem>>, vector<1x1x1x1x8xf32>
    %173 = vector.shape_cast %172 : vector<1x1x1x1x8xf32> to vector<1x8xf32>
    %cst_164 = arith.constant dense<0.000000e+00> : vector<16x8xf32>
    %174 = tpu.matmul %13, %163, %cst_164 {dimension_numbers = #tpu.dot_dimension_numbers<[1], [0], [0], [1], [0, 0, 1, 1], [], []>} : vector<16x32xbf16>, vector<32x8xbf16>, vector<16x8xf32> -> vector<16x8xf32>
    %175 = vector.broadcast %169 : vector<1x8xf32> to vector<16x8xf32>
    %176 = arith.addf %174, %175 : vector<16x8xf32>
    %cst_165 = arith.constant 0.353553385 : f32
    %177 = vector.broadcast %cst_165 : f32 to vector<16x8xf32>
    %178 = arith.mulf %176, %177 : vector<16x8xf32>
    %cst_166 = arith.constant dense<0.000000e+00> : vector<16x8xf32>
    %179 = tpu.matmul %13, %165, %cst_166 {dimension_numbers = #tpu.dot_dimension_numbers<[1], [0], [0], [1], [0, 0, 1, 1], [], []>} : vector<16x32xbf16>, vector<32x8xbf16>, vector<16x8xf32> -> vector<16x8xf32>
    %180 = vector.broadcast %171 : vector<1x8xf32> to vector<16x8xf32>
    %181 = arith.addf %179, %180 : vector<16x8xf32>
    %cst_167 = arith.constant dense<0.000000e+00> : vector<16x8xf32>
    %182 = tpu.matmul %13, %167, %cst_167 {dimension_numbers = #tpu.dot_dimension_numbers<[1], [0], [0], [1], [0, 0, 1, 1], [], []>} : vector<16x32xbf16>, vector<32x8xbf16>, vector<16x8xf32> -> vector<16x8xf32>
    %183 = vector.broadcast %173 : vector<1x8xf32> to vector<16x8xf32>
    %184 = arith.addf %182, %183 : vector<16x8xf32>
    %185 = vector.shape_cast %178 : vector<16x8xf32> to vector<2x8x8xf32>
    %186 = vector.shape_cast %181 : vector<16x8xf32> to vector<2x8x8xf32>
    %187 = vector.shape_cast %184 : vector<16x8xf32> to vector<2x8x8xf32>
    %188 = arith.truncf %185 : vector<2x8x8xf32> to vector<2x8x8xbf16>
    %189 = arith.truncf %186 : vector<2x8x8xf32> to vector<2x8x8xbf16>
    "tpu.trace_start"() <{level = 10 : i32, message = "btd,bsd->bts"}> : () -> ()
    %cst_168 = arith.constant dense<0.000000e+00> : vector<2x8x8xf32>
    %190 = tpu.matmul %188, %189, %cst_168 {dimension_numbers = #tpu.dot_dimension_numbers<[2], [2], [1], [1], [0, 0, 0, 1, 1, 1], [0], [0]>} : vector<2x8x8xbf16>, vector<2x8x8xbf16>, vector<2x8x8xf32> -> vector<2x8x8xf32>
    "tpu.trace_stop"() : () -> ()
    %191 = arith.addf %190, %4 : vector<2x8x8xf32>
    %cst_169 = arith.constant dense<0xFF800000> : vector<2x8xf32>
    %192 = vector.multi_reduction <maximumf>, %191, %cst_169 [2] : vector<2x8x8xf32> to vector<2x8xf32>
    %193 = vector.shape_cast %192 : vector<2x8xf32> to vector<2x8x1xf32>
    %194 = vector.broadcast %193 : vector<2x8x1xf32> to vector<2x8x8xf32>
    %195 = arith.subf %191, %194 : vector<2x8x8xf32>
    %196 = math.exp %195 : vector<2x8x8xf32>
    %cst_170 = arith.constant dense<0.000000e+00> : vector<2x8xf32>
    %197 = vector.multi_reduction <add>, %196, %cst_170 [2] : vector<2x8x8xf32> to vector<2x8xf32>
    %198 = vector.shape_cast %197 : vector<2x8xf32> to vector<2x8x1xf32>
    %199 = tpu.reciprocal %198 {approx = true} : vector<2x8x1xf32> -> vector<2x8x1xf32>
    %200 = vector.broadcast %199 : vector<2x8x1xf32> to vector<2x8x8xf32>
    %201 = arith.mulf %196, %200 : vector<2x8x8xf32>
    %202 = arith.truncf %201 : vector<2x8x8xf32> to vector<2x8x8xbf16>
    %203 = arith.truncf %187 : vector<2x8x8xf32> to vector<2x8x8xbf16>
    "tpu.trace_start"() <{level = 10 : i32, message = "bts,bsd->btd"}> : () -> ()
    %cst_171 = arith.constant dense<0.000000e+00> : vector<2x8x8xf32>
    %204 = tpu.matmul %202, %203, %cst_171 {dimension_numbers = #tpu.dot_dimension_numbers<[2], [1], [1], [2], [0, 0, 0, 1, 1, 2], [0], [0]>} : vector<2x8x8xbf16>, vector<2x8x8xbf16>, vector<2x8x8xf32> -> vector<2x8x8xf32>
    "tpu.trace_stop"() : () -> ()
    %205 = vector.shape_cast %204 : vector<2x8x8xf32> to vector<16x8xf32>
    %206 = arith.truncf %205 : vector<16x8xf32> to vector<16x8xbf16>
    %c0_172 = arith.constant 0 : index
    %c3_173 = arith.constant 3 : index
    %c0_174 = arith.constant 0 : index
    %c0_175 = arith.constant 0 : index
    %207 = vector.load %arg3[%c0_172, %c3_173, %c0_174, %c0_175] : memref<2x4x8x32xbf16, #tpu.memory_space<vmem>>, vector<1x1x8x32xbf16>
    %208 = vector.shape_cast %207 : vector<1x1x8x32xbf16> to vector<8x32xbf16>
    %cst_176 = arith.constant dense<0.000000e+00> : vector<16x32xf32>
    %209 = tpu.matmul %206, %208, %cst_176 {dimension_numbers = #tpu.dot_dimension_numbers<[1], [0], [0], [1], [0, 0, 1, 1], [], []>} : vector<16x8xbf16>, vector<8x32xbf16>, vector<16x32xf32> -> vector<16x32xf32>
    %210 = arith.addf %161, %209 : vector<16x32xf32>
    %211 = vector.broadcast %7 : vector<1x32xf32> to vector<16x32xf32>
    %212 = arith.addf %210, %211 : vector<16x32xf32>
    %213 = arith.addf %1, %212 : vector<16x32xf32>
    %cst_177 = arith.constant dense<0.000000e+00> : vector<16xf32>
    %214 = vector.multi_reduction <add>, %213, %cst_177 [1] : vector<16x32xf32> to vector<16xf32>
    %215 = vector.shape_cast %214 : vector<16xf32> to vector<16x1xf32>
    %cst_178 = arith.constant 3.200000e+01 : f32
    %216 = vector.broadcast %cst_178 : f32 to vector<16x1xf32>
    %217 = arith.divf %215, %216 : vector<16x1xf32>
    %218 = vector.broadcast %217 : vector<16x1xf32> to vector<16x32xf32>
    %219 = arith.subf %213, %218 : vector<16x32xf32>
    %220 = arith.mulf %219, %219 : vector<16x32xf32>
    %cst_179 = arith.constant dense<0.000000e+00> : vector<16xf32>
    %221 = vector.multi_reduction <add>, %220, %cst_179 [1] : vector<16x32xf32> to vector<16xf32>
    %222 = vector.shape_cast %221 : vector<16xf32> to vector<16x1xf32>
    %cst_180 = arith.constant 3.200000e+01 : f32
    %223 = vector.broadcast %cst_180 : f32 to vector<16x1xf32>
    %224 = arith.divf %222, %223 : vector<16x1xf32>
    %225 = vector.broadcast %217 : vector<16x1xf32> to vector<16x32xf32>
    %226 = arith.subf %213, %225 : vector<16x32xf32>
    %cst_181 = arith.constant 9.99999974E-6 : f32
    %227 = vector.broadcast %cst_181 : f32 to vector<16x1xf32>
    %228 = arith.addf %224, %227 : vector<16x1xf32>
    %229 = math.rsqrt %228 : vector<16x1xf32>
    %230 = vector.broadcast %229 : vector<16x1xf32> to vector<16x32xf32>
    %231 = arith.mulf %226, %230 : vector<16x32xf32>
    %232 = vector.broadcast %8 : vector<1x32xf32> to vector<16x32xf32>
    %233 = arith.mulf %231, %232 : vector<16x32xf32>
    %234 = vector.broadcast %9 : vector<1x32xf32> to vector<16x32xf32>
    %235 = arith.addf %233, %234 : vector<16x32xf32>
    %236 = arith.truncf %235 : vector<16x32xf32> to vector<16x32xbf16>
    %c0_182 = arith.constant 0 : index
    %c0_183 = arith.constant 0 : index
    %c0_184 = arith.constant 0 : index
    %237 = vector.load %arg4[%c0_182, %c0_183, %c0_184] : memref<2x32x64xbf16, #tpu.memory_space<vmem>>, vector<1x32x64xbf16>
    %238 = vector.shape_cast %237 : vector<1x32x64xbf16> to vector<32x64xbf16>
    %cst_185 = arith.constant dense<0.000000e+00> : vector<16x64xf32>
    %239 = tpu.matmul %236, %238, %cst_185 {dimension_numbers = #tpu.dot_dimension_numbers<[1], [0], [0], [1], [0, 0, 1, 1], [], []>} : vector<16x32xbf16>, vector<32x64xbf16>, vector<16x64xf32> -> vector<16x64xf32>
    %c0_186 = arith.constant 0 : index
    %c0_187 = arith.constant 0 : index
    %c0_188 = arith.constant 0 : index
    %240 = vector.load %arg8[%c0_186, %c0_187, %c0_188] : memref<2x1x64xf32, #tpu.memory_space<vmem>>, vector<1x1x64xf32>
    %241 = vector.shape_cast %240 : vector<1x1x64xf32> to vector<1x64xf32>
    %242 = vector.broadcast %241 : vector<1x64xf32> to vector<16x64xf32>
    %243 = arith.addf %239, %242 : vector<16x64xf32>
    %cst_189 = arith.constant 5.000000e-01 : f32
    %244 = vector.broadcast %cst_189 : f32 to vector<16x64xf32>
    %245 = arith.mulf %244, %243 : vector<16x64xf32>
    %cst_190 = arith.constant 4.471500e-02 : f32
    %246 = vector.broadcast %cst_190 : f32 to vector<16x64xf32>
    %247 = arith.mulf %246, %243 : vector<16x64xf32>
    %248 = arith.mulf %247, %243 : vector<16x64xf32>
    %249 = arith.mulf %248, %243 : vector<16x64xf32>
    %250 = arith.addf %243, %249 : vector<16x64xf32>
    %cst_191 = arith.constant 0.797884583 : f32
    %251 = vector.broadcast %cst_191 : f32 to vector<16x64xf32>
    %252 = arith.mulf %251, %250 : vector<16x64xf32>
    %253 = math.tanh %252 : vector<16x64xf32>
    %cst_192 = arith.constant 1.000000e+00 : f32
    %254 = vector.broadcast %cst_192 : f32 to vector<16x64xf32>
    %255 = arith.addf %254, %253 : vector<16x64xf32>
    %256 = arith.mulf %245, %255 : vector<16x64xf32>
    %257 = arith.truncf %256 : vector<16x64xf32> to vector<16x64xbf16>
    %c0_193 = arith.constant 0 : index
    %c0_194 = arith.constant 0 : index
    %c0_195 = arith.constant 0 : index
    %258 = vector.load %arg5[%c0_193, %c0_194, %c0_195] : memref<2x64x32xbf16, #tpu.memory_space<vmem>>, vector<1x64x32xbf16>
    %259 = vector.shape_cast %258 : vector<1x64x32xbf16> to vector<64x32xbf16>
    %cst_196 = arith.constant dense<0.000000e+00> : vector<16x32xf32>
    %260 = tpu.matmul %257, %259, %cst_196 {dimension_numbers = #tpu.dot_dimension_numbers<[1], [0], [0], [1], [0, 0, 1, 1], [], []>} : vector<16x64xbf16>, vector<64x32xbf16>, vector<16x32xf32> -> vector<16x32xf32>
    %261 = vector.broadcast %10 : vector<1x32xf32> to vector<16x32xf32>
    %262 = arith.addf %260, %261 : vector<16x32xf32>
    %263 = arith.addf %235, %262 : vector<16x32xf32>
    %cst_197 = arith.constant dense<0.000000e+00> : vector<16xf32>
    %264 = vector.multi_reduction <add>, %263, %cst_197 [1] : vector<16x32xf32> to vector<16xf32>
    %265 = vector.shape_cast %264 : vector<16xf32> to vector<16x1xf32>
    %cst_198 = arith.constant 3.200000e+01 : f32
    %266 = vector.broadcast %cst_198 : f32 to vector<16x1xf32>
    %267 = arith.divf %265, %266 : vector<16x1xf32>
    %268 = vector.broadcast %267 : vector<16x1xf32> to vector<16x32xf32>
    %269 = arith.subf %263, %268 : vector<16x32xf32>
    %270 = arith.mulf %269, %269 : vector<16x32xf32>
    %cst_199 = arith.constant dense<0.000000e+00> : vector<16xf32>
    %271 = vector.multi_reduction <add>, %270, %cst_199 [1] : vector<16x32xf32> to vector<16xf32>
    %272 = vector.shape_cast %271 : vector<16xf32> to vector<16x1xf32>
    %cst_200 = arith.constant 3.200000e+01 : f32
    %273 = vector.broadcast %cst_200 : f32 to vector<16x1xf32>
    %274 = arith.divf %272, %273 : vector<16x1xf32>
    %275 = vector.broadcast %267 : vector<16x1xf32> to vector<16x32xf32>
    %276 = arith.subf %263, %275 : vector<16x32xf32>
    %cst_201 = arith.constant 9.99999974E-6 : f32
    %277 = vector.broadcast %cst_201 : f32 to vector<16x1xf32>
    %278 = arith.addf %274, %277 : vector<16x1xf32>
    %279 = math.rsqrt %278 : vector<16x1xf32>
    %280 = vector.broadcast %279 : vector<16x1xf32> to vector<16x32xf32>
    %281 = arith.mulf %276, %280 : vector<16x32xf32>
    %282 = vector.broadcast %11 : vector<1x32xf32> to vector<16x32xf32>
    %283 = arith.mulf %281, %282 : vector<16x32xf32>
    %284 = vector.broadcast %12 : vector<1x32xf32> to vector<16x32xf32>
    %285 = arith.addf %283, %284 : vector<16x32xf32>
    %c1_202 = arith.constant 1 : index
    %c0_203 = arith.constant 0 : index
    %c0_204 = arith.constant 0 : index
    %286 = vector.load %arg7[%c1_202, %c0_203, %c0_204] : memref<2x6x32xf32, #tpu.memory_space<vmem>>, vector<1x6x32xf32>
    %287 = vector.shape_cast %286 : vector<1x6x32xf32> to vector<6x32xf32>
    %288 = vector.extract_strided_slice %287 {offsets = [0, 0], sizes = [1, 32], strides = [1, 1]} : vector<6x32xf32> to vector<1x32xf32>
    %289 = vector.extract_strided_slice %287 {offsets = [1, 0], sizes = [1, 32], strides = [1, 1]} : vector<6x32xf32> to vector<1x32xf32>
    %290 = vector.extract_strided_slice %287 {offsets = [2, 0], sizes = [1, 32], strides = [1, 1]} : vector<6x32xf32> to vector<1x32xf32>
    %291 = vector.extract_strided_slice %287 {offsets = [3, 0], sizes = [1, 32], strides = [1, 1]} : vector<6x32xf32> to vector<1x32xf32>
    %292 = vector.extract_strided_slice %287 {offsets = [4, 0], sizes = [1, 32], strides = [1, 1]} : vector<6x32xf32> to vector<1x32xf32>
    %293 = vector.extract_strided_slice %287 {offsets = [5, 0], sizes = [1, 32], strides = [1, 1]} : vector<6x32xf32> to vector<1x32xf32>
    %294 = arith.truncf %285 : vector<16x32xf32> to vector<16x32xbf16>
    %cst_205 = arith.constant 0.000000e+00 : f32
    %295 = vector.broadcast %cst_205 : f32 to vector<16x32xf32>
    %c1_206 = arith.constant 1 : index
    %c0_207 = arith.constant 0 : index
    %c0_208 = arith.constant 0 : index
    %c0_209 = arith.constant 0 : index
    %c0_210 = arith.constant 0 : index
    %296 = vector.load %arg2[%c1_206, %c0_207, %c0_208, %c0_209, %c0_210] : memref<2x3x4x32x8xbf16, #tpu.memory_space<vmem>>, vector<1x1x1x32x8xbf16>
    %297 = vector.shape_cast %296 : vector<1x1x1x32x8xbf16> to vector<32x8xbf16>
    %c1_211 = arith.constant 1 : index
    %c1_212 = arith.constant 1 : index
    %c0_213 = arith.constant 0 : index
    %c0_214 = arith.constant 0 : index
    %c0_215 = arith.constant 0 : index
    %298 = vector.load %arg2[%c1_211, %c1_212, %c0_213, %c0_214, %c0_215] : memref<2x3x4x32x8xbf16, #tpu.memory_space<vmem>>, vector<1x1x1x32x8xbf16>
    %299 = vector.shape_cast %298 : vector<1x1x1x32x8xbf16> to vector<32x8xbf16>
    %c1_216 = arith.constant 1 : index
    %c2_217 = arith.constant 2 : index
    %c0_218 = arith.constant 0 : index
    %c0_219 = arith.constant 0 : index
    %c0_220 = arith.constant 0 : index
    %300 = vector.load %arg2[%c1_216, %c2_217, %c0_218, %c0_219, %c0_220] : memref<2x3x4x32x8xbf16, #tpu.memory_space<vmem>>, vector<1x1x1x32x8xbf16>
    %301 = vector.shape_cast %300 : vector<1x1x1x32x8xbf16> to vector<32x8xbf16>
    %c1_221 = arith.constant 1 : index
    %c0_222 = arith.constant 0 : index
    %c0_223 = arith.constant 0 : index
    %c0_224 = arith.constant 0 : index
    %c0_225 = arith.constant 0 : index
    %302 = vector.load %arg6[%c1_221, %c0_222, %c0_223, %c0_224, %c0_225] : memref<2x3x4x1x8xf32, #tpu.memory_space<vmem>>, vector<1x1x1x1x8xf32>
    %303 = vector.shape_cast %302 : vector<1x1x1x1x8xf32> to vector<1x8xf32>
    %c1_226 = arith.constant 1 : index
    %c1_227 = arith.constant 1 : index
    %c0_228 = arith.constant 0 : index
    %c0_229 = arith.constant 0 : index
    %c0_230 = arith.constant 0 : index
    %304 = vector.load %arg6[%c1_226, %c1_227, %c0_228, %c0_229, %c0_230] : memref<2x3x4x1x8xf32, #tpu.memory_space<vmem>>, vector<1x1x1x1x8xf32>
    %305 = vector.shape_cast %304 : vector<1x1x1x1x8xf32> to vector<1x8xf32>
    %c1_231 = arith.constant 1 : index
    %c2_232 = arith.constant 2 : index
    %c0_233 = arith.constant 0 : index
    %c0_234 = arith.constant 0 : index
    %c0_235 = arith.constant 0 : index
    %306 = vector.load %arg6[%c1_231, %c2_232, %c0_233, %c0_234, %c0_235] : memref<2x3x4x1x8xf32, #tpu.memory_space<vmem>>, vector<1x1x1x1x8xf32>
    %307 = vector.shape_cast %306 : vector<1x1x1x1x8xf32> to vector<1x8xf32>
    %cst_236 = arith.constant dense<0.000000e+00> : vector<16x8xf32>
    %308 = tpu.matmul %294, %297, %cst_236 {dimension_numbers = #tpu.dot_dimension_numbers<[1], [0], [0], [1], [0, 0, 1, 1], [], []>} : vector<16x32xbf16>, vector<32x8xbf16>, vector<16x8xf32> -> vector<16x8xf32>
    %309 = vector.broadcast %303 : vector<1x8xf32> to vector<16x8xf32>
    %310 = arith.addf %308, %309 : vector<16x8xf32>
    %cst_237 = arith.constant 0.353553385 : f32
    %311 = vector.broadcast %cst_237 : f32 to vector<16x8xf32>
    %312 = arith.mulf %310, %311 : vector<16x8xf32>
    %cst_238 = arith.constant dense<0.000000e+00> : vector<16x8xf32>
    %313 = tpu.matmul %294, %299, %cst_238 {dimension_numbers = #tpu.dot_dimension_numbers<[1], [0], [0], [1], [0, 0, 1, 1], [], []>} : vector<16x32xbf16>, vector<32x8xbf16>, vector<16x8xf32> -> vector<16x8xf32>
    %314 = vector.broadcast %305 : vector<1x8xf32> to vector<16x8xf32>
    %315 = arith.addf %313, %314 : vector<16x8xf32>
    %cst_239 = arith.constant dense<0.000000e+00> : vector<16x8xf32>
    %316 = tpu.matmul %294, %301, %cst_239 {dimension_numbers = #tpu.dot_dimension_numbers<[1], [0], [0], [1], [0, 0, 1, 1], [], []>} : vector<16x32xbf16>, vector<32x8xbf16>, vector<16x8xf32> -> vector<16x8xf32>
    %317 = vector.broadcast %307 : vector<1x8xf32> to vector<16x8xf32>
    %318 = arith.addf %316, %317 : vector<16x8xf32>
    %319 = vector.shape_cast %312 : vector<16x8xf32> to vector<2x8x8xf32>
    %320 = vector.shape_cast %315 : vector<16x8xf32> to vector<2x8x8xf32>
    %321 = vector.shape_cast %318 : vector<16x8xf32> to vector<2x8x8xf32>
    %322 = arith.truncf %319 : vector<2x8x8xf32> to vector<2x8x8xbf16>
    %323 = arith.truncf %320 : vector<2x8x8xf32> to vector<2x8x8xbf16>
    "tpu.trace_start"() <{level = 10 : i32, message = "btd,bsd->bts"}> : () -> ()
    %cst_240 = arith.constant dense<0.000000e+00> : vector<2x8x8xf32>
    %324 = tpu.matmul %322, %323, %cst_240 {dimension_numbers = #tpu.dot_dimension_numbers<[2], [2], [1], [1], [0, 0, 0, 1, 1, 1], [0], [0]>} : vector<2x8x8xbf16>, vector<2x8x8xbf16>, vector<2x8x8xf32> -> vector<2x8x8xf32>
    "tpu.trace_stop"() : () -> ()
    %325 = arith.addf %324, %4 : vector<2x8x8xf32>
    %cst_241 = arith.constant dense<0xFF800000> : vector<2x8xf32>
    %326 = vector.multi_reduction <maximumf>, %325, %cst_241 [2] : vector<2x8x8xf32> to vector<2x8xf32>
    %327 = vector.shape_cast %326 : vector<2x8xf32> to vector<2x8x1xf32>
    %328 = vector.broadcast %327 : vector<2x8x1xf32> to vector<2x8x8xf32>
    %329 = arith.subf %325, %328 : vector<2x8x8xf32>
    %330 = math.exp %329 : vector<2x8x8xf32>
    %cst_242 = arith.constant dense<0.000000e+00> : vector<2x8xf32>
    %331 = vector.multi_reduction <add>, %330, %cst_242 [2] : vector<2x8x8xf32> to vector<2x8xf32>
    %332 = vector.shape_cast %331 : vector<2x8xf32> to vector<2x8x1xf32>
    %333 = tpu.reciprocal %332 {approx = true} : vector<2x8x1xf32> -> vector<2x8x1xf32>
    %334 = vector.broadcast %333 : vector<2x8x1xf32> to vector<2x8x8xf32>
    %335 = arith.mulf %330, %334 : vector<2x8x8xf32>
    %336 = arith.truncf %335 : vector<2x8x8xf32> to vector<2x8x8xbf16>
    %337 = arith.truncf %321 : vector<2x8x8xf32> to vector<2x8x8xbf16>
    "tpu.trace_start"() <{level = 10 : i32, message = "bts,bsd->btd"}> : () -> ()
    %cst_243 = arith.constant dense<0.000000e+00> : vector<2x8x8xf32>
    %338 = tpu.matmul %336, %337, %cst_243 {dimension_numbers = #tpu.dot_dimension_numbers<[2], [1], [1], [2], [0, 0, 0, 1, 1, 2], [0], [0]>} : vector<2x8x8xbf16>, vector<2x8x8xbf16>, vector<2x8x8xf32> -> vector<2x8x8xf32>
    "tpu.trace_stop"() : () -> ()
    %339 = vector.shape_cast %338 : vector<2x8x8xf32> to vector<16x8xf32>
    %340 = arith.truncf %339 : vector<16x8xf32> to vector<16x8xbf16>
    %c1_244 = arith.constant 1 : index
    %c0_245 = arith.constant 0 : index
    %c0_246 = arith.constant 0 : index
    %c0_247 = arith.constant 0 : index
    %341 = vector.load %arg3[%c1_244, %c0_245, %c0_246, %c0_247] : memref<2x4x8x32xbf16, #tpu.memory_space<vmem>>, vector<1x1x8x32xbf16>
    %342 = vector.shape_cast %341 : vector<1x1x8x32xbf16> to vector<8x32xbf16>
    %cst_248 = arith.constant dense<0.000000e+00> : vector<16x32xf32>
    %343 = tpu.matmul %340, %342, %cst_248 {dimension_numbers = #tpu.dot_dimension_numbers<[1], [0], [0], [1], [0, 0, 1, 1], [], []>} : vector<16x8xbf16>, vector<8x32xbf16>, vector<16x32xf32> -> vector<16x32xf32>
    %344 = arith.addf %295, %343 : vector<16x32xf32>
    %c1_249 = arith.constant 1 : index
    %c0_250 = arith.constant 0 : index
    %c1_251 = arith.constant 1 : index
    %c0_252 = arith.constant 0 : index
    %c0_253 = arith.constant 0 : index
    %345 = vector.load %arg2[%c1_249, %c0_250, %c1_251, %c0_252, %c0_253] : memref<2x3x4x32x8xbf16, #tpu.memory_space<vmem>>, vector<1x1x1x32x8xbf16>
    %346 = vector.shape_cast %345 : vector<1x1x1x32x8xbf16> to vector<32x8xbf16>
    %c1_254 = arith.constant 1 : index
    %c1_255 = arith.constant 1 : index
    %c1_256 = arith.constant 1 : index
    %c0_257 = arith.constant 0 : index
    %c0_258 = arith.constant 0 : index
    %347 = vector.load %arg2[%c1_254, %c1_255, %c1_256, %c0_257, %c0_258] : memref<2x3x4x32x8xbf16, #tpu.memory_space<vmem>>, vector<1x1x1x32x8xbf16>
    %348 = vector.shape_cast %347 : vector<1x1x1x32x8xbf16> to vector<32x8xbf16>
    %c1_259 = arith.constant 1 : index
    %c2_260 = arith.constant 2 : index
    %c1_261 = arith.constant 1 : index
    %c0_262 = arith.constant 0 : index
    %c0_263 = arith.constant 0 : index
    %349 = vector.load %arg2[%c1_259, %c2_260, %c1_261, %c0_262, %c0_263] : memref<2x3x4x32x8xbf16, #tpu.memory_space<vmem>>, vector<1x1x1x32x8xbf16>
    %350 = vector.shape_cast %349 : vector<1x1x1x32x8xbf16> to vector<32x8xbf16>
    %c1_264 = arith.constant 1 : index
    %c0_265 = arith.constant 0 : index
    %c1_266 = arith.constant 1 : index
    %c0_267 = arith.constant 0 : index
    %c0_268 = arith.constant 0 : index
    %351 = vector.load %arg6[%c1_264, %c0_265, %c1_266, %c0_267, %c0_268] : memref<2x3x4x1x8xf32, #tpu.memory_space<vmem>>, vector<1x1x1x1x8xf32>
    %352 = vector.shape_cast %351 : vector<1x1x1x1x8xf32> to vector<1x8xf32>
    %c1_269 = arith.constant 1 : index
    %c1_270 = arith.constant 1 : index
    %c1_271 = arith.constant 1 : index
    %c0_272 = arith.constant 0 : index
    %c0_273 = arith.constant 0 : index
    %353 = vector.load %arg6[%c1_269, %c1_270, %c1_271, %c0_272, %c0_273] : memref<2x3x4x1x8xf32, #tpu.memory_space<vmem>>, vector<1x1x1x1x8xf32>
    %354 = vector.shape_cast %353 : vector<1x1x1x1x8xf32> to vector<1x8xf32>
    %c1_274 = arith.constant 1 : index
    %c2_275 = arith.constant 2 : index
    %c1_276 = arith.constant 1 : index
    %c0_277 = arith.constant 0 : index
    %c0_278 = arith.constant 0 : index
    %355 = vector.load %arg6[%c1_274, %c2_275, %c1_276, %c0_277, %c0_278] : memref<2x3x4x1x8xf32, #tpu.memory_space<vmem>>, vector<1x1x1x1x8xf32>
    %356 = vector.shape_cast %355 : vector<1x1x1x1x8xf32> to vector<1x8xf32>
    %cst_279 = arith.constant dense<0.000000e+00> : vector<16x8xf32>
    %357 = tpu.matmul %294, %346, %cst_279 {dimension_numbers = #tpu.dot_dimension_numbers<[1], [0], [0], [1], [0, 0, 1, 1], [], []>} : vector<16x32xbf16>, vector<32x8xbf16>, vector<16x8xf32> -> vector<16x8xf32>
    %358 = vector.broadcast %352 : vector<1x8xf32> to vector<16x8xf32>
    %359 = arith.addf %357, %358 : vector<16x8xf32>
    %cst_280 = arith.constant 0.353553385 : f32
    %360 = vector.broadcast %cst_280 : f32 to vector<16x8xf32>
    %361 = arith.mulf %359, %360 : vector<16x8xf32>
    %cst_281 = arith.constant dense<0.000000e+00> : vector<16x8xf32>
    %362 = tpu.matmul %294, %348, %cst_281 {dimension_numbers = #tpu.dot_dimension_numbers<[1], [0], [0], [1], [0, 0, 1, 1], [], []>} : vector<16x32xbf16>, vector<32x8xbf16>, vector<16x8xf32> -> vector<16x8xf32>
    %363 = vector.broadcast %354 : vector<1x8xf32> to vector<16x8xf32>
    %364 = arith.addf %362, %363 : vector<16x8xf32>
    %cst_282 = arith.constant dense<0.000000e+00> : vector<16x8xf32>
    %365 = tpu.matmul %294, %350, %cst_282 {dimension_numbers = #tpu.dot_dimension_numbers<[1], [0], [0], [1], [0, 0, 1, 1], [], []>} : vector<16x32xbf16>, vector<32x8xbf16>, vector<16x8xf32> -> vector<16x8xf32>
    %366 = vector.broadcast %356 : vector<1x8xf32> to vector<16x8xf32>
    %367 = arith.addf %365, %366 : vector<16x8xf32>
    %368 = vector.shape_cast %361 : vector<16x8xf32> to vector<2x8x8xf32>
    %369 = vector.shape_cast %364 : vector<16x8xf32> to vector<2x8x8xf32>
    %370 = vector.shape_cast %367 : vector<16x8xf32> to vector<2x8x8xf32>
    %371 = arith.truncf %368 : vector<2x8x8xf32> to vector<2x8x8xbf16>
    %372 = arith.truncf %369 : vector<2x8x8xf32> to vector<2x8x8xbf16>
    "tpu.trace_start"() <{level = 10 : i32, message = "btd,bsd->bts"}> : () -> ()
    %cst_283 = arith.constant dense<0.000000e+00> : vector<2x8x8xf32>
    %373 = tpu.matmul %371, %372, %cst_283 {dimension_numbers = #tpu.dot_dimension_numbers<[2], [2], [1], [1], [0, 0, 0, 1, 1, 1], [0], [0]>} : vector<2x8x8xbf16>, vector<2x8x8xbf16>, vector<2x8x8xf32> -> vector<2x8x8xf32>
    "tpu.trace_stop"() : () -> ()
    %374 = arith.addf %373, %4 : vector<2x8x8xf32>
    %cst_284 = arith.constant dense<0xFF800000> : vector<2x8xf32>
    %375 = vector.multi_reduction <maximumf>, %374, %cst_284 [2] : vector<2x8x8xf32> to vector<2x8xf32>
    %376 = vector.shape_cast %375 : vector<2x8xf32> to vector<2x8x1xf32>
    %377 = vector.broadcast %376 : vector<2x8x1xf32> to vector<2x8x8xf32>
    %378 = arith.subf %374, %377 : vector<2x8x8xf32>
    %379 = math.exp %378 : vector<2x8x8xf32>
    %cst_285 = arith.constant dense<0.000000e+00> : vector<2x8xf32>
    %380 = vector.multi_reduction <add>, %379, %cst_285 [2] : vector<2x8x8xf32> to vector<2x8xf32>
    %381 = vector.shape_cast %380 : vector<2x8xf32> to vector<2x8x1xf32>
    %382 = tpu.reciprocal %381 {approx = true} : vector<2x8x1xf32> -> vector<2x8x1xf32>
    %383 = vector.broadcast %382 : vector<2x8x1xf32> to vector<2x8x8xf32>
    %384 = arith.mulf %379, %383 : vector<2x8x8xf32>
    %385 = arith.truncf %384 : vector<2x8x8xf32> to vector<2x8x8xbf16>
    %386 = arith.truncf %370 : vector<2x8x8xf32> to vector<2x8x8xbf16>
    "tpu.trace_start"() <{level = 10 : i32, message = "bts,bsd->btd"}> : () -> ()
    %cst_286 = arith.constant dense<0.000000e+00> : vector<2x8x8xf32>
    %387 = tpu.matmul %385, %386, %cst_286 {dimension_numbers = #tpu.dot_dimension_numbers<[2], [1], [1], [2], [0, 0, 0, 1, 1, 2], [0], [0]>} : vector<2x8x8xbf16>, vector<2x8x8xbf16>, vector<2x8x8xf32> -> vector<2x8x8xf32>
    "tpu.trace_stop"() : () -> ()
    %388 = vector.shape_cast %387 : vector<2x8x8xf32> to vector<16x8xf32>
    %389 = arith.truncf %388 : vector<16x8xf32> to vector<16x8xbf16>
    %c1_287 = arith.constant 1 : index
    %c1_288 = arith.constant 1 : index
    %c0_289 = arith.constant 0 : index
    %c0_290 = arith.constant 0 : index
    %390 = vector.load %arg3[%c1_287, %c1_288, %c0_289, %c0_290] : memref<2x4x8x32xbf16, #tpu.memory_space<vmem>>, vector<1x1x8x32xbf16>
    %391 = vector.shape_cast %390 : vector<1x1x8x32xbf16> to vector<8x32xbf16>
    %cst_291 = arith.constant dense<0.000000e+00> : vector<16x32xf32>
    %392 = tpu.matmul %389, %391, %cst_291 {dimension_numbers = #tpu.dot_dimension_numbers<[1], [0], [0], [1], [0, 0, 1, 1], [], []>} : vector<16x8xbf16>, vector<8x32xbf16>, vector<16x32xf32> -> vector<16x32xf32>
    %393 = arith.addf %344, %392 : vector<16x32xf32>
    %c1_292 = arith.constant 1 : index
    %c0_293 = arith.constant 0 : index
    %c2_294 = arith.constant 2 : index
    %c0_295 = arith.constant 0 : index
    %c0_296 = arith.constant 0 : index
    %394 = vector.load %arg2[%c1_292, %c0_293, %c2_294, %c0_295, %c0_296] : memref<2x3x4x32x8xbf16, #tpu.memory_space<vmem>>, vector<1x1x1x32x8xbf16>
    %395 = vector.shape_cast %394 : vector<1x1x1x32x8xbf16> to vector<32x8xbf16>
    %c1_297 = arith.constant 1 : index
    %c1_298 = arith.constant 1 : index
    %c2_299 = arith.constant 2 : index
    %c0_300 = arith.constant 0 : index
    %c0_301 = arith.constant 0 : index
    %396 = vector.load %arg2[%c1_297, %c1_298, %c2_299, %c0_300, %c0_301] : memref<2x3x4x32x8xbf16, #tpu.memory_space<vmem>>, vector<1x1x1x32x8xbf16>
    %397 = vector.shape_cast %396 : vector<1x1x1x32x8xbf16> to vector<32x8xbf16>
    %c1_302 = arith.constant 1 : index
    %c2_303 = arith.constant 2 : index
    %c2_304 = arith.constant 2 : index
    %c0_305 = arith.constant 0 : index
    %c0_306 = arith.constant 0 : index
    %398 = vector.load %arg2[%c1_302, %c2_303, %c2_304, %c0_305, %c0_306] : memref<2x3x4x32x8xbf16, #tpu.memory_space<vmem>>, vector<1x1x1x32x8xbf16>
    %399 = vector.shape_cast %398 : vector<1x1x1x32x8xbf16> to vector<32x8xbf16>
    %c1_307 = arith.constant 1 : index
    %c0_308 = arith.constant 0 : index
    %c2_309 = arith.constant 2 : index
    %c0_310 = arith.constant 0 : index
    %c0_311 = arith.constant 0 : index
    %400 = vector.load %arg6[%c1_307, %c0_308, %c2_309, %c0_310, %c0_311] : memref<2x3x4x1x8xf32, #tpu.memory_space<vmem>>, vector<1x1x1x1x8xf32>
    %401 = vector.shape_cast %400 : vector<1x1x1x1x8xf32> to vector<1x8xf32>
    %c1_312 = arith.constant 1 : index
    %c1_313 = arith.constant 1 : index
    %c2_314 = arith.constant 2 : index
    %c0_315 = arith.constant 0 : index
    %c0_316 = arith.constant 0 : index
    %402 = vector.load %arg6[%c1_312, %c1_313, %c2_314, %c0_315, %c0_316] : memref<2x3x4x1x8xf32, #tpu.memory_space<vmem>>, vector<1x1x1x1x8xf32>
    %403 = vector.shape_cast %402 : vector<1x1x1x1x8xf32> to vector<1x8xf32>
    %c1_317 = arith.constant 1 : index
    %c2_318 = arith.constant 2 : index
    %c2_319 = arith.constant 2 : index
    %c0_320 = arith.constant 0 : index
    %c0_321 = arith.constant 0 : index
    %404 = vector.load %arg6[%c1_317, %c2_318, %c2_319, %c0_320, %c0_321] : memref<2x3x4x1x8xf32, #tpu.memory_space<vmem>>, vector<1x1x1x1x8xf32>
    %405 = vector.shape_cast %404 : vector<1x1x1x1x8xf32> to vector<1x8xf32>
    %cst_322 = arith.constant dense<0.000000e+00> : vector<16x8xf32>
    %406 = tpu.matmul %294, %395, %cst_322 {dimension_numbers = #tpu.dot_dimension_numbers<[1], [0], [0], [1], [0, 0, 1, 1], [], []>} : vector<16x32xbf16>, vector<32x8xbf16>, vector<16x8xf32> -> vector<16x8xf32>
    %407 = vector.broadcast %401 : vector<1x8xf32> to vector<16x8xf32>
    %408 = arith.addf %406, %407 : vector<16x8xf32>
    %cst_323 = arith.constant 0.353553385 : f32
    %409 = vector.broadcast %cst_323 : f32 to vector<16x8xf32>
    %410 = arith.mulf %408, %409 : vector<16x8xf32>
    %cst_324 = arith.constant dense<0.000000e+00> : vector<16x8xf32>
    %411 = tpu.matmul %294, %397, %cst_324 {dimension_numbers = #tpu.dot_dimension_numbers<[1], [0], [0], [1], [0, 0, 1, 1], [], []>} : vector<16x32xbf16>, vector<32x8xbf16>, vector<16x8xf32> -> vector<16x8xf32>
    %412 = vector.broadcast %403 : vector<1x8xf32> to vector<16x8xf32>
    %413 = arith.addf %411, %412 : vector<16x8xf32>
    %cst_325 = arith.constant dense<0.000000e+00> : vector<16x8xf32>
    %414 = tpu.matmul %294, %399, %cst_325 {dimension_numbers = #tpu.dot_dimension_numbers<[1], [0], [0], [1], [0, 0, 1, 1], [], []>} : vector<16x32xbf16>, vector<32x8xbf16>, vector<16x8xf32> -> vector<16x8xf32>
    %415 = vector.broadcast %405 : vector<1x8xf32> to vector<16x8xf32>
    %416 = arith.addf %414, %415 : vector<16x8xf32>
    %417 = vector.shape_cast %410 : vector<16x8xf32> to vector<2x8x8xf32>
    %418 = vector.shape_cast %413 : vector<16x8xf32> to vector<2x8x8xf32>
    %419 = vector.shape_cast %416 : vector<16x8xf32> to vector<2x8x8xf32>
    %420 = arith.truncf %417 : vector<2x8x8xf32> to vector<2x8x8xbf16>
    %421 = arith.truncf %418 : vector<2x8x8xf32> to vector<2x8x8xbf16>
    "tpu.trace_start"() <{level = 10 : i32, message = "btd,bsd->bts"}> : () -> ()
    %cst_326 = arith.constant dense<0.000000e+00> : vector<2x8x8xf32>
    %422 = tpu.matmul %420, %421, %cst_326 {dimension_numbers = #tpu.dot_dimension_numbers<[2], [2], [1], [1], [0, 0, 0, 1, 1, 1], [0], [0]>} : vector<2x8x8xbf16>, vector<2x8x8xbf16>, vector<2x8x8xf32> -> vector<2x8x8xf32>
    "tpu.trace_stop"() : () -> ()
    %423 = arith.addf %422, %4 : vector<2x8x8xf32>
    %cst_327 = arith.constant dense<0xFF800000> : vector<2x8xf32>
    %424 = vector.multi_reduction <maximumf>, %423, %cst_327 [2] : vector<2x8x8xf32> to vector<2x8xf32>
    %425 = vector.shape_cast %424 : vector<2x8xf32> to vector<2x8x1xf32>
    %426 = vector.broadcast %425 : vector<2x8x1xf32> to vector<2x8x8xf32>
    %427 = arith.subf %423, %426 : vector<2x8x8xf32>
    %428 = math.exp %427 : vector<2x8x8xf32>
    %cst_328 = arith.constant dense<0.000000e+00> : vector<2x8xf32>
    %429 = vector.multi_reduction <add>, %428, %cst_328 [2] : vector<2x8x8xf32> to vector<2x8xf32>
    %430 = vector.shape_cast %429 : vector<2x8xf32> to vector<2x8x1xf32>
    %431 = tpu.reciprocal %430 {approx = true} : vector<2x8x1xf32> -> vector<2x8x1xf32>
    %432 = vector.broadcast %431 : vector<2x8x1xf32> to vector<2x8x8xf32>
    %433 = arith.mulf %428, %432 : vector<2x8x8xf32>
    %434 = arith.truncf %433 : vector<2x8x8xf32> to vector<2x8x8xbf16>
    %435 = arith.truncf %419 : vector<2x8x8xf32> to vector<2x8x8xbf16>
    "tpu.trace_start"() <{level = 10 : i32, message = "bts,bsd->btd"}> : () -> ()
    %cst_329 = arith.constant dense<0.000000e+00> : vector<2x8x8xf32>
    %436 = tpu.matmul %434, %435, %cst_329 {dimension_numbers = #tpu.dot_dimension_numbers<[2], [1], [1], [2], [0, 0, 0, 1, 1, 2], [0], [0]>} : vector<2x8x8xbf16>, vector<2x8x8xbf16>, vector<2x8x8xf32> -> vector<2x8x8xf32>
    "tpu.trace_stop"() : () -> ()
    %437 = vector.shape_cast %436 : vector<2x8x8xf32> to vector<16x8xf32>
    %438 = arith.truncf %437 : vector<16x8xf32> to vector<16x8xbf16>
    %c1_330 = arith.constant 1 : index
    %c2_331 = arith.constant 2 : index
    %c0_332 = arith.constant 0 : index
    %c0_333 = arith.constant 0 : index
    %439 = vector.load %arg3[%c1_330, %c2_331, %c0_332, %c0_333] : memref<2x4x8x32xbf16, #tpu.memory_space<vmem>>, vector<1x1x8x32xbf16>
    %440 = vector.shape_cast %439 : vector<1x1x8x32xbf16> to vector<8x32xbf16>
    %cst_334 = arith.constant dense<0.000000e+00> : vector<16x32xf32>
    %441 = tpu.matmul %438, %440, %cst_334 {dimension_numbers = #tpu.dot_dimension_numbers<[1], [0], [0], [1], [0, 0, 1, 1], [], []>} : vector<16x8xbf16>, vector<8x32xbf16>, vector<16x32xf32> -> vector<16x32xf32>
    %442 = arith.addf %393, %441 : vector<16x32xf32>
    %c1_335 = arith.constant 1 : index
    %c0_336 = arith.constant 0 : index
    %c3_337 = arith.constant 3 : index
    %c0_338 = arith.constant 0 : index
    %c0_339 = arith.constant 0 : index
    %443 = vector.load %arg2[%c1_335, %c0_336, %c3_337, %c0_338, %c0_339] : memref<2x3x4x32x8xbf16, #tpu.memory_space<vmem>>, vector<1x1x1x32x8xbf16>
    %444 = vector.shape_cast %443 : vector<1x1x1x32x8xbf16> to vector<32x8xbf16>
    %c1_340 = arith.constant 1 : index
    %c1_341 = arith.constant 1 : index
    %c3_342 = arith.constant 3 : index
    %c0_343 = arith.constant 0 : index
    %c0_344 = arith.constant 0 : index
    %445 = vector.load %arg2[%c1_340, %c1_341, %c3_342, %c0_343, %c0_344] : memref<2x3x4x32x8xbf16, #tpu.memory_space<vmem>>, vector<1x1x1x32x8xbf16>
    %446 = vector.shape_cast %445 : vector<1x1x1x32x8xbf16> to vector<32x8xbf16>
    %c1_345 = arith.constant 1 : index
    %c2_346 = arith.constant 2 : index
    %c3_347 = arith.constant 3 : index
    %c0_348 = arith.constant 0 : index
    %c0_349 = arith.constant 0 : index
    %447 = vector.load %arg2[%c1_345, %c2_346, %c3_347, %c0_348, %c0_349] : memref<2x3x4x32x8xbf16, #tpu.memory_space<vmem>>, vector<1x1x1x32x8xbf16>
    %448 = vector.shape_cast %447 : vector<1x1x1x32x8xbf16> to vector<32x8xbf16>
    %c1_350 = arith.constant 1 : index
    %c0_351 = arith.constant 0 : index
    %c3_352 = arith.constant 3 : index
    %c0_353 = arith.constant 0 : index
    %c0_354 = arith.constant 0 : index
    %449 = vector.load %arg6[%c1_350, %c0_351, %c3_352, %c0_353, %c0_354] : memref<2x3x4x1x8xf32, #tpu.memory_space<vmem>>, vector<1x1x1x1x8xf32>
    %450 = vector.shape_cast %449 : vector<1x1x1x1x8xf32> to vector<1x8xf32>
    %c1_355 = arith.constant 1 : index
    %c1_356 = arith.constant 1 : index
    %c3_357 = arith.constant 3 : index
    %c0_358 = arith.constant 0 : index
    %c0_359 = arith.constant 0 : index
    %451 = vector.load %arg6[%c1_355, %c1_356, %c3_357, %c0_358, %c0_359] : memref<2x3x4x1x8xf32, #tpu.memory_space<vmem>>, vector<1x1x1x1x8xf32>
    %452 = vector.shape_cast %451 : vector<1x1x1x1x8xf32> to vector<1x8xf32>
    %c1_360 = arith.constant 1 : index
    %c2_361 = arith.constant 2 : index
    %c3_362 = arith.constant 3 : index
    %c0_363 = arith.constant 0 : index
    %c0_364 = arith.constant 0 : index
    %453 = vector.load %arg6[%c1_360, %c2_361, %c3_362, %c0_363, %c0_364] : memref<2x3x4x1x8xf32, #tpu.memory_space<vmem>>, vector<1x1x1x1x8xf32>
    %454 = vector.shape_cast %453 : vector<1x1x1x1x8xf32> to vector<1x8xf32>
    %cst_365 = arith.constant dense<0.000000e+00> : vector<16x8xf32>
    %455 = tpu.matmul %294, %444, %cst_365 {dimension_numbers = #tpu.dot_dimension_numbers<[1], [0], [0], [1], [0, 0, 1, 1], [], []>} : vector<16x32xbf16>, vector<32x8xbf16>, vector<16x8xf32> -> vector<16x8xf32>
    %456 = vector.broadcast %450 : vector<1x8xf32> to vector<16x8xf32>
    %457 = arith.addf %455, %456 : vector<16x8xf32>
    %cst_366 = arith.constant 0.353553385 : f32
    %458 = vector.broadcast %cst_366 : f32 to vector<16x8xf32>
    %459 = arith.mulf %457, %458 : vector<16x8xf32>
    %cst_367 = arith.constant dense<0.000000e+00> : vector<16x8xf32>
    %460 = tpu.matmul %294, %446, %cst_367 {dimension_numbers = #tpu.dot_dimension_numbers<[1], [0], [0], [1], [0, 0, 1, 1], [], []>} : vector<16x32xbf16>, vector<32x8xbf16>, vector<16x8xf32> -> vector<16x8xf32>
    %461 = vector.broadcast %452 : vector<1x8xf32> to vector<16x8xf32>
    %462 = arith.addf %460, %461 : vector<16x8xf32>
    %cst_368 = arith.constant dense<0.000000e+00> : vector<16x8xf32>
    %463 = tpu.matmul %294, %448, %cst_368 {dimension_numbers = #tpu.dot_dimension_numbers<[1], [0], [0], [1], [0, 0, 1, 1], [], []>} : vector<16x32xbf16>, vector<32x8xbf16>, vector<16x8xf32> -> vector<16x8xf32>
    %464 = vector.broadcast %454 : vector<1x8xf32> to vector<16x8xf32>
    %465 = arith.addf %463, %464 : vector<16x8xf32>
    %466 = vector.shape_cast %459 : vector<16x8xf32> to vector<2x8x8xf32>
    %467 = vector.shape_cast %462 : vector<16x8xf32> to vector<2x8x8xf32>
    %468 = vector.shape_cast %465 : vector<16x8xf32> to vector<2x8x8xf32>
    %469 = arith.truncf %466 : vector<2x8x8xf32> to vector<2x8x8xbf16>
    %470 = arith.truncf %467 : vector<2x8x8xf32> to vector<2x8x8xbf16>
    "tpu.trace_start"() <{level = 10 : i32, message = "btd,bsd->bts"}> : () -> ()
    %cst_369 = arith.constant dense<0.000000e+00> : vector<2x8x8xf32>
    %471 = tpu.matmul %469, %470, %cst_369 {dimension_numbers = #tpu.dot_dimension_numbers<[2], [2], [1], [1], [0, 0, 0, 1, 1, 1], [0], [0]>} : vector<2x8x8xbf16>, vector<2x8x8xbf16>, vector<2x8x8xf32> -> vector<2x8x8xf32>
    "tpu.trace_stop"() : () -> ()
    %472 = arith.addf %471, %4 : vector<2x8x8xf32>
    %cst_370 = arith.constant dense<0xFF800000> : vector<2x8xf32>
    %473 = vector.multi_reduction <maximumf>, %472, %cst_370 [2] : vector<2x8x8xf32> to vector<2x8xf32>
    %474 = vector.shape_cast %473 : vector<2x8xf32> to vector<2x8x1xf32>
    %475 = vector.broadcast %474 : vector<2x8x1xf32> to vector<2x8x8xf32>
    %476 = arith.subf %472, %475 : vector<2x8x8xf32>
    %477 = math.exp %476 : vector<2x8x8xf32>
    %cst_371 = arith.constant dense<0.000000e+00> : vector<2x8xf32>
    %478 = vector.multi_reduction <add>, %477, %cst_371 [2] : vector<2x8x8xf32> to vector<2x8xf32>
    %479 = vector.shape_cast %478 : vector<2x8xf32> to vector<2x8x1xf32>
    %480 = tpu.reciprocal %479 {approx = true} : vector<2x8x1xf32> -> vector<2x8x1xf32>
    %481 = vector.broadcast %480 : vector<2x8x1xf32> to vector<2x8x8xf32>
    %482 = arith.mulf %477, %481 : vector<2x8x8xf32>
    %483 = arith.truncf %482 : vector<2x8x8xf32> to vector<2x8x8xbf16>
    %484 = arith.truncf %468 : vector<2x8x8xf32> to vector<2x8x8xbf16>
    "tpu.trace_start"() <{level = 10 : i32, message = "bts,bsd->btd"}> : () -> ()
    %cst_372 = arith.constant dense<0.000000e+00> : vector<2x8x8xf32>
    %485 = tpu.matmul %483, %484, %cst_372 {dimension_numbers = #tpu.dot_dimension_numbers<[2], [1], [1], [2], [0, 0, 0, 1, 1, 2], [0], [0]>} : vector<2x8x8xbf16>, vector<2x8x8xbf16>, vector<2x8x8xf32> -> vector<2x8x8xf32>
    "tpu.trace_stop"() : () -> ()
    %486 = vector.shape_cast %485 : vector<2x8x8xf32> to vector<16x8xf32>
    %487 = arith.truncf %486 : vector<16x8xf32> to vector<16x8xbf16>
    %c1_373 = arith.constant 1 : index
    %c3_374 = arith.constant 3 : index
    %c0_375 = arith.constant 0 : index
    %c0_376 = arith.constant 0 : index
    %488 = vector.load %arg3[%c1_373, %c3_374, %c0_375, %c0_376] : memref<2x4x8x32xbf16, #tpu.memory_space<vmem>>, vector<1x1x8x32xbf16>
    %489 = vector.shape_cast %488 : vector<1x1x8x32xbf16> to vector<8x32xbf16>
    %cst_377 = arith.constant dense<0.000000e+00> : vector<16x32xf32>
    %490 = tpu.matmul %487, %489, %cst_377 {dimension_numbers = #tpu.dot_dimension_numbers<[1], [0], [0], [1], [0, 0, 1, 1], [], []>} : vector<16x8xbf16>, vector<8x32xbf16>, vector<16x32xf32> -> vector<16x32xf32>
    %491 = arith.addf %442, %490 : vector<16x32xf32>
    %492 = vector.broadcast %288 : vector<1x32xf32> to vector<16x32xf32>
    %493 = arith.addf %491, %492 : vector<16x32xf32>
    %494 = arith.addf %285, %493 : vector<16x32xf32>
    %cst_378 = arith.constant dense<0.000000e+00> : vector<16xf32>
    %495 = vector.multi_reduction <add>, %494, %cst_378 [1] : vector<16x32xf32> to vector<16xf32>
    %496 = vector.shape_cast %495 : vector<16xf32> to vector<16x1xf32>
    %cst_379 = arith.constant 3.200000e+01 : f32
    %497 = vector.broadcast %cst_379 : f32 to vector<16x1xf32>
    %498 = arith.divf %496, %497 : vector<16x1xf32>
    %499 = vector.broadcast %498 : vector<16x1xf32> to vector<16x32xf32>
    %500 = arith.subf %494, %499 : vector<16x32xf32>
    %501 = arith.mulf %500, %500 : vector<16x32xf32>
    %cst_380 = arith.constant dense<0.000000e+00> : vector<16xf32>
    %502 = vector.multi_reduction <add>, %501, %cst_380 [1] : vector<16x32xf32> to vector<16xf32>
    %503 = vector.shape_cast %502 : vector<16xf32> to vector<16x1xf32>
    %cst_381 = arith.constant 3.200000e+01 : f32
    %504 = vector.broadcast %cst_381 : f32 to vector<16x1xf32>
    %505 = arith.divf %503, %504 : vector<16x1xf32>
    %506 = vector.broadcast %498 : vector<16x1xf32> to vector<16x32xf32>
    %507 = arith.subf %494, %506 : vector<16x32xf32>
    %cst_382 = arith.constant 9.99999974E-6 : f32
    %508 = vector.broadcast %cst_382 : f32 to vector<16x1xf32>
    %509 = arith.addf %505, %508 : vector<16x1xf32>
    %510 = math.rsqrt %509 : vector<16x1xf32>
    %511 = vector.broadcast %510 : vector<16x1xf32> to vector<16x32xf32>
    %512 = arith.mulf %507, %511 : vector<16x32xf32>
    %513 = vector.broadcast %289 : vector<1x32xf32> to vector<16x32xf32>
    %514 = arith.mulf %512, %513 : vector<16x32xf32>
    %515 = vector.broadcast %290 : vector<1x32xf32> to vector<16x32xf32>
    %516 = arith.addf %514, %515 : vector<16x32xf32>
    %517 = arith.truncf %516 : vector<16x32xf32> to vector<16x32xbf16>
    %c1_383 = arith.constant 1 : index
    %c0_384 = arith.constant 0 : index
    %c0_385 = arith.constant 0 : index
    %518 = vector.load %arg4[%c1_383, %c0_384, %c0_385] : memref<2x32x64xbf16, #tpu.memory_space<vmem>>, vector<1x32x64xbf16>
    %519 = vector.shape_cast %518 : vector<1x32x64xbf16> to vector<32x64xbf16>
    %cst_386 = arith.constant dense<0.000000e+00> : vector<16x64xf32>
    %520 = tpu.matmul %517, %519, %cst_386 {dimension_numbers = #tpu.dot_dimension_numbers<[1], [0], [0], [1], [0, 0, 1, 1], [], []>} : vector<16x32xbf16>, vector<32x64xbf16>, vector<16x64xf32> -> vector<16x64xf32>
    %c1_387 = arith.constant 1 : index
    %c0_388 = arith.constant 0 : index
    %c0_389 = arith.constant 0 : index
    %521 = vector.load %arg8[%c1_387, %c0_388, %c0_389] : memref<2x1x64xf32, #tpu.memory_space<vmem>>, vector<1x1x64xf32>
    %522 = vector.shape_cast %521 : vector<1x1x64xf32> to vector<1x64xf32>
    %523 = vector.broadcast %522 : vector<1x64xf32> to vector<16x64xf32>
    %524 = arith.addf %520, %523 : vector<16x64xf32>
    %cst_390 = arith.constant 5.000000e-01 : f32
    %525 = vector.broadcast %cst_390 : f32 to vector<16x64xf32>
    %526 = arith.mulf %525, %524 : vector<16x64xf32>
    %cst_391 = arith.constant 4.471500e-02 : f32
    %527 = vector.broadcast %cst_391 : f32 to vector<16x64xf32>
    %528 = arith.mulf %527, %524 : vector<16x64xf32>
    %529 = arith.mulf %528, %524 : vector<16x64xf32>
    %530 = arith.mulf %529, %524 : vector<16x64xf32>
    %531 = arith.addf %524, %530 : vector<16x64xf32>
    %cst_392 = arith.constant 0.797884583 : f32
    %532 = vector.broadcast %cst_392 : f32 to vector<16x64xf32>
    %533 = arith.mulf %532, %531 : vector<16x64xf32>
    %534 = math.tanh %533 : vector<16x64xf32>
    %cst_393 = arith.constant 1.000000e+00 : f32
    %535 = vector.broadcast %cst_393 : f32 to vector<16x64xf32>
    %536 = arith.addf %535, %534 : vector<16x64xf32>
    %537 = arith.mulf %526, %536 : vector<16x64xf32>
    %538 = arith.truncf %537 : vector<16x64xf32> to vector<16x64xbf16>
    %c1_394 = arith.constant 1 : index
    %c0_395 = arith.constant 0 : index
    %c0_396 = arith.constant 0 : index
    %539 = vector.load %arg5[%c1_394, %c0_395, %c0_396] : memref<2x64x32xbf16, #tpu.memory_space<vmem>>, vector<1x64x32xbf16>
    %540 = vector.shape_cast %539 : vector<1x64x32xbf16> to vector<64x32xbf16>
    %cst_397 = arith.constant dense<0.000000e+00> : vector<16x32xf32>
    %541 = tpu.matmul %538, %540, %cst_397 {dimension_numbers = #tpu.dot_dimension_numbers<[1], [0], [0], [1], [0, 0, 1, 1], [], []>} : vector<16x64xbf16>, vector<64x32xbf16>, vector<16x32xf32> -> vector<16x32xf32>
    %542 = vector.broadcast %291 : vector<1x32xf32> to vector<16x32xf32>
    %543 = arith.addf %541, %542 : vector<16x32xf32>
    %544 = arith.addf %516, %543 : vector<16x32xf32>
    %cst_398 = arith.constant dense<0.000000e+00> : vector<16xf32>
    %545 = vector.multi_reduction <add>, %544, %cst_398 [1] : vector<16x32xf32> to vector<16xf32>
    %546 = vector.shape_cast %545 : vector<16xf32> to vector<16x1xf32>
    %cst_399 = arith.constant 3.200000e+01 : f32
    %547 = vector.broadcast %cst_399 : f32 to vector<16x1xf32>
    %548 = arith.divf %546, %547 : vector<16x1xf32>
    %549 = vector.broadcast %548 : vector<16x1xf32> to vector<16x32xf32>
    %550 = arith.subf %544, %549 : vector<16x32xf32>
    %551 = arith.mulf %550, %550 : vector<16x32xf32>
    %cst_400 = arith.constant dense<0.000000e+00> : vector<16xf32>
    %552 = vector.multi_reduction <add>, %551, %cst_400 [1] : vector<16x32xf32> to vector<16xf32>
    %553 = vector.shape_cast %552 : vector<16xf32> to vector<16x1xf32>
    %cst_401 = arith.constant 3.200000e+01 : f32
    %554 = vector.broadcast %cst_401 : f32 to vector<16x1xf32>
    %555 = arith.divf %553, %554 : vector<16x1xf32>
    %556 = vector.broadcast %548 : vector<16x1xf32> to vector<16x32xf32>
    %557 = arith.subf %544, %556 : vector<16x32xf32>
    %cst_402 = arith.constant 9.99999974E-6 : f32
    %558 = vector.broadcast %cst_402 : f32 to vector<16x1xf32>
    %559 = arith.addf %555, %558 : vector<16x1xf32>
    %560 = math.rsqrt %559 : vector<16x1xf32>
    %561 = vector.broadcast %560 : vector<16x1xf32> to vector<16x32xf32>
    %562 = arith.mulf %557, %561 : vector<16x32xf32>
    %563 = vector.broadcast %292 : vector<1x32xf32> to vector<16x32xf32>
    %564 = arith.mulf %562, %563 : vector<16x32xf32>
    %565 = vector.broadcast %293 : vector<1x32xf32> to vector<16x32xf32>
    %566 = arith.addf %564, %565 : vector<16x32xf32>
    %567 = vector.shape_cast %566 : vector<16x32xf32> to vector<2x8x32xf32>
    %568 = vector.extract_strided_slice %567 {offsets = [0, 0, 0], sizes = [2, 1, 32], strides = [1, 1, 1]} : vector<2x8x32xf32> to vector<2x1x32xf32>
    %569 = vector.shape_cast %568 : vector<2x1x32xf32> to vector<2x32xf32>
    %c0_403 = arith.constant 0 : index
    %c0_404 = arith.constant 0 : index
    %570 = vector.load %arg9[%c0_403, %c0_404] : memref<32x16xf32, #tpu.memory_space<vmem>>, vector<32x16xf32>
    %cst_405 = arith.constant dense<0.000000e+00> : vector<2x16xf32>
    %571 = tpu.matmul %569, %570, %cst_405 {dimension_numbers = #tpu.dot_dimension_numbers<[1], [0], [0], [1], [0, 0, 1, 1], [], []>} : vector<2x32xf32>, vector<32x16xf32>, vector<2x16xf32> -> vector<2x16xf32>
    %c0_406 = arith.constant 0 : index
    %c0_407 = arith.constant 0 : index
    %572 = vector.load %arg10[%c0_406, %c0_407] : memref<1x16xf32, #tpu.memory_space<vmem>>, vector<1x16xf32>
    %573 = vector.broadcast %572 : vector<1x16xf32> to vector<2x16xf32>
    %574 = arith.addf %571, %573 : vector<2x16xf32>
    %cst_408 = arith.constant dense<0.000000e+00> : vector<2xf32>
    %575 = vector.multi_reduction <add>, %574, %cst_408 [1] : vector<2x16xf32> to vector<2xf32>
    %576 = vector.shape_cast %575 : vector<2xf32> to vector<2x1xf32>
    %cst_409 = arith.constant 1.600000e+01 : f32
    %577 = vector.broadcast %cst_409 : f32 to vector<2x1xf32>
    %578 = arith.divf %576, %577 : vector<2x1xf32>
    %579 = vector.broadcast %578 : vector<2x1xf32> to vector<2x16xf32>
    %580 = arith.subf %574, %579 : vector<2x16xf32>
    %581 = arith.mulf %580, %580 : vector<2x16xf32>
    %cst_410 = arith.constant dense<0.000000e+00> : vector<2xf32>
    %582 = vector.multi_reduction <add>, %581, %cst_410 [1] : vector<2x16xf32> to vector<2xf32>
    %583 = vector.shape_cast %582 : vector<2xf32> to vector<2x1xf32>
    %cst_411 = arith.constant 1.600000e+01 : f32
    %584 = vector.broadcast %cst_411 : f32 to vector<2x1xf32>
    %585 = arith.divf %583, %584 : vector<2x1xf32>
    %586 = vector.broadcast %578 : vector<2x1xf32> to vector<2x16xf32>
    %587 = arith.subf %574, %586 : vector<2x16xf32>
    %cst_412 = arith.constant 9.99999996E-13 : f32
    %588 = vector.broadcast %cst_412 : f32 to vector<2x1xf32>
    %589 = arith.addf %585, %588 : vector<2x1xf32>
    %590 = math.rsqrt %589 : vector<2x1xf32>
    %591 = vector.broadcast %590 : vector<2x1xf32> to vector<2x16xf32>
    %592 = arith.mulf %587, %591 : vector<2x16xf32>
    %c0_413 = arith.constant 0 : index
    %c0_414 = arith.constant 0 : index
    %593 = vector.load %arg11[%c0_413, %c0_414] : memref<2x16xf32, #tpu.memory_space<vmem>>, vector<2x16xf32>
    tpu.vector_store %arg11[%c0_413, %c0_414], %592 {strides = array<i32>} : memref<2x16xf32, #tpu.memory_space<vmem>>, vector<2x16xf32>,
    return
  }
}

</mosaic_0001>

<llo_original>
// kernel: proj_encoder_wd_forward.1
$region0: #{proj_encoder_wd_forward.1}
  #allocation0 [shape = 'u32[]', space=smem, size = 0x4, offset = 0x4, fixed_abs, tag = 'smem constant byte address 0x4 - core index']
  #allocation1 [shape = 'u32[144,128]{1,0:T(1,128)}', space=vmem, size = 0x12000, scoped, tag = 'internal scratch']
  %s0 = inlined_call_operand.vmem [shape: f32[2,8,32], index: 0, kind: input, shape index: {}]
  %s1 = inlined_call_operand.vmem [shape: f32[2,1,8], index: 1, kind: input, shape index: {}]
  %s2 = inlined_call_operand.vmem [shape: bf16[2,3,4,32,8], index: 2, kind: input, shape index: {}]
  %s3 = inlined_call_operand.vmem [shape: bf16[2,4,8,32], index: 3, kind: input, shape index: {}]
  %s4 = inlined_call_operand.vmem [shape: bf16[2,32,64], index: 4, kind: input, shape index: {}]
  %s5 = inlined_call_operand.vmem [shape: bf16[2,64,32], index: 5, kind: input, shape index: {}]
  %s6 = inlined_call_operand.vmem [shape: f32[2,3,4,1,8], index: 6, kind: input, shape index: {}]
  %s7 = inlined_call_operand.vmem [shape: f32[2,6,32], index: 7, kind: input, shape index: {}]
  %s8 = inlined_call_operand.vmem [shape: f32[2,1,64], index: 8, kind: input, shape index: {}]
  %s9 = inlined_call_operand.vmem [shape: f32[32,16], index: 9, kind: input, shape index: {}]
  %s10 = inlined_call_operand.vmem [shape: f32[1,16], index: 10, kind: input, shape index: {}]
  %s11 = inlined_call_operand.hbm [shape: f32[2,16], index: 11, kind: output, shape index: {}]
  %s12 = sld [smem:[#allocation0]]
  $region54: #{proj_encoder_wd_forward.1} parent=0
    _
  %s14 = ssub.s32 1, %s12
  %s15 = scalar_select 0, %s14, %s12
  $region1: #{proj_encoder_wd_forward.1} parent=0
    #allocation2 [shape = 'u8[1024]{0}', space=vmem, size = 0x400, scoped, tag = 'output window, operand 0, single buffered']
    #allocation3 [shape = 's32[1]{0}', space=sflag, size = 0x4, scoped, tag = 'scoped memory for proj_encoder_wd_forward.1']
    %16 = vsyncpa [#allocation3], 0
    // Predicated region
    $region2: #{proj_encoder_wd_forward.1} parent=1 // pred_check
      _
    $region3: #{proj_encoder_wd_forward.1} parent=1 // pred_check_branch
      %18 = sbr.rel (0) target = $region5
    $region4: #{proj_encoder_wd_forward.1} parent=1 // pred_region
      _
    $region5: #{proj_encoder_wd_forward.1} parent=1 // pred_fallthru
      _
    // Predicated region
    $region6: #{proj_encoder_wd_forward.1} parent=1 // pred_check
      _
    $region7: #{proj_encoder_wd_forward.1} parent=1 // pred_check_branch
      %20 = sbr.rel (0) target = $region9
    $region8: #{proj_encoder_wd_forward.1} parent=1 // pred_region
      _
    $region9: #{proj_encoder_wd_forward.1} parent=1 // pred_fallthru
      _
    // Predicated region
    $region10: #{proj_encoder_wd_forward.1} parent=1 // pred_check
      _
    $region11: #{proj_encoder_wd_forward.1} parent=1 // pred_check_branch
      %22 = sbr.rel (0) target = $region13
    $region12: #{proj_encoder_wd_forward.1} parent=1 // pred_region
      _
    $region13: #{proj_encoder_wd_forward.1} parent=1 // pred_fallthru
      _
    // Predicated region
    $region14: #{proj_encoder_wd_forward.1} parent=1 // pred_check
      _
    $region15: #{proj_encoder_wd_forward.1} parent=1 // pred_check_branch
      %24 = sbr.rel (0) target = $region17
    $region16: #{proj_encoder_wd_forward.1} parent=1 // pred_region
      _
    $region17: #{proj_encoder_wd_forward.1} parent=1 // pred_fallthru
      _
    // Predicated region
    $region18: #{proj_encoder_wd_forward.1} parent=1 // pred_check
      _
    $region19: #{proj_encoder_wd_forward.1} parent=1 // pred_check_branch
      %26 = sbr.rel (0) target = $region21
    $region20: #{proj_encoder_wd_forward.1} parent=1 // pred_region
      _
    $region21: #{proj_encoder_wd_forward.1} parent=1 // pred_fallthru
      _
    // Predicated region
    $region22: #{proj_encoder_wd_forward.1} parent=1 // pred_check
      _
    $region23: #{proj_encoder_wd_forward.1} parent=1 // pred_check_branch
      %28 = sbr.rel (0) target = $region25
    $region24: #{proj_encoder_wd_forward.1} parent=1 // pred_region
      _
    $region25: #{proj_encoder_wd_forward.1} parent=1 // pred_fallthru
      _
    // Predicated region
    $region26: #{proj_encoder_wd_forward.1} parent=1 // pred_check
      _
    $region27: #{proj_encoder_wd_forward.1} parent=1 // pred_check_branch
      %30 = sbr.rel (0) target = $region29
    $region28: #{proj_encoder_wd_forward.1} parent=1 // pred_region
      _
    $region29: #{proj_encoder_wd_forward.1} parent=1 // pred_fallthru
      _
    // Predicated region
    $region30: #{proj_encoder_wd_forward.1} parent=1 // pred_check
      _
    $region31: #{proj_encoder_wd_forward.1} parent=1 // pred_check_branch
      %32 = sbr.rel (0) target = $region33
    $region32: #{proj_encoder_wd_forward.1} parent=1 // pred_region
      _
    $region33: #{proj_encoder_wd_forward.1} parent=1 // pred_fallthru
      _
    // Predicated region
    $region34: #{proj_encoder_wd_forward.1} parent=1 // pred_check
      _
    $region35: #{proj_encoder_wd_forward.1} parent=1 // pred_check_branch
      %34 = sbr.rel (0) target = $region37
    $region36: #{proj_encoder_wd_forward.1} parent=1 // pred_region
      _
    $region37: #{proj_encoder_wd_forward.1} parent=1 // pred_fallthru
      _
    // Predicated region
    $region38: #{proj_encoder_wd_forward.1} parent=1 // pred_check
      _
    $region39: #{proj_encoder_wd_forward.1} parent=1 // pred_check_branch
      %36 = sbr.rel (0) target = $region41
    $region40: #{proj_encoder_wd_forward.1} parent=1 // pred_region
      _
    $region41: #{proj_encoder_wd_forward.1} parent=1 // pred_fallthru
      _
    // Predicated region
    $region42: #{proj_encoder_wd_forward.1} parent=1 // pred_check
      _
    $region43: #{proj_encoder_wd_forward.1} parent=1 // pred_check_branch
      %38 = sbr.rel (0) target = $region45
    $region44: #{proj_encoder_wd_forward.1} parent=1 // pred_region
      _
    $region45: #{proj_encoder_wd_forward.1} parent=1 // pred_fallthru
      _
    %v40 = vld [vmem:[%s0] sm:$0xff]
    %v41 = vld [vmem:[%s0 + $0x8] sm:$0xff]
    %v42 = vld [vmem:[%s1] sm:$0x1]
    %v43 = vld [vmem:[%s1 + $0x1] sm:$0x1]
    %v46 = vlaneseq
    %v47 = vshrl.u32 %v46, 7
    %v48 = vsub.s32 0, %v47
    %v49 = vrot.slane %v42, %v48
    %v50 = vlaneseq
    %v51 = vshrl.u32 %v50, 7
    %v52 = vsub.s32 0, %v51
    %v53 = vrot.slane %v43, %v52
    %v56 = vld [vmem:[%s7] sm:$0x3f]
    %v57 = vpack.c.bf16 %v41, %v40
    %v58 = vld [vmem:[%s2] sm:$0xf]
    %v59 = vld [vmem:[%s2 + $0x4] sm:$0xf]
    %v60 = vld [vmem:[%s2 + $0x8] sm:$0xf]
    %v61 = vld [vmem:[%s2 + $0xc] sm:$0xf]
    %s62 = scalar_lea.vmem %s2, 64
    %v63 = vld [vmem:[%s62] sm:$0xf]
    %v64 = vld [vmem:[%s62 + $0x4] sm:$0xf]
    %v65 = vld [vmem:[%s62 + $0x8] sm:$0xf]
    %v66 = vld [vmem:[%s62 + $0xc] sm:$0xf]
    %s67 = scalar_lea.vmem %s2, 128
    %v68 = vld [vmem:[%s67] sm:$0xf]
    %v69 = vld [vmem:[%s67 + $0x4] sm:$0xf]
    %v70 = vld [vmem:[%s67 + $0x8] sm:$0xf]
    %v71 = vld [vmem:[%s67 + $0xc] sm:$0xf]
    %v72 = vld [vmem:[%s6] sm:$0x1]
    %s73 = scalar_lea.vmem %s6, 4
    %v74 = vld [vmem:[%s73] sm:$0x1]
    %s75 = scalar_lea.vmem %s6, 8
    %v76 = vld [vmem:[%s75] sm:$0x1]
    %v78 = vlaneseq
    %v79 = vshrl.u32 %v78, 7
    %v80 = vsub.s32 0, %v79
    %v81 = vrot.slane %v72, %v80
    %v87 = vunpack.c.l.b16 %v58
    %v88 = vunpack.c.l.b16 %v59
    %v89 = vunpack.c.l.b16 %v60
    %v90 = vunpack.c.l.b16 %v61
    %v91 = vpack.c.b16 %v88, %v87
    %v92 = vpack.c.b16 %v90, %v89
    %vm95 = vcmask 261120
    %v97 = vsel %vm95, %v57, 0
    %99 = vmatprep.subr.bf16.mxu0 0
    %100 = vmatpush1.bf16.msra.mxu0 %v91
    %101 = vmatprep.subr.bf16.mxu0 0
    %102 = vmatpush1.bf16.msra.mxu0 %v92
    %103 = vmatprep.subr.bf16.mxu0 0
    %104 = vmatpush1.bf16.msra.mxu0 0
    %105 = vmatprep.subr.bf16.mxu0 0
    %106 = vmatpush1.bf16.msra.mxu0 0
    %107 = vmatprep.subr.bf16.mxu0 0
    %108 = vmatpush1.bf16.msra.mxu0 0
    %109 = vmatprep.subr.bf16.mxu0 0
    %110 = vmatpush1.bf16.msra.mxu0 0
    %111 = vmatprep.subr.bf16.mxu0 0
    %112 = vmatpush1.bf16.msra.mxu0 0
    %113 = vmatprep.subr.bf16.mxu0 0
    %114 = vmatpush1.bf16.msra.mxu0 0
    %115 = vmatprep.subr.bf16.mxu0 0
    %116 = vmatpush1.bf16.msra.mxu0 0
    %117 = vmatprep.subr.bf16.mxu0 0
    %118 = vmatpush1.bf16.msra.mxu0 0
    %119 = vmatprep.subr.bf16.mxu0 0
    %120 = vmatpush1.bf16.msra.mxu0 0
    %121 = vmatprep.subr.bf16.mxu0 0
    %122 = vmatpush1.bf16.msra.mxu0 0
    %123 = vmatprep.subr.bf16.mxu0 0
    %124 = vmatpush1.bf16.msra.mxu0 0
    %125 = vmatprep.subr.bf16.mxu0 0
    %126 = vmatpush1.bf16.msra.mxu0 0
    %127 = vmatprep.subr.bf16.mxu0 0
    %128 = vmatpush1.bf16.msra.mxu0 0
    %129 = vmatprep.subr.bf16.mxu0 0
    %130 = vmatpush1.bf16.msra.mxu0 0
    %131 = vmatprep.mubr.bf16.mxu0 0
    %132 = vmatmul.mubr.bf16.gmra.mrb[0].mxu0 %v97
    %v133 = vpop.f32.mrb[0].mxu0
    %v134 = vadd.f32 %v81, %v133
    %v135 = vpop.f32.mrb[0].mxu0
    %v136 = vpop.f32.mrb[0].mxu0
    %v137 = vadd.f32 %v81, %v136
    %v138 = vpop.f32.mrb[0].mxu0
    %139 = vdwg.mxu0
    %v140 = vmul.f32 %v134, 0.35355338
    %v141 = vmul.f32 %v137, 0.35355338
    %v143 = vlaneseq
    %v144 = vshrl.u32 %v143, 7
    %v145 = vsub.s32 0, %v144
    %v146 = vrot.slane %v74, %v145
    %v152 = vunpack.c.l.b16 %v63
    %v153 = vunpack.c.l.b16 %v64
    %v154 = vunpack.c.l.b16 %v65
    %v155 = vunpack.c.l.b16 %v66
    %v156 = vpack.c.b16 %v153, %v152
    %v157 = vpack.c.b16 %v155, %v154
    %160 = vmatprep.subr.bf16.mxu0 0
    %161 = vmatpush1.bf16.msra.mxu0 %v156
    %162 = vmatprep.subr.bf16.mxu0 0
    %163 = vmatpush1.bf16.msra.mxu0 %v157
    %164 = vmatprep.subr.bf16.mxu0 0
    %165 = vmatpush1.bf16.msra.mxu0 0
    %166 = vmatprep.subr.bf16.mxu0 0
    %167 = vmatpush1.bf16.msra.mxu0 0
    %168 = vmatprep.subr.bf16.mxu0 0
    %169 = vmatpush1.bf16.msra.mxu0 0
    %170 = vmatprep.subr.bf16.mxu0 0
    %171 = vmatpush1.bf16.msra.mxu0 0
    %172 = vmatprep.subr.bf16.mxu0 0
    %173 = vmatpush1.bf16.msra.mxu0 0
    %174 = vmatprep.subr.bf16.mxu0 0
    %175 = vmatpush1.bf16.msra.mxu0 0
    %176 = vmatprep.subr.bf16.mxu0 0
    %177 = vmatpush1.bf16.msra.mxu0 0
    %178 = vmatprep.subr.bf16.mxu0 0
    %179 = vmatpush1.bf16.msra.mxu0 0
    %180 = vmatprep.subr.bf16.mxu0 0
    %181 = vmatpush1.bf16.msra.mxu0 0
    %182 = vmatprep.subr.bf16.mxu0 0
    %183 = vmatpush1.bf16.msra.mxu0 0
    %184 = vmatprep.subr.bf16.mxu0 0
    %185 = vmatpush1.bf16.msra.mxu0 0
    %186 = vmatprep.subr.bf16.mxu0 0
    %187 = vmatpush1.bf16.msra.mxu0 0
    %188 = vmatprep.subr.bf16.mxu0 0
    %189 = vmatpush1.bf16.msra.mxu0 0
    %190 = vmatprep.subr.bf16.mxu0 0
    %191 = vmatpush1.bf16.msra.mxu0 0
    %192 = vmatprep.mubr.bf16.mxu0 0
    %193 = vmatmul.mubr.bf16.gmra.mrb[0].mxu0 %v97
    %v194 = vpop.f32.mrb[0].mxu0
    %v195 = vadd.f32 %v146, %v194
    %v196 = vpop.f32.mrb[0].mxu0
    %v197 = vpop.f32.mrb[0].mxu0
    %v198 = vadd.f32 %v146, %v197
    %v199 = vpop.f32.mrb[0].mxu0
    %200 = vdwg.mxu0
    %v202 = vlaneseq
    %v203 = vshrl.u32 %v202, 7
    %v204 = vsub.s32 0, %v203
    %v205 = vrot.slane %v76, %v204
    %v211 = vunpack.c.l.b16 %v68
    %v212 = vunpack.c.l.b16 %v69
    %v213 = vunpack.c.l.b16 %v70
    %v214 = vunpack.c.l.b16 %v71
    %v215 = vpack.c.b16 %v212, %v211
    %v216 = vpack.c.b16 %v214, %v213
    %219 = vmatprep.subr.bf16.mxu0 0
    %220 = vmatpush1.bf16.msra.mxu0 %v215
    %221 = vmatprep.subr.bf16.mxu0 0
    %222 = vmatpush1.bf16.msra.mxu0 %v216
    %223 = vmatprep.subr.bf16.mxu0 0
    %224 = vmatpush1.bf16.msra.mxu0 0
    %225 = vmatprep.subr.bf16.mxu0 0
    %226 = vmatpush1.bf16.msra.mxu0 0
    %227 = vmatprep.subr.bf16.mxu0 0
    %228 = vmatpush1.bf16.msra.mxu0 0
    %229 = vmatprep.subr.bf16.mxu0 0
    %230 = vmatpush1.bf16.msra.mxu0 0
    %231 = vmatprep.subr.bf16.mxu0 0
    %232 = vmatpush1.bf16.msra.mxu0 0
    %233 = vmatprep.subr.bf16.mxu0 0
    %234 = vmatpush1.bf16.msra.mxu0 0
    %235 = vmatprep.subr.bf16.mxu0 0
    %236 = vmatpush1.bf16.msra.mxu0 0
    %237 = vmatprep.subr.bf16.mxu0 0
    %238 = vmatpush1.bf16.msra.mxu0 0
    %239 = vmatprep.subr.bf16.mxu0 0
    %240 = vmatpush1.bf16.msra.mxu0 0
    %241 = vmatprep.subr.bf16.mxu0 0
    %242 = vmatpush1.bf16.msra.mxu0 0
    %243 = vmatprep.subr.bf16.mxu0 0
    %244 = vmatpush1.bf16.msra.mxu0 0
    %245 = vmatprep.subr.bf16.mxu0 0
    %246 = vmatpush1.bf16.msra.mxu0 0
    %247 = vmatprep.subr.bf16.mxu0 0
    %248 = vmatpush1.bf16.msra.mxu0 0
    %249 = vmatprep.subr.bf16.mxu0 0
    %250 = vmatpush1.bf16.msra.mxu0 0
    %251 = vmatprep.mubr.bf16.mxu0 0
    %252 = vmatmul.mubr.bf16.gmra.mrb[0].mxu0 %v97
    %v253 = vpop.f32.mrb[0].mxu0
    %v254 = vadd.f32 %v205, %v253
    %v255 = vpop.f32.mrb[0].mxu0
    %v256 = vpop.f32.mrb[0].mxu0
    %v257 = vadd.f32 %v205, %v256
    %v258 = vpop.f32.mrb[0].mxu0
    %259 = vdwg.mxu0
    %v260 = vpack.c.bf16 %v140, %v140
    %v261 = vpack.c.bf16 %v141, %v141
    %v262 = vpack.c.bf16 %v195, %v195
    %v263 = vpack.c.bf16 %v198, %v198
    %vm264 = vcmask 64512
    %v266 = vsel %vm264, %v260, 0
    %v269 = vsel %vm264, %v262, 0
    %271 = vmatprep.subr.bf16.mxu0 0
    %272 = vmatpush1.bf16.xpose.msra.mxu0 %v269
    %273 = vmatprep.subr.bf16.mxu0 0
    %274 = vmatpush1.bf16.xpose.msra.mxu0 0
    %275 = vmatprep.subr.bf16.mxu0 0
    %276 = vmatpush1.bf16.xpose.msra.mxu0 0
    %277 = vmatprep.subr.bf16.mxu0 0
    %278 = vmatpush1.bf16.xpose.msra.mxu0 0
    %279 = vmatprep.subr.bf16.mxu0 0
    %280 = vmatpush1.bf16.xpose.msra.mxu0 0
    %281 = vmatprep.subr.bf16.mxu0 0
    %282 = vmatpush1.bf16.xpose.msra.mxu0 0
    %283 = vmatprep.subr.bf16.mxu0 0
    %284 = vmatpush1.bf16.xpose.msra.mxu0 0
    %285 = vmatprep.subr.bf16.mxu0 0
    %286 = vmatpush1.bf16.xpose.msra.mxu0 0
    %287 = vmatprep.subr.bf16.mxu0 0
    %288 = vmatpush1.bf16.xpose.msra.mxu0 0
    %289 = vmatprep.subr.bf16.mxu0 0
    %290 = vmatpush1.bf16.xpose.msra.mxu0 0
    %291 = vmatprep.subr.bf16.mxu0 0
    %292 = vmatpush1.bf16.xpose.msra.mxu0 0
    %293 = vmatprep.subr.bf16.mxu0 0
    %294 = vmatpush1.bf16.xpose.msra.mxu0 0
    %295 = vmatprep.subr.bf16.mxu0 0
    %296 = vmatpush1.bf16.xpose.msra.mxu0 0
    %297 = vmatprep.subr.bf16.mxu0 0
    %298 = vmatpush1.bf16.xpose.msra.mxu0 0
    %299 = vmatprep.subr.bf16.mxu0 0
    %300 = vmatpush1.bf16.xpose.msra.mxu0 0
    %301 = vmatprep.subr.bf16.mxu0 0
    %302 = vmatpush1.bf16.xpose.msra.mxu0 0
    %303 = vmatprep.mubr.bf16.mxu0 0
    %304 = vmatmul.mubr.bf16.gmra.mrb[0].mxu0 %v266
    %v305 = vpop.f32.mrb[0].mxu0
    %v306 = vadd.f32 %v49, %v305
    %v307 = vpop.f32.mrb[0].mxu0
    %v308 = vpop.f32.mrb[0].mxu0
    %v309 = vpop.f32.mrb[0].mxu0
    %310 = vdwg.mxu0
    %v312 = vsel %vm264, %v261, 0
    %v315 = vsel %vm264, %v263, 0
    %317 = vmatprep.subr.bf16.mxu0 0
    %318 = vmatpush1.bf16.xpose.msra.mxu0 %v315
    %319 = vmatprep.subr.bf16.mxu0 0
    %320 = vmatpush1.bf16.xpose.msra.mxu0 0
    %321 = vmatprep.subr.bf16.mxu0 0
    %322 = vmatpush1.bf16.xpose.msra.mxu0 0
    %323 = vmatprep.subr.bf16.mxu0 0
    %324 = vmatpush1.bf16.xpose.msra.mxu0 0
    %325 = vmatprep.subr.bf16.mxu0 0
    %326 = vmatpush1.bf16.xpose.msra.mxu0 0
    %327 = vmatprep.subr.bf16.mxu0 0
    %328 = vmatpush1.bf16.xpose.msra.mxu0 0
    %329 = vmatprep.subr.bf16.mxu0 0
    %330 = vmatpush1.bf16.xpose.msra.mxu0 0
    %331 = vmatprep.subr.bf16.mxu0 0
    %332 = vmatpush1.bf16.xpose.msra.mxu0 0
    %333 = vmatprep.subr.bf16.mxu0 0
    %334 = vmatpush1.bf16.xpose.msra.mxu0 0
    %335 = vmatprep.subr.bf16.mxu0 0
    %336 = vmatpush1.bf16.xpose.msra.mxu0 0
    %337 = vmatprep.subr.bf16.mxu0 0
    %338 = vmatpush1.bf16.xpose.msra.mxu0 0
    %339 = vmatprep.subr.bf16.mxu0 0
    %340 = vmatpush1.bf16.xpose.msra.mxu0 0
    %341 = vmatprep.subr.bf16.mxu0 0
    %342 = vmatpush1.bf16.xpose.msra.mxu0 0
    %343 = vmatprep.subr.bf16.mxu0 0
    %344 = vmatpush1.bf16.xpose.msra.mxu0 0
    %345 = vmatprep.subr.bf16.mxu0 0
    %346 = vmatpush1.bf16.xpose.msra.mxu0 0
    %347 = vmatprep.subr.bf16.mxu0 0
    %348 = vmatpush1.bf16.xpose.msra.mxu0 0
    %349 = vmatprep.mubr.bf16.mxu0 0
    %350 = vmatmul.mubr.bf16.gmra.mrb[0].mxu0 %v312
    %v351 = vpop.f32.mrb[0].mxu0
    %v352 = vadd.f32 %v53, %v351
    %v353 = vpop.f32.mrb[0].mxu0
    %v354 = vpop.f32.mrb[0].mxu0
    %v355 = vpop.f32.mrb[0].mxu0
    %356 = vdwg.mxu0
    %v357 = vsel %vm264, %v306, -inf
    %358 = vmax.xlane.f32.xlu0 %v357
    %v359 = vpop.xlane.xlu0 %358
    %v360 = vsel %vm264, %v352, -inf
    %361 = vmax.xlane.f32.xlu0 %v360
    %v362 = vpop.xlane.xlu0 %361
    %v363 = vsub.f32 %v306, %v359
    %v364 = vsub.f32 %v352, %v362
    %v365 = vmul.f32 %v363, 1.442695
    %v366 = vpow.pop %v365
    %v367 = vmul.f32 %v364, 1.442695
    %v368 = vpow.pop %v367
    %v369 = vsel %vm264, %v366, 0.0
    %370 = vadd.xlane.f32.xlu0 %v369
    %v371 = vpop.xlane.xlu0 %370
    %v372 = vsel %vm264, %v368, 0.0
    %373 = vadd.xlane.f32.xlu0 %v372
    %v374 = vpop.xlane.xlu0 %373
    %v375 = vrcp.pop %v371
    %v376 = vrcp.pop %v374
    %v377 = vmul.f32 %v366, %v375
    %v378 = vmul.f32 %v368, %v376
    %v379 = vpack.c.bf16 %v377, %v377
    %v380 = vpack.c.bf16 %v378, %v378
    %v381 = vpack.c.bf16 %v254, %v254
    %v382 = vpack.c.bf16 %v257, %v257
    %v384 = vsel %vm264, %v379, 0
    %vm386 = vcmask 1043456
    %v388 = vsel %vm386, %v381, 0
    %390 = vmatprep.subr.bf16.mxu0 0
    %391 = vmatpush1.bf16.msra.mxu0 %v388
    %392 = vmatprep.subr.bf16.mxu0 0
    %393 = vmatpush1.bf16.msra.mxu0 0
    %394 = vmatprep.subr.bf16.mxu0 0
    %395 = vmatpush1.bf16.msra.mxu0 0
    %396 = vmatprep.subr.bf16.mxu0 0
    %397 = vmatpush1.bf16.msra.mxu0 0
    %398 = vmatprep.subr.bf16.mxu0 0
    %399 = vmatpush1.bf16.msra.mxu0 0
    %400 = vmatprep.subr.bf16.mxu0 0
    %401 = vmatpush1.bf16.msra.mxu0 0
    %402 = vmatprep.subr.bf16.mxu0 0
    %403 = vmatpush1.bf16.msra.mxu0 0
    %404 = vmatprep.subr.bf16.mxu0 0
    %405 = vmatpush1.bf16.msra.mxu0 0
    %406 = vmatprep.subr.bf16.mxu0 0
    %407 = vmatpush1.bf16.msra.mxu0 0
    %408 = vmatprep.subr.bf16.mxu0 0
    %409 = vmatpush1.bf16.msra.mxu0 0
    %410 = vmatprep.subr.bf16.mxu0 0
    %411 = vmatpush1.bf16.msra.mxu0 0
    %412 = vmatprep.subr.bf16.mxu0 0
    %413 = vmatpush1.bf16.msra.mxu0 0
    %414 = vmatprep.subr.bf16.mxu0 0
    %415 = vmatpush1.bf16.msra.mxu0 0
    %416 = vmatprep.subr.bf16.mxu0 0
    %417 = vmatpush1.bf16.msra.mxu0 0
    %418 = vmatprep.subr.bf16.mxu0 0
    %419 = vmatpush1.bf16.msra.mxu0 0
    %420 = vmatprep.subr.bf16.mxu0 0
    %421 = vmatpush1.bf16.msra.mxu0 0
    %422 = vmatprep.mubr.bf16.mxu0 0
    %423 = vmatmul.mubr.bf16.gmra.mrb[0].mxu0 %v384
    %v424 = vpop.f32.mrb[0].mxu0
    %v425 = vadd.f32 0.0, %v424
    %v426 = vpop.f32.mrb[0].mxu0
    %v427 = vpop.f32.mrb[0].mxu0
    %v428 = vpop.f32.mrb[0].mxu0
    %429 = vdwg.mxu0
    %v431 = vsel %vm264, %v380, 0
    %v434 = vsel %vm386, %v382, 0
    %436 = vmatprep.subr.bf16.mxu0 0
    %437 = vmatpush1.bf16.msra.mxu0 %v434
    %438 = vmatprep.subr.bf16.mxu0 0
    %439 = vmatpush1.bf16.msra.mxu0 0
    %440 = vmatprep.subr.bf16.mxu0 0
    %441 = vmatpush1.bf16.msra.mxu0 0
    %442 = vmatprep.subr.bf16.mxu0 0
    %443 = vmatpush1.bf16.msra.mxu0 0
    %444 = vmatprep.subr.bf16.mxu0 0
    %445 = vmatpush1.bf16.msra.mxu0 0
    %446 = vmatprep.subr.bf16.mxu0 0
    %447 = vmatpush1.bf16.msra.mxu0 0
    %448 = vmatprep.subr.bf16.mxu0 0
    %449 = vmatpush1.bf16.msra.mxu0 0
    %450 = vmatprep.subr.bf16.mxu0 0
    %451 = vmatpush1.bf16.msra.mxu0 0
    %452 = vmatprep.subr.bf16.mxu0 0
    %453 = vmatpush1.bf16.msra.mxu0 0
    %454 = vmatprep.subr.bf16.mxu0 0
    %455 = vmatpush1.bf16.msra.mxu0 0
    %456 = vmatprep.subr.bf16.mxu0 0
    %457 = vmatpush1.bf16.msra.mxu0 0
    %458 = vmatprep.subr.bf16.mxu0 0
    %459 = vmatpush1.bf16.msra.mxu0 0
    %460 = vmatprep.subr.bf16.mxu0 0
    %461 = vmatpush1.bf16.msra.mxu0 0
    %462 = vmatprep.subr.bf16.mxu0 0
    %463 = vmatpush1.bf16.msra.mxu0 0
    %464 = vmatprep.subr.bf16.mxu0 0
    %465 = vmatpush1.bf16.msra.mxu0 0
    %466 = vmatprep.subr.bf16.mxu0 0
    %467 = vmatpush1.bf16.msra.mxu0 0
    %468 = vmatprep.mubr.bf16.mxu0 0
    %469 = vmatmul.mubr.bf16.gmra.mrb[0].mxu0 %v431
    %v470 = vpop.f32.mrb[0].mxu0
    %v471 = vadd.f32 0.0, %v470
    %v472 = vpop.f32.mrb[0].mxu0
    %v473 = vpop.f32.mrb[0].mxu0
    %v474 = vpop.f32.mrb[0].mxu0
    %475 = vdwg.mxu0
    %v476 = vpack.c.bf16 %v471, %v425
    %v477 = vld [vmem:[%s3] sm:$0xf]
    %s478 = scalar_lea.vmem %s2, 16
    %v479 = vld [vmem:[%s478] sm:$0xf]
    %v480 = vld [vmem:[%s478 + $0x4] sm:$0xf]
    %v481 = vld [vmem:[%s478 + $0x8] sm:$0xf]
    %v482 = vld [vmem:[%s478 + $0xc] sm:$0xf]
    %s483 = scalar_lea.vmem %s2, 80
    %v484 = vld [vmem:[%s483] sm:$0xf]
    %v485 = vld [vmem:[%s483 + $0x4] sm:$0xf]
    %v486 = vld [vmem:[%s483 + $0x8] sm:$0xf]
    %v487 = vld [vmem:[%s483 + $0xc] sm:$0xf]
    %s488 = scalar_lea.vmem %s2, 144
    %v489 = vld [vmem:[%s488] sm:$0xf]
    %v490 = vld [vmem:[%s488 + $0x4] sm:$0xf]
    %v491 = vld [vmem:[%s488 + $0x8] sm:$0xf]
    %v492 = vld [vmem:[%s488 + $0xc] sm:$0xf]
    %s493 = scalar_lea.vmem %s6, 1
    %v494 = vld [vmem:[%s493] sm:$0x1]
    %s495 = scalar_lea.vmem %s6, 5
    %v496 = vld [vmem:[%s495] sm:$0x1]
    %s497 = scalar_lea.vmem %s6, 9
    %v498 = vld [vmem:[%s497] sm:$0x1]
    %v500 = vlaneseq
    %v501 = vshrl.u32 %v500, 7
    %v502 = vsub.s32 0, %v501
    %v503 = vrot.slane %v494, %v502
    %v509 = vunpack.c.l.b16 %v479
    %v510 = vunpack.c.l.b16 %v480
    %v511 = vunpack.c.l.b16 %v481
    %v512 = vunpack.c.l.b16 %v482
    %v513 = vpack.c.b16 %v510, %v509
    %v514 = vpack.c.b16 %v512, %v511
    %517 = vmatprep.subr.bf16.mxu0 0
    %518 = vmatpush1.bf16.msra.mxu0 %v513
    %519 = vmatprep.subr.bf16.mxu0 0
    %520 = vmatpush1.bf16.msra.mxu0 %v514
    %521 = vmatprep.subr.bf16.mxu0 0
    %522 = vmatpush1.bf16.msra.mxu0 0
    %523 = vmatprep.subr.bf16.mxu0 0
    %524 = vmatpush1.bf16.msra.mxu0 0
    %525 = vmatprep.subr.bf16.mxu0 0
    %526 = vmatpush1.bf16.msra.mxu0 0
    %527 = vmatprep.subr.bf16.mxu0 0
    %528 = vmatpush1.bf16.msra.mxu0 0
    %529 = vmatprep.subr.bf16.mxu0 0
    %530 = vmatpush1.bf16.msra.mxu0 0
    %531 = vmatprep.subr.bf16.mxu0 0
    %532 = vmatpush1.bf16.msra.mxu0 0
    %533 = vmatprep.subr.bf16.mxu0 0
    %534 = vmatpush1.bf16.msra.mxu0 0
    %535 = vmatprep.subr.bf16.mxu0 0
    %536 = vmatpush1.bf16.msra.mxu0 0
    %537 = vmatprep.subr.bf16.mxu0 0
    %538 = vmatpush1.bf16.msra.mxu0 0
    %539 = vmatprep.subr.bf16.mxu0 0
    %540 = vmatpush1.bf16.msra.mxu0 0
    %541 = vmatprep.subr.bf16.mxu0 0
    %542 = vmatpush1.bf16.msra.mxu0 0
    %543 = vmatprep.subr.bf16.mxu0 0
    %544 = vmatpush1.bf16.msra.mxu0 0
    %545 = vmatprep.subr.bf16.mxu0 0
    %546 = vmatpush1.bf16.msra.mxu0 0
    %547 = vmatprep.subr.bf16.mxu0 0
    %548 = vmatpush1.bf16.msra.mxu0 0
    %549 = vmatprep.mubr.bf16.mxu0 0
    %550 = vmatmul.mubr.bf16.gmra.mrb[0].mxu0 %v97
    %v551 = vpop.f32.mrb[0].mxu0
    %v552 = vadd.f32 %v503, %v551
    %v553 = vpop.f32.mrb[0].mxu0
    %v554 = vpop.f32.mrb[0].mxu0
    %v555 = vadd.f32 %v503, %v554
    %v556 = vpop.f32.mrb[0].mxu0
    %557 = vdwg.mxu0
    %v558 = vmul.f32 %v552, 0.35355338
    %v559 = vmul.f32 %v555, 0.35355338
    %v561 = vlaneseq
    %v562 = vshrl.u32 %v561, 7
    %v563 = vsub.s32 0, %v562
    %v564 = vrot.slane %v496, %v563
    %v570 = vunpack.c.l.b16 %v484
    %v571 = vunpack.c.l.b16 %v485
    %v572 = vunpack.c.l.b16 %v486
    %v573 = vunpack.c.l.b16 %v487
    %v574 = vpack.c.b16 %v571, %v570
    %v575 = vpack.c.b16 %v573, %v572
    %578 = vmatprep.subr.bf16.mxu0 0
    %579 = vmatpush1.bf16.msra.mxu0 %v574
    %580 = vmatprep.subr.bf16.mxu0 0
    %581 = vmatpush1.bf16.msra.mxu0 %v575
    %582 = vmatprep.subr.bf16.mxu0 0
    %583 = vmatpush1.bf16.msra.mxu0 0
    %584 = vmatprep.subr.bf16.mxu0 0
    %585 = vmatpush1.bf16.msra.mxu0 0
    %586 = vmatprep.subr.bf16.mxu0 0
    %587 = vmatpush1.bf16.msra.mxu0 0
    %588 = vmatprep.subr.bf16.mxu0 0
    %589 = vmatpush1.bf16.msra.mxu0 0
    %590 = vmatprep.subr.bf16.mxu0 0
    %591 = vmatpush1.bf16.msra.mxu0 0
    %592 = vmatprep.subr.bf16.mxu0 0
    %593 = vmatpush1.bf16.msra.mxu0 0
    %594 = vmatprep.subr.bf16.mxu0 0
    %595 = vmatpush1.bf16.msra.mxu0 0
    %596 = vmatprep.subr.bf16.mxu0 0
    %597 = vmatpush1.bf16.msra.mxu0 0
    %598 = vmatprep.subr.bf16.mxu0 0
    %599 = vmatpush1.bf16.msra.mxu0 0
    %600 = vmatprep.subr.bf16.mxu0 0
    %601 = vmatpush1.bf16.msra.mxu0 0
    %602 = vmatprep.subr.bf16.mxu0 0
    %603 = vmatpush1.bf16.msra.mxu0 0
    %604 = vmatprep.subr.bf16.mxu0 0
    %605 = vmatpush1.bf16.msra.mxu0 0
    %606 = vmatprep.subr.bf16.mxu0 0
    %607 = vmatpush1.bf16.msra.mxu0 0
    %608 = vmatprep.subr.bf16.mxu0 0
    %609 = vmatpush1.bf16.msra.mxu0 0
    %610 = vmatprep.mubr.bf16.mxu0 0
    %611 = vmatmul.mubr.bf16.gmra.mrb[0].mxu0 %v97
    %v612 = vpop.f32.mrb[0].mxu0
    %v613 = vadd.f32 %v564, %v612
    %v614 = vpop.f32.mrb[0].mxu0
    %v615 = vpop.f32.mrb[0].mxu0
    %v616 = vadd.f32 %v564, %v615
    %v617 = vpop.f32.mrb[0].mxu0
    %618 = vdwg.mxu0
    %v620 = vlaneseq
    %v621 = vshrl.u32 %v620, 7
    %v622 = vsub.s32 0, %v621
    %v623 = vrot.slane %v498, %v622
    %v629 = vunpack.c.l.b16 %v489
    %v630 = vunpack.c.l.b16 %v490
    %v631 = vunpack.c.l.b16 %v491
    %v632 = vunpack.c.l.b16 %v492
    %v633 = vpack.c.b16 %v630, %v629
    %v634 = vpack.c.b16 %v632, %v631
    %637 = vmatprep.subr.bf16.mxu0 0
    %638 = vmatpush1.bf16.msra.mxu0 %v633
    %639 = vmatprep.subr.bf16.mxu0 0
    %640 = vmatpush1.bf16.msra.mxu0 %v634
    %641 = vmatprep.subr.bf16.mxu0 0
    %642 = vmatpush1.bf16.msra.mxu0 0
    %643 = vmatprep.subr.bf16.mxu0 0
    %644 = vmatpush1.bf16.msra.mxu0 0
    %645 = vmatprep.subr.bf16.mxu0 0
    %646 = vmatpush1.bf16.msra.mxu0 0
    %647 = vmatprep.subr.bf16.mxu0 0
    %648 = vmatpush1.bf16.msra.mxu0 0
    %649 = vmatprep.subr.bf16.mxu0 0
    %650 = vmatpush1.bf16.msra.mxu0 0
    %651 = vmatprep.subr.bf16.mxu0 0
    %652 = vmatpush1.bf16.msra.mxu0 0
    %653 = vmatprep.subr.bf16.mxu0 0
    %654 = vmatpush1.bf16.msra.mxu0 0
    %655 = vmatprep.subr.bf16.mxu0 0
    %656 = vmatpush1.bf16.msra.mxu0 0
    %657 = vmatprep.subr.bf16.mxu0 0
    %658 = vmatpush1.bf16.msra.mxu0 0
    %659 = vmatprep.subr.bf16.mxu0 0
    %660 = vmatpush1.bf16.msra.mxu0 0
    %661 = vmatprep.subr.bf16.mxu0 0
    %662 = vmatpush1.bf16.msra.mxu0 0
    %663 = vmatprep.subr.bf16.mxu0 0
    %664 = vmatpush1.bf16.msra.mxu0 0
    %665 = vmatprep.subr.bf16.mxu0 0
    %666 = vmatpush1.bf16.msra.mxu0 0
    %667 = vmatprep.subr.bf16.mxu0 0
    %668 = vmatpush1.bf16.msra.mxu0 0
    %669 = vmatprep.mubr.bf16.mxu0 0
    %670 = vmatmul.mubr.bf16.gmra.mrb[0].mxu0 %v97
    %v671 = vpop.f32.mrb[0].mxu0
    %v672 = vadd.f32 %v623, %v671
    %v673 = vpop.f32.mrb[0].mxu0
    %v674 = vpop.f32.mrb[0].mxu0
    %v675 = vadd.f32 %v623, %v674
    %v676 = vpop.f32.mrb[0].mxu0
    %677 = vdwg.mxu0
    %v678 = vpack.c.bf16 %v558, %v558
    %v679 = vpack.c.bf16 %v559, %v559
    %v680 = vpack.c.bf16 %v613, %v613
    %v681 = vpack.c.bf16 %v616, %v616
    %v683 = vsel %vm264, %v678, 0
    %v686 = vsel %vm264, %v680, 0
    %688 = vmatprep.subr.bf16.mxu0 0
    %689 = vmatpush1.bf16.xpose.msra.mxu0 %v686
    %690 = vmatprep.subr.bf16.mxu0 0
    %691 = vmatpush1.bf16.xpose.msra.mxu0 0
    %692 = vmatprep.subr.bf16.mxu0 0
    %693 = vmatpush1.bf16.xpose.msra.mxu0 0
    %694 = vmatprep.subr.bf16.mxu0 0
    %695 = vmatpush1.bf16.xpose.msra.mxu0 0
    %696 = vmatprep.subr.bf16.mxu0 0
    %697 = vmatpush1.bf16.xpose.msra.mxu0 0
    %698 = vmatprep.subr.bf16.mxu0 0
    %699 = vmatpush1.bf16.xpose.msra.mxu0 0
    %700 = vmatprep.subr.bf16.mxu0 0
    %701 = vmatpush1.bf16.xpose.msra.mxu0 0
    %702 = vmatprep.subr.bf16.mxu0 0
    %703 = vmatpush1.bf16.xpose.msra.mxu0 0
    %704 = vmatprep.subr.bf16.mxu0 0
    %705 = vmatpush1.bf16.xpose.msra.mxu0 0
    %706 = vmatprep.subr.bf16.mxu0 0
    %707 = vmatpush1.bf16.xpose.msra.mxu0 0
    %708 = vmatprep.subr.bf16.mxu0 0
    %709 = vmatpush1.bf16.xpose.msra.mxu0 0
    %710 = vmatprep.subr.bf16.mxu0 0
    %711 = vmatpush1.bf16.xpose.msra.mxu0 0
    %712 = vmatprep.subr.bf16.mxu0 0
    %713 = vmatpush1.bf16.xpose.msra.mxu0 0
    %714 = vmatprep.subr.bf16.mxu0 0
    %715 = vmatpush1.bf16.xpose.msra.mxu0 0
    %716 = vmatprep.subr.bf16.mxu0 0
    %717 = vmatpush1.bf16.xpose.msra.mxu0 0
    %718 = vmatprep.subr.bf16.mxu0 0
    %719 = vmatpush1.bf16.xpose.msra.mxu0 0
    %720 = vmatprep.mubr.bf16.mxu0 0
    %721 = vmatmul.mubr.bf16.gmra.mrb[0].mxu0 %v683
    %v722 = vpop.f32.mrb[0].mxu0
    %v723 = vadd.f32 %v49, %v722
    %v724 = vpop.f32.mrb[0].mxu0
    %v725 = vpop.f32.mrb[0].mxu0
    %v726 = vpop.f32.mrb[0].mxu0
    %727 = vdwg.mxu0
    %v729 = vsel %vm264, %v679, 0
    %v732 = vsel %vm264, %v681, 0
    %734 = vmatprep.subr.bf16.mxu0 0
    %735 = vmatpush1.bf16.xpose.msra.mxu0 %v732
    %736 = vmatprep.subr.bf16.mxu0 0
    %737 = vmatpush1.bf16.xpose.msra.mxu0 0
    %738 = vmatprep.subr.bf16.mxu0 0
    %739 = vmatpush1.bf16.xpose.msra.mxu0 0
    %740 = vmatprep.subr.bf16.mxu0 0
    %741 = vmatpush1.bf16.xpose.msra.mxu0 0
    %742 = vmatprep.subr.bf16.mxu0 0
    %743 = vmatpush1.bf16.xpose.msra.mxu0 0
    %744 = vmatprep.subr.bf16.mxu0 0
    %745 = vmatpush1.bf16.xpose.msra.mxu0 0
    %746 = vmatprep.subr.bf16.mxu0 0
    %747 = vmatpush1.bf16.xpose.msra.mxu0 0
    %748 = vmatprep.subr.bf16.mxu0 0
    %749 = vmatpush1.bf16.xpose.msra.mxu0 0
    %750 = vmatprep.subr.bf16.mxu0 0
    %751 = vmatpush1.bf16.xpose.msra.mxu0 0
    %752 = vmatprep.subr.bf16.mxu0 0
    %753 = vmatpush1.bf16.xpose.msra.mxu0 0
    %754 = vmatprep.subr.bf16.mxu0 0
    %755 = vmatpush1.bf16.xpose.msra.mxu0 0
    %756 = vmatprep.subr.bf16.mxu0 0
    %757 = vmatpush1.bf16.xpose.msra.mxu0 0
    %758 = vmatprep.subr.bf16.mxu0 0
    %759 = vmatpush1.bf16.xpose.msra.mxu0 0
    %760 = vmatprep.subr.bf16.mxu0 0
    %761 = vmatpush1.bf16.xpose.msra.mxu0 0
    %762 = vmatprep.subr.bf16.mxu0 0
    %763 = vmatpush1.bf16.xpose.msra.mxu0 0
    %764 = vmatprep.subr.bf16.mxu0 0
    %765 = vmatpush1.bf16.xpose.msra.mxu0 0
    %766 = vmatprep.mubr.bf16.mxu0 0
    %767 = vmatmul.mubr.bf16.gmra.mrb[0].mxu0 %v729
    %v768 = vpop.f32.mrb[0].mxu0
    %v769 = vadd.f32 %v53, %v768
    %v770 = vpop.f32.mrb[0].mxu0
    %v771 = vpop.f32.mrb[0].mxu0
    %v772 = vpop.f32.mrb[0].mxu0
    %773 = vdwg.mxu0
    %v774 = vsel %vm264, %v723, -inf
    %775 = vmax.xlane.f32.xlu0 %v774
    %v776 = vpop.xlane.xlu0 %775
    %v777 = vsel %vm264, %v769, -inf
    %778 = vmax.xlane.f32.xlu0 %v777
    %v779 = vpop.xlane.xlu0 %778
    %v780 = vsub.f32 %v723, %v776
    %v781 = vsub.f32 %v769, %v779
    %v782 = vmul.f32 %v780, 1.442695
    %v783 = vpow.pop %v782
    %v784 = vmul.f32 %v781, 1.442695
    %v785 = vpow.pop %v784
    %v786 = vsel %vm264, %v783, 0.0
    %787 = vadd.xlane.f32.xlu0 %v786
    %v788 = vpop.xlane.xlu0 %787
    %v789 = vsel %vm264, %v785, 0.0
    %790 = vadd.xlane.f32.xlu0 %v789
    %v791 = vpop.xlane.xlu0 %790
    %v792 = vrcp.pop %v788
    %v793 = vrcp.pop %v791
    %v794 = vmul.f32 %v783, %v792
    %v795 = vmul.f32 %v785, %v793
    %v796 = vpack.c.bf16 %v794, %v794
    %v797 = vpack.c.bf16 %v795, %v795
    %v798 = vpack.c.bf16 %v672, %v672
    %v799 = vpack.c.bf16 %v675, %v675
    %v801 = vsel %vm264, %v796, 0
    %v804 = vsel %vm386, %v798, 0
    %806 = vmatprep.subr.bf16.mxu0 0
    %807 = vmatpush1.bf16.msra.mxu0 %v804
    %808 = vmatprep.subr.bf16.mxu0 0
    %809 = vmatpush1.bf16.msra.mxu0 0
    %810 = vmatprep.subr.bf16.mxu0 0
    %811 = vmatpush1.bf16.msra.mxu0 0
    %812 = vmatprep.subr.bf16.mxu0 0
    %813 = vmatpush1.bf16.msra.mxu0 0
    %814 = vmatprep.subr.bf16.mxu0 0
    %815 = vmatpush1.bf16.msra.mxu0 0
    %816 = vmatprep.subr.bf16.mxu0 0
    %817 = vmatpush1.bf16.msra.mxu0 0
    %818 = vmatprep.subr.bf16.mxu0 0
    %819 = vmatpush1.bf16.msra.mxu0 0
    %820 = vmatprep.subr.bf16.mxu0 0
    %821 = vmatpush1.bf16.msra.mxu0 0
    %822 = vmatprep.subr.bf16.mxu0 0
    %823 = vmatpush1.bf16.msra.mxu0 0
    %824 = vmatprep.subr.bf16.mxu0 0
    %825 = vmatpush1.bf16.msra.mxu0 0
    %826 = vmatprep.subr.bf16.mxu0 0
    %827 = vmatpush1.bf16.msra.mxu0 0
    %828 = vmatprep.subr.bf16.mxu0 0
    %829 = vmatpush1.bf16.msra.mxu0 0
    %830 = vmatprep.subr.bf16.mxu0 0
    %831 = vmatpush1.bf16.msra.mxu0 0
    %832 = vmatprep.subr.bf16.mxu0 0
    %833 = vmatpush1.bf16.msra.mxu0 0
    %834 = vmatprep.subr.bf16.mxu0 0
    %835 = vmatpush1.bf16.msra.mxu0 0
    %836 = vmatprep.subr.bf16.mxu0 0
    %837 = vmatpush1.bf16.msra.mxu0 0
    %838 = vmatprep.mubr.bf16.mxu0 0
    %839 = vmatmul.mubr.bf16.gmra.mrb[0].mxu0 %v801
    %v840 = vpop.f32.mrb[0].mxu0
    %v841 = vadd.f32 0.0, %v840
    %v842 = vpop.f32.mrb[0].mxu0
    %v843 = vpop.f32.mrb[0].mxu0
    %v844 = vpop.f32.mrb[0].mxu0
    %845 = vdwg.mxu0
    %v847 = vsel %vm264, %v797, 0
    %v850 = vsel %vm386, %v799, 0
    %852 = vmatprep.subr.bf16.mxu0 0
    %853 = vmatpush1.bf16.msra.mxu0 %v850
    %854 = vmatprep.subr.bf16.mxu0 0
    %855 = vmatpush1.bf16.msra.mxu0 0
    %856 = vmatprep.subr.bf16.mxu0 0
    %857 = vmatpush1.bf16.msra.mxu0 0
    %858 = vmatprep.subr.bf16.mxu0 0
    %859 = vmatpush1.bf16.msra.mxu0 0
    %860 = vmatprep.subr.bf16.mxu0 0
    %861 = vmatpush1.bf16.msra.mxu0 0
    %862 = vmatprep.subr.bf16.mxu0 0
    %863 = vmatpush1.bf16.msra.mxu0 0
    %864 = vmatprep.subr.bf16.mxu0 0
    %865 = vmatpush1.bf16.msra.mxu0 0
    %866 = vmatprep.subr.bf16.mxu0 0
    %867 = vmatpush1.bf16.msra.mxu0 0
    %868 = vmatprep.subr.bf16.mxu0 0
    %869 = vmatpush1.bf16.msra.mxu0 0
    %870 = vmatprep.subr.bf16.mxu0 0
    %871 = vmatpush1.bf16.msra.mxu0 0
    %872 = vmatprep.subr.bf16.mxu0 0
    %873 = vmatpush1.bf16.msra.mxu0 0
    %874 = vmatprep.subr.bf16.mxu0 0
    %875 = vmatpush1.bf16.msra.mxu0 0
    %876 = vmatprep.subr.bf16.mxu0 0
    %877 = vmatpush1.bf16.msra.mxu0 0
    %878 = vmatprep.subr.bf16.mxu0 0
    %879 = vmatpush1.bf16.msra.mxu0 0
    %880 = vmatprep.subr.bf16.mxu0 0
    %881 = vmatpush1.bf16.msra.mxu0 0
    %882 = vmatprep.subr.bf16.mxu0 0
    %883 = vmatpush1.bf16.msra.mxu0 0
    %884 = vmatprep.mubr.bf16.mxu0 0
    %885 = vmatmul.mubr.bf16.gmra.mrb[0].mxu0 %v847
    %v886 = vpop.f32.mrb[0].mxu0
    %v887 = vadd.f32 0.0, %v886
    %v888 = vpop.f32.mrb[0].mxu0
    %v889 = vpop.f32.mrb[0].mxu0
    %v890 = vpop.f32.mrb[0].mxu0
    %891 = vdwg.mxu0
    %v892 = vpack.c.bf16 %v887, %v841
    %s893 = scalar_lea.vmem %s3, 4
    %v894 = vld [vmem:[%s893] sm:$0xf]
    %v896 = vsel %vm264, %v892, 0
    %v899 = vsel %vm386, %v894, 0
    %901 = vmatprep.subr.bf16.mxu0 0
    %902 = vmatpush1.bf16.msra.mxu0 %v899
    %903 = vmatprep.subr.bf16.mxu0 0
    %904 = vmatpush1.bf16.msra.mxu0 0
    %905 = vmatprep.subr.bf16.mxu0 0
    %906 = vmatpush1.bf16.msra.mxu0 0
    %907 = vmatprep.subr.bf16.mxu0 0
    %908 = vmatpush1.bf16.msra.mxu0 0
    %909 = vmatprep.subr.bf16.mxu0 0
    %910 = vmatpush1.bf16.msra.mxu0 0
    %911 = vmatprep.subr.bf16.mxu0 0
    %912 = vmatpush1.bf16.msra.mxu0 0
    %913 = vmatprep.subr.bf16.mxu0 0
    %914 = vmatpush1.bf16.msra.mxu0 0
    %915 = vmatprep.subr.bf16.mxu0 0
    %916 = vmatpush1.bf16.msra.mxu0 0
    %917 = vmatprep.subr.bf16.mxu0 0
    %918 = vmatpush1.bf16.msra.mxu0 0
    %919 = vmatprep.subr.bf16.mxu0 0
    %920 = vmatpush1.bf16.msra.mxu0 0
    %921 = vmatprep.subr.bf16.mxu0 0
    %922 = vmatpush1.bf16.msra.mxu0 0
    %923 = vmatprep.subr.bf16.mxu0 0
    %924 = vmatpush1.bf16.msra.mxu0 0
    %925 = vmatprep.subr.bf16.mxu0 0
    %926 = vmatpush1.bf16.msra.mxu0 0
    %927 = vmatprep.subr.bf16.mxu0 0
    %928 = vmatpush1.bf16.msra.mxu0 0
    %929 = vmatprep.subr.bf16.mxu0 0
    %930 = vmatpush1.bf16.msra.mxu0 0
    %931 = vmatprep.subr.bf16.mxu0 0
    %932 = vmatpush1.bf16.msra.mxu0 0
    %933 = vmatprep.mubr.bf16.mxu0 0
    %934 = vmatmul.mubr.bf16.gmra.mrb[0].mxu0 %v896
    %v935 = vpop.f32.mrb[0].mxu0
    %v936 = vadd.f32 0.0, %v935
    %v937 = vpop.f32.mrb[0].mxu0
    %v938 = vpop.f32.mrb[0].mxu0
    %v939 = vadd.f32 0.0, %v938
    %v940 = vpop.f32.mrb[0].mxu0
    %941 = vdwg.mxu0
    %v943 = vsel %vm264, %v476, 0
    %v946 = vsel %vm386, %v477, 0
    %948 = vmatprep.subr.bf16.mxu0 0
    %949 = vmatpush1.bf16.msra.mxu0 %v946
    %950 = vmatprep.subr.bf16.mxu0 0
    %951 = vmatpush1.bf16.msra.mxu0 0
    %952 = vmatprep.subr.bf16.mxu0 0
    %953 = vmatpush1.bf16.msra.mxu0 0
    %954 = vmatprep.subr.bf16.mxu0 0
    %955 = vmatpush1.bf16.msra.mxu0 0
    %956 = vmatprep.subr.bf16.mxu0 0
    %957 = vmatpush1.bf16.msra.mxu0 0
    %958 = vmatprep.subr.bf16.mxu0 0
    %959 = vmatpush1.bf16.msra.mxu0 0
    %960 = vmatprep.subr.bf16.mxu0 0
    %961 = vmatpush1.bf16.msra.mxu0 0
    %962 = vmatprep.subr.bf16.mxu0 0
    %963 = vmatpush1.bf16.msra.mxu0 0
    %964 = vmatprep.subr.bf16.mxu0 0
    %965 = vmatpush1.bf16.msra.mxu0 0
    %966 = vmatprep.subr.bf16.mxu0 0
    %967 = vmatpush1.bf16.msra.mxu0 0
    %968 = vmatprep.subr.bf16.mxu0 0
    %969 = vmatpush1.bf16.msra.mxu0 0
    %970 = vmatprep.subr.bf16.mxu0 0
    %971 = vmatpush1.bf16.msra.mxu0 0
    %972 = vmatprep.subr.bf16.mxu0 0
    %973 = vmatpush1.bf16.msra.mxu0 0
    %974 = vmatprep.subr.bf16.mxu0 0
    %975 = vmatpush1.bf16.msra.mxu0 0
    %976 = vmatprep.subr.bf16.mxu0 0
    %977 = vmatpush1.bf16.msra.mxu0 0
    %978 = vmatprep.subr.bf16.mxu0 0
    %979 = vmatpush1.bf16.msra.mxu0 0
    %980 = vmatprep.mubr.bf16.mxu0 0
    %981 = vmatmul.mubr.bf16.gmra.mrb[0].mxu0 %v943
    %v982 = vpop.f32.mrb[0].mxu0
    %v983 = vadd.f32 %v936, %v982
    %v984 = vpop.f32.mrb[0].mxu0
    %v985 = vpop.f32.mrb[0].mxu0
    %v986 = vadd.f32 %v939, %v985
    %v987 = vpop.f32.mrb[0].mxu0
    %988 = vdwg.mxu0
    %s989 = scalar_lea.vmem %s2, 32
    %v990 = vld [vmem:[%s989] sm:$0xf]
    %v991 = vld [vmem:[%s989 + $0x4] sm:$0xf]
    %v992 = vld [vmem:[%s989 + $0x8] sm:$0xf]
    %v993 = vld [vmem:[%s989 + $0xc] sm:$0xf]
    %s994 = scalar_lea.vmem %s2, 96
    %v995 = vld [vmem:[%s994] sm:$0xf]
    %v996 = vld [vmem:[%s994 + $0x4] sm:$0xf]
    %v997 = vld [vmem:[%s994 + $0x8] sm:$0xf]
    %v998 = vld [vmem:[%s994 + $0xc] sm:$0xf]
    %s999 = scalar_lea.vmem %s2, 160
    %v1000 = vld [vmem:[%s999] sm:$0xf]
    %v1001 = vld [vmem:[%s999 + $0x4] sm:$0xf]
    %v1002 = vld [vmem:[%s999 + $0x8] sm:$0xf]
    %v1003 = vld [vmem:[%s999 + $0xc] sm:$0xf]
    %s1004 = scalar_lea.vmem %s6, 2
    %v1005 = vld [vmem:[%s1004] sm:$0x1]
    %s1006 = scalar_lea.vmem %s6, 6
    %v1007 = vld [vmem:[%s1006] sm:$0x1]
    %s1008 = scalar_lea.vmem %s6, 10
    %v1009 = vld [vmem:[%s1008] sm:$0x1]
    %v1011 = vlaneseq
    %v1012 = vshrl.u32 %v1011, 7
    %v1013 = vsub.s32 0, %v1012
    %v1014 = vrot.slane %v1005, %v1013
    %v1020 = vunpack.c.l.b16 %v990
    %v1021 = vunpack.c.l.b16 %v991
    %v1022 = vunpack.c.l.b16 %v992
    %v1023 = vunpack.c.l.b16 %v993
    %v1024 = vpack.c.b16 %v1021, %v1020
    %v1025 = vpack.c.b16 %v1023, %v1022
    %1028 = vmatprep.subr.bf16.mxu0 0
    %1029 = vmatpush1.bf16.msra.mxu0 %v1024
    %1030 = vmatprep.subr.bf16.mxu0 0
    %1031 = vmatpush1.bf16.msra.mxu0 %v1025
    %1032 = vmatprep.subr.bf16.mxu0 0
    %1033 = vmatpush1.bf16.msra.mxu0 0
    %1034 = vmatprep.subr.bf16.mxu0 0
    %1035 = vmatpush1.bf16.msra.mxu0 0
    %1036 = vmatprep.subr.bf16.mxu0 0
    %1037 = vmatpush1.bf16.msra.mxu0 0
    %1038 = vmatprep.subr.bf16.mxu0 0
    %1039 = vmatpush1.bf16.msra.mxu0 0
    %1040 = vmatprep.subr.bf16.mxu0 0
    %1041 = vmatpush1.bf16.msra.mxu0 0
    %1042 = vmatprep.subr.bf16.mxu0 0
    %1043 = vmatpush1.bf16.msra.mxu0 0
    %1044 = vmatprep.subr.bf16.mxu0 0
    %1045 = vmatpush1.bf16.msra.mxu0 0
    %1046 = vmatprep.subr.bf16.mxu0 0
    %1047 = vmatpush1.bf16.msra.mxu0 0
    %1048 = vmatprep.subr.bf16.mxu0 0
    %1049 = vmatpush1.bf16.msra.mxu0 0
    %1050 = vmatprep.subr.bf16.mxu0 0
    %1051 = vmatpush1.bf16.msra.mxu0 0
    %1052 = vmatprep.subr.bf16.mxu0 0
    %1053 = vmatpush1.bf16.msra.mxu0 0
    %1054 = vmatprep.subr.bf16.mxu0 0
    %1055 = vmatpush1.bf16.msra.mxu0 0
    %1056 = vmatprep.subr.bf16.mxu0 0
    %1057 = vmatpush1.bf16.msra.mxu0 0
    %1058 = vmatprep.subr.bf16.mxu0 0
    %1059 = vmatpush1.bf16.msra.mxu0 0
    %1060 = vmatprep.mubr.bf16.mxu0 0
    %1061 = vmatmul.mubr.bf16.gmra.mrb[0].mxu0 %v97
    %v1062 = vpop.f32.mrb[0].mxu0
    %v1063 = vadd.f32 %v1014, %v1062
    %v1064 = vpop.f32.mrb[0].mxu0
    %v1065 = vpop.f32.mrb[0].mxu0
    %v1066 = vadd.f32 %v1014, %v1065
    %v1067 = vpop.f32.mrb[0].mxu0
    %1068 = vdwg.mxu0
    %v1069 = vmul.f32 %v1063, 0.35355338
    %v1070 = vmul.f32 %v1066, 0.35355338
    %v1072 = vlaneseq
    %v1073 = vshrl.u32 %v1072, 7
    %v1074 = vsub.s32 0, %v1073
    %v1075 = vrot.slane %v1007, %v1074
    %v1081 = vunpack.c.l.b16 %v995
    %v1082 = vunpack.c.l.b16 %v996
    %v1083 = vunpack.c.l.b16 %v997
    %v1084 = vunpack.c.l.b16 %v998
    %v1085 = vpack.c.b16 %v1082, %v1081
    %v1086 = vpack.c.b16 %v1084, %v1083
    %1089 = vmatprep.subr.bf16.mxu0 0
    %1090 = vmatpush1.bf16.msra.mxu0 %v1085
    %1091 = vmatprep.subr.bf16.mxu0 0
    %1092 = vmatpush1.bf16.msra.mxu0 %v1086
    %1093 = vmatprep.subr.bf16.mxu0 0
    %1094 = vmatpush1.bf16.msra.mxu0 0
    %1095 = vmatprep.subr.bf16.mxu0 0
    %1096 = vmatpush1.bf16.msra.mxu0 0
    %1097 = vmatprep.subr.bf16.mxu0 0
    %1098 = vmatpush1.bf16.msra.mxu0 0
    %1099 = vmatprep.subr.bf16.mxu0 0
    %1100 = vmatpush1.bf16.msra.mxu0 0
    %1101 = vmatprep.subr.bf16.mxu0 0
    %1102 = vmatpush1.bf16.msra.mxu0 0
    %1103 = vmatprep.subr.bf16.mxu0 0
    %1104 = vmatpush1.bf16.msra.mxu0 0
    %1105 = vmatprep.subr.bf16.mxu0 0
    %1106 = vmatpush1.bf16.msra.mxu0 0
    %1107 = vmatprep.subr.bf16.mxu0 0
    %1108 = vmatpush1.bf16.msra.mxu0 0
    %1109 = vmatprep.subr.bf16.mxu0 0
    %1110 = vmatpush1.bf16.msra.mxu0 0
    %1111 = vmatprep.subr.bf16.mxu0 0
    %1112 = vmatpush1.bf16.msra.mxu0 0
    %1113 = vmatprep.subr.bf16.mxu0 0
    %1114 = vmatpush1.bf16.msra.mxu0 0
    %1115 = vmatprep.subr.bf16.mxu0 0
    %1116 = vmatpush1.bf16.msra.mxu0 0
    %1117 = vmatprep.subr.bf16.mxu0 0
    %1118 = vmatpush1.bf16.msra.mxu0 0
    %1119 = vmatprep.subr.bf16.mxu0 0
    %1120 = vmatpush1.bf16.msra.mxu0 0
    %1121 = vmatprep.mubr.bf16.mxu0 0
    %1122 = vmatmul.mubr.bf16.gmra.mrb[0].mxu0 %v97
    %v1123 = vpop.f32.mrb[0].mxu0
    %v1124 = vadd.f32 %v1075, %v1123
    %v1125 = vpop.f32.mrb[0].mxu0
    %v1126 = vpop.f32.mrb[0].mxu0
    %v1127 = vadd.f32 %v1075, %v1126
    %v1128 = vpop.f32.mrb[0].mxu0
    %1129 = vdwg.mxu0
    %v1131 = vlaneseq
    %v1132 = vshrl.u32 %v1131, 7
    %v1133 = vsub.s32 0, %v1132
    %v1134 = vrot.slane %v1009, %v1133
    %v1140 = vunpack.c.l.b16 %v1000
    %v1141 = vunpack.c.l.b16 %v1001
    %v1142 = vunpack.c.l.b16 %v1002
    %v1143 = vunpack.c.l.b16 %v1003
    %v1144 = vpack.c.b16 %v1141, %v1140
    %v1145 = vpack.c.b16 %v1143, %v1142
    %1148 = vmatprep.subr.bf16.mxu0 0
    %1149 = vmatpush1.bf16.msra.mxu0 %v1144
    %1150 = vmatprep.subr.bf16.mxu0 0
    %1151 = vmatpush1.bf16.msra.mxu0 %v1145
    %1152 = vmatprep.subr.bf16.mxu0 0
    %1153 = vmatpush1.bf16.msra.mxu0 0
    %1154 = vmatprep.subr.bf16.mxu0 0
    %1155 = vmatpush1.bf16.msra.mxu0 0
    %1156 = vmatprep.subr.bf16.mxu0 0
    %1157 = vmatpush1.bf16.msra.mxu0 0
    %1158 = vmatprep.subr.bf16.mxu0 0
    %1159 = vmatpush1.bf16.msra.mxu0 0
    %1160 = vmatprep.subr.bf16.mxu0 0
    %1161 = vmatpush1.bf16.msra.mxu0 0
    %1162 = vmatprep.subr.bf16.mxu0 0
    %1163 = vmatpush1.bf16.msra.mxu0 0
    %1164 = vmatprep.subr.bf16.mxu0 0
    %1165 = vmatpush1.bf16.msra.mxu0 0
    %1166 = vmatprep.subr.bf16.mxu0 0
    %1167 = vmatpush1.bf16.msra.mxu0 0
    %1168 = vmatprep.subr.bf16.mxu0 0
    %1169 = vmatpush1.bf16.msra.mxu0 0
    %1170 = vmatprep.subr.bf16.mxu0 0
    %1171 = vmatpush1.bf16.msra.mxu0 0
    %1172 = vmatprep.subr.bf16.mxu0 0
    %1173 = vmatpush1.bf16.msra.mxu0 0
    %1174 = vmatprep.subr.bf16.mxu0 0
    %1175 = vmatpush1.bf16.msra.mxu0 0
    %1176 = vmatprep.subr.bf16.mxu0 0
    %1177 = vmatpush1.bf16.msra.mxu0 0
    %1178 = vmatprep.subr.bf16.mxu0 0
    %1179 = vmatpush1.bf16.msra.mxu0 0
    %1180 = vmatprep.mubr.bf16.mxu0 0
    %1181 = vmatmul.mubr.bf16.gmra.mrb[0].mxu0 %v97
    %v1182 = vpop.f32.mrb[0].mxu0
    %v1183 = vadd.f32 %v1134, %v1182
    %v1184 = vpop.f32.mrb[0].mxu0
    %v1185 = vpop.f32.mrb[0].mxu0
    %v1186 = vadd.f32 %v1134, %v1185
    %v1187 = vpop.f32.mrb[0].mxu0
    %1188 = vdwg.mxu0
    %v1189 = vpack.c.bf16 %v1069, %v1069
    %v1190 = vpack.c.bf16 %v1070, %v1070
    %v1191 = vpack.c.bf16 %v1124, %v1124
    %v1192 = vpack.c.bf16 %v1127, %v1127
    %v1194 = vsel %vm264, %v1189, 0
    %v1197 = vsel %vm264, %v1191, 0
    %1199 = vmatprep.subr.bf16.mxu0 0
    %1200 = vmatpush1.bf16.xpose.msra.mxu0 %v1197
    %1201 = vmatprep.subr.bf16.mxu0 0
    %1202 = vmatpush1.bf16.xpose.msra.mxu0 0
    %1203 = vmatprep.subr.bf16.mxu0 0
    %1204 = vmatpush1.bf16.xpose.msra.mxu0 0
    %1205 = vmatprep.subr.bf16.mxu0 0
    %1206 = vmatpush1.bf16.xpose.msra.mxu0 0
    %1207 = vmatprep.subr.bf16.mxu0 0
    %1208 = vmatpush1.bf16.xpose.msra.mxu0 0
    %1209 = vmatprep.subr.bf16.mxu0 0
    %1210 = vmatpush1.bf16.xpose.msra.mxu0 0
    %1211 = vmatprep.subr.bf16.mxu0 0
    %1212 = vmatpush1.bf16.xpose.msra.mxu0 0
    %1213 = vmatprep.subr.bf16.mxu0 0
    %1214 = vmatpush1.bf16.xpose.msra.mxu0 0
    %1215 = vmatprep.subr.bf16.mxu0 0
    %1216 = vmatpush1.bf16.xpose.msra.mxu0 0
    %1217 = vmatprep.subr.bf16.mxu0 0
    %1218 = vmatpush1.bf16.xpose.msra.mxu0 0
    %1219 = vmatprep.subr.bf16.mxu0 0
    %1220 = vmatpush1.bf16.xpose.msra.mxu0 0
    %1221 = vmatprep.subr.bf16.mxu0 0
    %1222 = vmatpush1.bf16.xpose.msra.mxu0 0
    %1223 = vmatprep.subr.bf16.mxu0 0
    %1224 = vmatpush1.bf16.xpose.msra.mxu0 0
    %1225 = vmatprep.subr.bf16.mxu0 0
    %1226 = vmatpush1.bf16.xpose.msra.mxu0 0
    %1227 = vmatprep.subr.bf16.mxu0 0
    %1228 = vmatpush1.bf16.xpose.msra.mxu0 0
    %1229 = vmatprep.subr.bf16.mxu0 0
    %1230 = vmatpush1.bf16.xpose.msra.mxu0 0
    %1231 = vmatprep.mubr.bf16.mxu0 0
    %1232 = vmatmul.mubr.bf16.gmra.mrb[0].mxu0 %v1194
    %v1233 = vpop.f32.mrb[0].mxu0
    %v1234 = vadd.f32 %v49, %v1233
    %v1235 = vpop.f32.mrb[0].mxu0
    %v1236 = vpop.f32.mrb[0].mxu0
    %v1237 = vpop.f32.mrb[0].mxu0
    %1238 = vdwg.mxu0
    %v1240 = vsel %vm264, %v1190, 0
    %v1243 = vsel %vm264, %v1192, 0
    %1245 = vmatprep.subr.bf16.mxu0 0
    %1246 = vmatpush1.bf16.xpose.msra.mxu0 %v1243
    %1247 = vmatprep.subr.bf16.mxu0 0
    %1248 = vmatpush1.bf16.xpose.msra.mxu0 0
    %1249 = vmatprep.subr.bf16.mxu0 0
    %1250 = vmatpush1.bf16.xpose.msra.mxu0 0
    %1251 = vmatprep.subr.bf16.mxu0 0
    %1252 = vmatpush1.bf16.xpose.msra.mxu0 0
    %1253 = vmatprep.subr.bf16.mxu0 0
    %1254 = vmatpush1.bf16.xpose.msra.mxu0 0
    %1255 = vmatprep.subr.bf16.mxu0 0
    %1256 = vmatpush1.bf16.xpose.msra.mxu0 0
    %1257 = vmatprep.subr.bf16.mxu0 0
    %1258 = vmatpush1.bf16.xpose.msra.mxu0 0
    %1259 = vmatprep.subr.bf16.mxu0 0
    %1260 = vmatpush1.bf16.xpose.msra.mxu0 0
    %1261 = vmatprep.subr.bf16.mxu0 0
    %1262 = vmatpush1.bf16.xpose.msra.mxu0 0
    %1263 = vmatprep.subr.bf16.mxu0 0
    %1264 = vmatpush1.bf16.xpose.msra.mxu0 0
    %1265 = vmatprep.subr.bf16.mxu0 0
    %1266 = vmatpush1.bf16.xpose.msra.mxu0 0
    %1267 = vmatprep.subr.bf16.mxu0 0
    %1268 = vmatpush1.bf16.xpose.msra.mxu0 0
    %1269 = vmatprep.subr.bf16.mxu0 0
    %1270 = vmatpush1.bf16.xpose.msra.mxu0 0
    %1271 = vmatprep.subr.bf16.mxu0 0
    %1272 = vmatpush1.bf16.xpose.msra.mxu0 0
    %1273 = vmatprep.subr.bf16.mxu0 0
    %1274 = vmatpush1.bf16.xpose.msra.mxu0 0
    %1275 = vmatprep.subr.bf16.mxu0 0
    %1276 = vmatpush1.bf16.xpose.msra.mxu0 0
    %1277 = vmatprep.mubr.bf16.mxu0 0
    %1278 = vmatmul.mubr.bf16.gmra.mrb[0].mxu0 %v1240
    %v1279 = vpop.f32.mrb[0].mxu0
    %v1280 = vadd.f32 %v53, %v1279
    %v1281 = vpop.f32.mrb[0].mxu0
    %v1282 = vpop.f32.mrb[0].mxu0
    %v1283 = vpop.f32.mrb[0].mxu0
    %1284 = vdwg.mxu0
    %v1285 = vsel %vm264, %v1234, -inf
    %1286 = vmax.xlane.f32.xlu0 %v1285
    %v1287 = vpop.xlane.xlu0 %1286
    %v1288 = vsel %vm264, %v1280, -inf
    %1289 = vmax.xlane.f32.xlu0 %v1288
    %v1290 = vpop.xlane.xlu0 %1289
    %v1291 = vsub.f32 %v1234, %v1287
    %v1292 = vsub.f32 %v1280, %v1290
    %v1293 = vmul.f32 %v1291, 1.442695
    %v1294 = vpow.pop %v1293
    %v1295 = vmul.f32 %v1292, 1.442695
    %v1296 = vpow.pop %v1295
    %v1297 = vsel %vm264, %v1294, 0.0
    %1298 = vadd.xlane.f32.xlu0 %v1297
    %v1299 = vpop.xlane.xlu0 %1298
    %v1300 = vsel %vm264, %v1296, 0.0
    %1301 = vadd.xlane.f32.xlu0 %v1300
    %v1302 = vpop.xlane.xlu0 %1301
    %v1303 = vrcp.pop %v1299
    %v1304 = vrcp.pop %v1302
    %v1305 = vmul.f32 %v1294, %v1303
    %v1306 = vmul.f32 %v1296, %v1304
    %v1307 = vpack.c.bf16 %v1305, %v1305
    %v1308 = vpack.c.bf16 %v1306, %v1306
    %v1309 = vpack.c.bf16 %v1183, %v1183
    %v1310 = vpack.c.bf16 %v1186, %v1186
    %v1312 = vsel %vm264, %v1307, 0
    %v1315 = vsel %vm386, %v1309, 0
    %1317 = vmatprep.subr.bf16.mxu0 0
    %1318 = vmatpush1.bf16.msra.mxu0 %v1315
    %1319 = vmatprep.subr.bf16.mxu0 0
    %1320 = vmatpush1.bf16.msra.mxu0 0
    %1321 = vmatprep.subr.bf16.mxu0 0
    %1322 = vmatpush1.bf16.msra.mxu0 0
    %1323 = vmatprep.subr.bf16.mxu0 0
    %1324 = vmatpush1.bf16.msra.mxu0 0
    %1325 = vmatprep.subr.bf16.mxu0 0
    %1326 = vmatpush1.bf16.msra.mxu0 0
    %1327 = vmatprep.subr.bf16.mxu0 0
    %1328 = vmatpush1.bf16.msra.mxu0 0
    %1329 = vmatprep.subr.bf16.mxu0 0
    %1330 = vmatpush1.bf16.msra.mxu0 0
    %1331 = vmatprep.subr.bf16.mxu0 0
    %1332 = vmatpush1.bf16.msra.mxu0 0
    %1333 = vmatprep.subr.bf16.mxu0 0
    %1334 = vmatpush1.bf16.msra.mxu0 0
    %1335 = vmatprep.subr.bf16.mxu0 0
    %1336 = vmatpush1.bf16.msra.mxu0 0
    %1337 = vmatprep.subr.bf16.mxu0 0
    %1338 = vmatpush1.bf16.msra.mxu0 0
    %1339 = vmatprep.subr.bf16.mxu0 0
    %1340 = vmatpush1.bf16.msra.mxu0 0
    %1341 = vmatprep.subr.bf16.mxu0 0
    %1342 = vmatpush1.bf16.msra.mxu0 0
    %1343 = vmatprep.subr.bf16.mxu0 0
    %1344 = vmatpush1.bf16.msra.mxu0 0
    %1345 = vmatprep.subr.bf16.mxu0 0
    %1346 = vmatpush1.bf16.msra.mxu0 0
    %1347 = vmatprep.subr.bf16.mxu0 0
    %1348 = vmatpush1.bf16.msra.mxu0 0
    %1349 = vmatprep.mubr.bf16.mxu0 0
    %1350 = vmatmul.mubr.bf16.gmra.mrb[0].mxu0 %v1312
    %v1351 = vpop.f32.mrb[0].mxu0
    %v1352 = vadd.f32 0.0, %v1351
    %v1353 = vpop.f32.mrb[0].mxu0
    %v1354 = vpop.f32.mrb[0].mxu0
    %v1355 = vpop.f32.mrb[0].mxu0
    %1356 = vdwg.mxu0
    %v1358 = vsel %vm264, %v1308, 0
    %v1361 = vsel %vm386, %v1310, 0
    %1363 = vmatprep.subr.bf16.mxu0 0
    %1364 = vmatpush1.bf16.msra.mxu0 %v1361
    %1365 = vmatprep.subr.bf16.mxu0 0
    %1366 = vmatpush1.bf16.msra.mxu0 0
    %1367 = vmatprep.subr.bf16.mxu0 0
    %1368 = vmatpush1.bf16.msra.mxu0 0
    %1369 = vmatprep.subr.bf16.mxu0 0
    %1370 = vmatpush1.bf16.msra.mxu0 0
    %1371 = vmatprep.subr.bf16.mxu0 0
    %1372 = vmatpush1.bf16.msra.mxu0 0
    %1373 = vmatprep.subr.bf16.mxu0 0
    %1374 = vmatpush1.bf16.msra.mxu0 0
    %1375 = vmatprep.subr.bf16.mxu0 0
    %1376 = vmatpush1.bf16.msra.mxu0 0
    %1377 = vmatprep.subr.bf16.mxu0 0
    %1378 = vmatpush1.bf16.msra.mxu0 0
    %1379 = vmatprep.subr.bf16.mxu0 0
    %1380 = vmatpush1.bf16.msra.mxu0 0
    %1381 = vmatprep.subr.bf16.mxu0 0
    %1382 = vmatpush1.bf16.msra.mxu0 0
    %1383 = vmatprep.subr.bf16.mxu0 0
    %1384 = vmatpush1.bf16.msra.mxu0 0
    %1385 = vmatprep.subr.bf16.mxu0 0
    %1386 = vmatpush1.bf16.msra.mxu0 0
    %1387 = vmatprep.subr.bf16.mxu0 0
    %1388 = vmatpush1.bf16.msra.mxu0 0
    %1389 = vmatprep.subr.bf16.mxu0 0
    %1390 = vmatpush1.bf16.msra.mxu0 0
    %1391 = vmatprep.subr.bf16.mxu0 0
    %1392 = vmatpush1.bf16.msra.mxu0 0
    %1393 = vmatprep.subr.bf16.mxu0 0
    %1394 = vmatpush1.bf16.msra.mxu0 0
    %1395 = vmatprep.mubr.bf16.mxu0 0
    %1396 = vmatmul.mubr.bf16.gmra.mrb[0].mxu0 %v1358
    %v1397 = vpop.f32.mrb[0].mxu0
    %v1398 = vadd.f32 0.0, %v1397
    %v1399 = vpop.f32.mrb[0].mxu0
    %v1400 = vpop.f32.mrb[0].mxu0
    %v1401 = vpop.f32.mrb[0].mxu0
    %1402 = vdwg.mxu0
    %v1403 = vpack.c.bf16 %v1398, %v1352
    %s1404 = scalar_lea.vmem %s3, 8
    %v1405 = vld [vmem:[%s1404] sm:$0xf]
    %v1407 = vsel %vm264, %v1403, 0
    %v1410 = vsel %vm386, %v1405, 0
    %1412 = vmatprep.subr.bf16.mxu0 0
    %1413 = vmatpush1.bf16.msra.mxu0 %v1410
    %1414 = vmatprep.subr.bf16.mxu0 0
    %1415 = vmatpush1.bf16.msra.mxu0 0
    %1416 = vmatprep.subr.bf16.mxu0 0
    %1417 = vmatpush1.bf16.msra.mxu0 0
    %1418 = vmatprep.subr.bf16.mxu0 0
    %1419 = vmatpush1.bf16.msra.mxu0 0
    %1420 = vmatprep.subr.bf16.mxu0 0
    %1421 = vmatpush1.bf16.msra.mxu0 0
    %1422 = vmatprep.subr.bf16.mxu0 0
    %1423 = vmatpush1.bf16.msra.mxu0 0
    %1424 = vmatprep.subr.bf16.mxu0 0
    %1425 = vmatpush1.bf16.msra.mxu0 0
    %1426 = vmatprep.subr.bf16.mxu0 0
    %1427 = vmatpush1.bf16.msra.mxu0 0
    %1428 = vmatprep.subr.bf16.mxu0 0
    %1429 = vmatpush1.bf16.msra.mxu0 0
    %1430 = vmatprep.subr.bf16.mxu0 0
    %1431 = vmatpush1.bf16.msra.mxu0 0
    %1432 = vmatprep.subr.bf16.mxu0 0
    %1433 = vmatpush1.bf16.msra.mxu0 0
    %1434 = vmatprep.subr.bf16.mxu0 0
    %1435 = vmatpush1.bf16.msra.mxu0 0
    %1436 = vmatprep.subr.bf16.mxu0 0
    %1437 = vmatpush1.bf16.msra.mxu0 0
    %1438 = vmatprep.subr.bf16.mxu0 0
    %1439 = vmatpush1.bf16.msra.mxu0 0
    %1440 = vmatprep.subr.bf16.mxu0 0
    %1441 = vmatpush1.bf16.msra.mxu0 0
    %1442 = vmatprep.subr.bf16.mxu0 0
    %1443 = vmatpush1.bf16.msra.mxu0 0
    %1444 = vmatprep.mubr.bf16.mxu0 0
    %1445 = vmatmul.mubr.bf16.gmra.mrb[0].mxu0 %v1407
    %v1446 = vpop.f32.mrb[0].mxu0
    %v1447 = vadd.f32 0.0, %v1446
    %v1448 = vpop.f32.mrb[0].mxu0
    %v1449 = vpop.f32.mrb[0].mxu0
    %v1450 = vadd.f32 0.0, %v1449
    %v1451 = vpop.f32.mrb[0].mxu0
    %1452 = vdwg.mxu0
    %v1453 = vadd.f32 %v983, %v1447
    %v1454 = vadd.f32 %v986, %v1450
    %s1455 = scalar_lea.vmem %s2, 48
    %v1456 = vld [vmem:[%s1455] sm:$0xf]
    %v1457 = vld [vmem:[%s1455 + $0x4] sm:$0xf]
    %v1458 = vld [vmem:[%s1455 + $0x8] sm:$0xf]
    %v1459 = vld [vmem:[%s1455 + $0xc] sm:$0xf]
    %s1460 = scalar_lea.vmem %s2, 112
    %v1461 = vld [vmem:[%s1460] sm:$0xf]
    %v1462 = vld [vmem:[%s1460 + $0x4] sm:$0xf]
    %v1463 = vld [vmem:[%s1460 + $0x8] sm:$0xf]
    %v1464 = vld [vmem:[%s1460 + $0xc] sm:$0xf]
    %s1465 = scalar_lea.vmem %s2, 176
    %v1466 = vld [vmem:[%s1465] sm:$0xf]
    %v1467 = vld [vmem:[%s1465 + $0x4] sm:$0xf]
    %v1468 = vld [vmem:[%s1465 + $0x8] sm:$0xf]
    %v1469 = vld [vmem:[%s1465 + $0xc] sm:$0xf]
    %s1470 = scalar_lea.vmem %s6, 3
    %v1471 = vld [vmem:[%s1470] sm:$0x1]
    %s1472 = scalar_lea.vmem %s6, 7
    %v1473 = vld [vmem:[%s1472] sm:$0x1]
    %s1474 = scalar_lea.vmem %s6, 11
    %v1475 = vld [vmem:[%s1474] sm:$0x1]
    %v1477 = vlaneseq
    %v1478 = vshrl.u32 %v1477, 7
    %v1479 = vsub.s32 0, %v1478
    %v1480 = vrot.slane %v1471, %v1479
    %v1486 = vunpack.c.l.b16 %v1456
    %v1487 = vunpack.c.l.b16 %v1457
    %v1488 = vunpack.c.l.b16 %v1458
    %v1489 = vunpack.c.l.b16 %v1459
    %v1490 = vpack.c.b16 %v1487, %v1486
    %v1491 = vpack.c.b16 %v1489, %v1488
    %1494 = vmatprep.subr.bf16.mxu0 0
    %1495 = vmatpush1.bf16.msra.mxu0 %v1490
    %1496 = vmatprep.subr.bf16.mxu0 0
    %1497 = vmatpush1.bf16.msra.mxu0 %v1491
    %1498 = vmatprep.subr.bf16.mxu0 0
    %1499 = vmatpush1.bf16.msra.mxu0 0
    %1500 = vmatprep.subr.bf16.mxu0 0
    %1501 = vmatpush1.bf16.msra.mxu0 0
    %1502 = vmatprep.subr.bf16.mxu0 0
    %1503 = vmatpush1.bf16.msra.mxu0 0
    %1504 = vmatprep.subr.bf16.mxu0 0
    %1505 = vmatpush1.bf16.msra.mxu0 0
    %1506 = vmatprep.subr.bf16.mxu0 0
    %1507 = vmatpush1.bf16.msra.mxu0 0
    %1508 = vmatprep.subr.bf16.mxu0 0
    %1509 = vmatpush1.bf16.msra.mxu0 0
    %1510 = vmatprep.subr.bf16.mxu0 0
    %1511 = vmatpush1.bf16.msra.mxu0 0
    %1512 = vmatprep.subr.bf16.mxu0 0
    %1513 = vmatpush1.bf16.msra.mxu0 0
    %1514 = vmatprep.subr.bf16.mxu0 0
    %1515 = vmatpush1.bf16.msra.mxu0 0
    %1516 = vmatprep.subr.bf16.mxu0 0
    %1517 = vmatpush1.bf16.msra.mxu0 0
    %1518 = vmatprep.subr.bf16.mxu0 0
    %1519 = vmatpush1.bf16.msra.mxu0 0
    %1520 = vmatprep.subr.bf16.mxu0 0
    %1521 = vmatpush1.bf16.msra.mxu0 0
    %1522 = vmatprep.subr.bf16.mxu0 0
    %1523 = vmatpush1.bf16.msra.mxu0 0
    %1524 = vmatprep.subr.bf16.mxu0 0
    %1525 = vmatpush1.bf16.msra.mxu0 0
    %1526 = vmatprep.mubr.bf16.mxu0 0
    %1527 = vmatmul.mubr.bf16.gmra.mrb[0].mxu0 %v97
    %v1528 = vpop.f32.mrb[0].mxu0
    %v1529 = vadd.f32 %v1480, %v1528
    %v1530 = vpop.f32.mrb[0].mxu0
    %v1531 = vpop.f32.mrb[0].mxu0
    %v1532 = vadd.f32 %v1480, %v1531
    %v1533 = vpop.f32.mrb[0].mxu0
    %1534 = vdwg.mxu0
    %v1535 = vmul.f32 %v1529, 0.35355338
    %v1536 = vmul.f32 %v1532, 0.35355338
    %v1538 = vlaneseq
    %v1539 = vshrl.u32 %v1538, 7
    %v1540 = vsub.s32 0, %v1539
    %v1541 = vrot.slane %v1473, %v1540
    %v1547 = vunpack.c.l.b16 %v1461
    %v1548 = vunpack.c.l.b16 %v1462
    %v1549 = vunpack.c.l.b16 %v1463
    %v1550 = vunpack.c.l.b16 %v1464
    %v1551 = vpack.c.b16 %v1548, %v1547
    %v1552 = vpack.c.b16 %v1550, %v1549
    %1555 = vmatprep.subr.bf16.mxu0 0
    %1556 = vmatpush1.bf16.msra.mxu0 %v1551
    %1557 = vmatprep.subr.bf16.mxu0 0
    %1558 = vmatpush1.bf16.msra.mxu0 %v1552
    %1559 = vmatprep.subr.bf16.mxu0 0
    %1560 = vmatpush1.bf16.msra.mxu0 0
    %1561 = vmatprep.subr.bf16.mxu0 0
    %1562 = vmatpush1.bf16.msra.mxu0 0
    %1563 = vmatprep.subr.bf16.mxu0 0
    %1564 = vmatpush1.bf16.msra.mxu0 0
    %1565 = vmatprep.subr.bf16.mxu0 0
    %1566 = vmatpush1.bf16.msra.mxu0 0
    %1567 = vmatprep.subr.bf16.mxu0 0
    %1568 = vmatpush1.bf16.msra.mxu0 0
    %1569 = vmatprep.subr.bf16.mxu0 0
    %1570 = vmatpush1.bf16.msra.mxu0 0
    %1571 = vmatprep.subr.bf16.mxu0 0
    %1572 = vmatpush1.bf16.msra.mxu0 0
    %1573 = vmatprep.subr.bf16.mxu0 0
    %1574 = vmatpush1.bf16.msra.mxu0 0
    %1575 = vmatprep.subr.bf16.mxu0 0
    %1576 = vmatpush1.bf16.msra.mxu0 0
    %1577 = vmatprep.subr.bf16.mxu0 0
    %1578 = vmatpush1.bf16.msra.mxu0 0
    %1579 = vmatprep.subr.bf16.mxu0 0
    %1580 = vmatpush1.bf16.msra.mxu0 0
    %1581 = vmatprep.subr.bf16.mxu0 0
    %1582 = vmatpush1.bf16.msra.mxu0 0
    %1583 = vmatprep.subr.bf16.mxu0 0
    %1584 = vmatpush1.bf16.msra.mxu0 0
    %1585 = vmatprep.subr.bf16.mxu0 0
    %1586 = vmatpush1.bf16.msra.mxu0 0
    %1587 = vmatprep.mubr.bf16.mxu0 0
    %1588 = vmatmul.mubr.bf16.gmra.mrb[0].mxu0 %v97
    %v1589 = vpop.f32.mrb[0].mxu0
    %v1590 = vadd.f32 %v1541, %v1589
    %v1591 = vpop.f32.mrb[0].mxu0
    %v1592 = vpop.f32.mrb[0].mxu0
    %v1593 = vadd.f32 %v1541, %v1592
    %v1594 = vpop.f32.mrb[0].mxu0
    %1595 = vdwg.mxu0
    %v1597 = vlaneseq
    %v1598 = vshrl.u32 %v1597, 7
    %v1599 = vsub.s32 0, %v1598
    %v1600 = vrot.slane %v1475, %v1599
    %v1606 = vunpack.c.l.b16 %v1466
    %v1607 = vunpack.c.l.b16 %v1467
    %v1608 = vunpack.c.l.b16 %v1468
    %v1609 = vunpack.c.l.b16 %v1469
    %v1610 = vpack.c.b16 %v1607, %v1606
    %v1611 = vpack.c.b16 %v1609, %v1608
    %1614 = vmatprep.subr.bf16.mxu0 0
    %1615 = vmatpush1.bf16.msra.mxu0 %v1610
    %1616 = vmatprep.subr.bf16.mxu0 0
    %1617 = vmatpush1.bf16.msra.mxu0 %v1611
    %1618 = vmatprep.subr.bf16.mxu0 0
    %1619 = vmatpush1.bf16.msra.mxu0 0
    %1620 = vmatprep.subr.bf16.mxu0 0
    %1621 = vmatpush1.bf16.msra.mxu0 0
    %1622 = vmatprep.subr.bf16.mxu0 0
    %1623 = vmatpush1.bf16.msra.mxu0 0
    %1624 = vmatprep.subr.bf16.mxu0 0
    %1625 = vmatpush1.bf16.msra.mxu0 0
    %1626 = vmatprep.subr.bf16.mxu0 0
    %1627 = vmatpush1.bf16.msra.mxu0 0
    %1628 = vmatprep.subr.bf16.mxu0 0
    %1629 = vmatpush1.bf16.msra.mxu0 0
    %1630 = vmatprep.subr.bf16.mxu0 0
    %1631 = vmatpush1.bf16.msra.mxu0 0
    %1632 = vmatprep.subr.bf16.mxu0 0
    %1633 = vmatpush1.bf16.msra.mxu0 0
    %1634 = vmatprep.subr.bf16.mxu0 0
    %1635 = vmatpush1.bf16.msra.mxu0 0
    %1636 = vmatprep.subr.bf16.mxu0 0
    %1637 = vmatpush1.bf16.msra.mxu0 0
    %1638 = vmatprep.subr.bf16.mxu0 0
    %1639 = vmatpush1.bf16.msra.mxu0 0
    %1640 = vmatprep.subr.bf16.mxu0 0
    %1641 = vmatpush1.bf16.msra.mxu0 0
    %1642 = vmatprep.subr.bf16.mxu0 0
    %1643 = vmatpush1.bf16.msra.mxu0 0
    %1644 = vmatprep.subr.bf16.mxu0 0
    %1645 = vmatpush1.bf16.msra.mxu0 0
    %1646 = vmatprep.mubr.bf16.mxu0 0
    %1647 = vmatmul.mubr.bf16.gmra.mrb[0].mxu0 %v97
    %v1648 = vpop.f32.mrb[0].mxu0
    %v1649 = vadd.f32 %v1600, %v1648
    %v1650 = vpop.f32.mrb[0].mxu0
    %v1651 = vpop.f32.mrb[0].mxu0
    %v1652 = vadd.f32 %v1600, %v1651
    %v1653 = vpop.f32.mrb[0].mxu0
    %1654 = vdwg.mxu0
    %v1655 = vpack.c.bf16 %v1535, %v1535
    %v1656 = vpack.c.bf16 %v1536, %v1536
    %v1657 = vpack.c.bf16 %v1590, %v1590
    %v1658 = vpack.c.bf16 %v1593, %v1593
    %v1660 = vsel %vm264, %v1655, 0
    %v1663 = vsel %vm264, %v1657, 0
    %1665 = vmatprep.subr.bf16.mxu0 0
    %1666 = vmatpush1.bf16.xpose.msra.mxu0 %v1663
    %1667 = vmatprep.subr.bf16.mxu0 0
    %1668 = vmatpush1.bf16.xpose.msra.mxu0 0
    %1669 = vmatprep.subr.bf16.mxu0 0
    %1670 = vmatpush1.bf16.xpose.msra.mxu0 0
    %1671 = vmatprep.subr.bf16.mxu0 0
    %1672 = vmatpush1.bf16.xpose.msra.mxu0 0
    %1673 = vmatprep.subr.bf16.mxu0 0
    %1674 = vmatpush1.bf16.xpose.msra.mxu0 0
    %1675 = vmatprep.subr.bf16.mxu0 0
    %1676 = vmatpush1.bf16.xpose.msra.mxu0 0
    %1677 = vmatprep.subr.bf16.mxu0 0
    %1678 = vmatpush1.bf16.xpose.msra.mxu0 0
    %1679 = vmatprep.subr.bf16.mxu0 0
    %1680 = vmatpush1.bf16.xpose.msra.mxu0 0
    %1681 = vmatprep.subr.bf16.mxu0 0
    %1682 = vmatpush1.bf16.xpose.msra.mxu0 0
    %1683 = vmatprep.subr.bf16.mxu0 0
    %1684 = vmatpush1.bf16.xpose.msra.mxu0 0
    %1685 = vmatprep.subr.bf16.mxu0 0
    %1686 = vmatpush1.bf16.xpose.msra.mxu0 0
    %1687 = vmatprep.subr.bf16.mxu0 0
    %1688 = vmatpush1.bf16.xpose.msra.mxu0 0
    %1689 = vmatprep.subr.bf16.mxu0 0
    %1690 = vmatpush1.bf16.xpose.msra.mxu0 0
    %1691 = vmatprep.subr.bf16.mxu0 0
    %1692 = vmatpush1.bf16.xpose.msra.mxu0 0
    %1693 = vmatprep.subr.bf16.mxu0 0
    %1694 = vmatpush1.bf16.xpose.msra.mxu0 0
    %1695 = vmatprep.subr.bf16.mxu0 0
    %1696 = vmatpush1.bf16.xpose.msra.mxu0 0
    %1697 = vmatprep.mubr.bf16.mxu0 0
    %1698 = vmatmul.mubr.bf16.gmra.mrb[0].mxu0 %v1660
    %v1699 = vpop.f32.mrb[0].mxu0
    %v1700 = vadd.f32 %v49, %v1699
    %v1701 = vpop.f32.mrb[0].mxu0
    %v1702 = vpop.f32.mrb[0].mxu0
    %v1703 = vpop.f32.mrb[0].mxu0
    %1704 = vdwg.mxu0
    %v1706 = vsel %vm264, %v1656, 0
    %v1709 = vsel %vm264, %v1658, 0
    %1711 = vmatprep.subr.bf16.mxu0 0
    %1712 = vmatpush1.bf16.xpose.msra.mxu0 %v1709
    %1713 = vmatprep.subr.bf16.mxu0 0
    %1714 = vmatpush1.bf16.xpose.msra.mxu0 0
    %1715 = vmatprep.subr.bf16.mxu0 0
    %1716 = vmatpush1.bf16.xpose.msra.mxu0 0
    %1717 = vmatprep.subr.bf16.mxu0 0
    %1718 = vmatpush1.bf16.xpose.msra.mxu0 0
    %1719 = vmatprep.subr.bf16.mxu0 0
    %1720 = vmatpush1.bf16.xpose.msra.mxu0 0
    %1721 = vmatprep.subr.bf16.mxu0 0
    %1722 = vmatpush1.bf16.xpose.msra.mxu0 0
    %1723 = vmatprep.subr.bf16.mxu0 0
    %1724 = vmatpush1.bf16.xpose.msra.mxu0 0
    %1725 = vmatprep.subr.bf16.mxu0 0
    %1726 = vmatpush1.bf16.xpose.msra.mxu0 0
    %1727 = vmatprep.subr.bf16.mxu0 0
    %1728 = vmatpush1.bf16.xpose.msra.mxu0 0
    %1729 = vmatprep.subr.bf16.mxu0 0
    %1730 = vmatpush1.bf16.xpose.msra.mxu0 0
    %1731 = vmatprep.subr.bf16.mxu0 0
    %1732 = vmatpush1.bf16.xpose.msra.mxu0 0
    %1733 = vmatprep.subr.bf16.mxu0 0
    %1734 = vmatpush1.bf16.xpose.msra.mxu0 0
    %1735 = vmatprep.subr.bf16.mxu0 0
    %1736 = vmatpush1.bf16.xpose.msra.mxu0 0
    %1737 = vmatprep.subr.bf16.mxu0 0
    %1738 = vmatpush1.bf16.xpose.msra.mxu0 0
    %1739 = vmatprep.subr.bf16.mxu0 0
    %1740 = vmatpush1.bf16.xpose.msra.mxu0 0
    %1741 = vmatprep.subr.bf16.mxu0 0
    %1742 = vmatpush1.bf16.xpose.msra.mxu0 0
    %1743 = vmatprep.mubr.bf16.mxu0 0
    %1744 = vmatmul.mubr.bf16.gmra.mrb[0].mxu0 %v1706
    %v1745 = vpop.f32.mrb[0].mxu0
    %v1746 = vadd.f32 %v53, %v1745
    %v1747 = vpop.f32.mrb[0].mxu0
    %v1748 = vpop.f32.mrb[0].mxu0
    %v1749 = vpop.f32.mrb[0].mxu0
    %1750 = vdwg.mxu0
    %v1751 = vsel %vm264, %v1700, -inf
    %1752 = vmax.xlane.f32.xlu0 %v1751
    %v1753 = vpop.xlane.xlu0 %1752
    %v1754 = vsel %vm264, %v1746, -inf
    %1755 = vmax.xlane.f32.xlu0 %v1754
    %v1756 = vpop.xlane.xlu0 %1755
    %v1757 = vsub.f32 %v1700, %v1753
    %v1758 = vsub.f32 %v1746, %v1756
    %v1759 = vmul.f32 %v1757, 1.442695
    %v1760 = vpow.pop %v1759
    %v1761 = vmul.f32 %v1758, 1.442695
    %v1762 = vpow.pop %v1761
    %v1763 = vsel %vm264, %v1760, 0.0
    %1764 = vadd.xlane.f32.xlu0 %v1763
    %v1765 = vpop.xlane.xlu0 %1764
    %v1766 = vsel %vm264, %v1762, 0.0
    %1767 = vadd.xlane.f32.xlu0 %v1766
    %v1768 = vpop.xlane.xlu0 %1767
    %v1769 = vrcp.pop %v1765
    %v1770 = vrcp.pop %v1768
    %v1771 = vmul.f32 %v1760, %v1769
    %v1772 = vmul.f32 %v1762, %v1770
    %v1773 = vpack.c.bf16 %v1771, %v1771
    %v1774 = vpack.c.bf16 %v1772, %v1772
    %v1775 = vpack.c.bf16 %v1649, %v1649
    %v1776 = vpack.c.bf16 %v1652, %v1652
    %v1778 = vsel %vm264, %v1773, 0
    %v1781 = vsel %vm386, %v1775, 0
    %1783 = vmatprep.subr.bf16.mxu0 0
    %1784 = vmatpush1.bf16.msra.mxu0 %v1781
    %1785 = vmatprep.subr.bf16.mxu0 0
    %1786 = vmatpush1.bf16.msra.mxu0 0
    %1787 = vmatprep.subr.bf16.mxu0 0
    %1788 = vmatpush1.bf16.msra.mxu0 0
    %1789 = vmatprep.subr.bf16.mxu0 0
    %1790 = vmatpush1.bf16.msra.mxu0 0
    %1791 = vmatprep.subr.bf16.mxu0 0
    %1792 = vmatpush1.bf16.msra.mxu0 0
    %1793 = vmatprep.subr.bf16.mxu0 0
    %1794 = vmatpush1.bf16.msra.mxu0 0
    %1795 = vmatprep.subr.bf16.mxu0 0
    %1796 = vmatpush1.bf16.msra.mxu0 0
    %1797 = vmatprep.subr.bf16.mxu0 0
    %1798 = vmatpush1.bf16.msra.mxu0 0
    %1799 = vmatprep.subr.bf16.mxu0 0
    %1800 = vmatpush1.bf16.msra.mxu0 0
    %1801 = vmatprep.subr.bf16.mxu0 0
    %1802 = vmatpush1.bf16.msra.mxu0 0
    %1803 = vmatprep.subr.bf16.mxu0 0
    %1804 = vmatpush1.bf16.msra.mxu0 0
    %1805 = vmatprep.subr.bf16.mxu0 0
    %1806 = vmatpush1.bf16.msra.mxu0 0
    %1807 = vmatprep.subr.bf16.mxu0 0
    %1808 = vmatpush1.bf16.msra.mxu0 0
    %1809 = vmatprep.subr.bf16.mxu0 0
    %1810 = vmatpush1.bf16.msra.mxu0 0
    %1811 = vmatprep.subr.bf16.mxu0 0
    %1812 = vmatpush1.bf16.msra.mxu0 0
    %1813 = vmatprep.subr.bf16.mxu0 0
    %1814 = vmatpush1.bf16.msra.mxu0 0
    %1815 = vmatprep.mubr.bf16.mxu0 0
    %1816 = vmatmul.mubr.bf16.gmra.mrb[0].mxu0 %v1778
    %v1817 = vpop.f32.mrb[0].mxu0
    %v1818 = vadd.f32 0.0, %v1817
    %v1819 = vpop.f32.mrb[0].mxu0
    %v1820 = vpop.f32.mrb[0].mxu0
    %v1821 = vpop.f32.mrb[0].mxu0
    %1822 = vdwg.mxu0
    %v1824 = vsel %vm264, %v1774, 0
    %v1827 = vsel %vm386, %v1776, 0
    %1829 = vmatprep.subr.bf16.mxu0 0
    %1830 = vmatpush1.bf16.msra.mxu0 %v1827
    %1831 = vmatprep.subr.bf16.mxu0 0
    %1832 = vmatpush1.bf16.msra.mxu0 0
    %1833 = vmatprep.subr.bf16.mxu0 0
    %1834 = vmatpush1.bf16.msra.mxu0 0
    %1835 = vmatprep.subr.bf16.mxu0 0
    %1836 = vmatpush1.bf16.msra.mxu0 0
    %1837 = vmatprep.subr.bf16.mxu0 0
    %1838 = vmatpush1.bf16.msra.mxu0 0
    %1839 = vmatprep.subr.bf16.mxu0 0
    %1840 = vmatpush1.bf16.msra.mxu0 0
    %1841 = vmatprep.subr.bf16.mxu0 0
    %1842 = vmatpush1.bf16.msra.mxu0 0
    %1843 = vmatprep.subr.bf16.mxu0 0
    %1844 = vmatpush1.bf16.msra.mxu0 0
    %1845 = vmatprep.subr.bf16.mxu0 0
    %1846 = vmatpush1.bf16.msra.mxu0 0
    %1847 = vmatprep.subr.bf16.mxu0 0
    %1848 = vmatpush1.bf16.msra.mxu0 0
    %1849 = vmatprep.subr.bf16.mxu0 0
    %1850 = vmatpush1.bf16.msra.mxu0 0
    %1851 = vmatprep.subr.bf16.mxu0 0
    %1852 = vmatpush1.bf16.msra.mxu0 0
    %1853 = vmatprep.subr.bf16.mxu0 0
    %1854 = vmatpush1.bf16.msra.mxu0 0
    %1855 = vmatprep.subr.bf16.mxu0 0
    %1856 = vmatpush1.bf16.msra.mxu0 0
    %1857 = vmatprep.subr.bf16.mxu0 0
    %1858 = vmatpush1.bf16.msra.mxu0 0
    %1859 = vmatprep.subr.bf16.mxu0 0
    %1860 = vmatpush1.bf16.msra.mxu0 0
    %1861 = vmatprep.mubr.bf16.mxu0 0
    %1862 = vmatmul.mubr.bf16.gmra.mrb[0].mxu0 %v1824
    %v1863 = vpop.f32.mrb[0].mxu0
    %v1864 = vadd.f32 0.0, %v1863
    %v1865 = vpop.f32.mrb[0].mxu0
    %v1866 = vpop.f32.mrb[0].mxu0
    %v1867 = vpop.f32.mrb[0].mxu0
    %1868 = vdwg.mxu0
    %v1869 = vpack.c.bf16 %v1864, %v1818
    %s1870 = scalar_lea.vmem %s3, 12
    %v1871 = vld [vmem:[%s1870] sm:$0xf]
    %v1873 = vsel %vm264, %v1869, 0
    %v1876 = vsel %vm386, %v1871, 0
    %1878 = vmatprep.subr.bf16.mxu0 0
    %1879 = vmatpush1.bf16.msra.mxu0 %v1876
    %1880 = vmatprep.subr.bf16.mxu0 0
    %1881 = vmatpush1.bf16.msra.mxu0 0
    %1882 = vmatprep.subr.bf16.mxu0 0
    %1883 = vmatpush1.bf16.msra.mxu0 0
    %1884 = vmatprep.subr.bf16.mxu0 0
    %1885 = vmatpush1.bf16.msra.mxu0 0
    %1886 = vmatprep.subr.bf16.mxu0 0
    %1887 = vmatpush1.bf16.msra.mxu0 0
    %1888 = vmatprep.subr.bf16.mxu0 0
    %1889 = vmatpush1.bf16.msra.mxu0 0
    %1890 = vmatprep.subr.bf16.mxu0 0
    %1891 = vmatpush1.bf16.msra.mxu0 0
    %1892 = vmatprep.subr.bf16.mxu0 0
    %1893 = vmatpush1.bf16.msra.mxu0 0
    %1894 = vmatprep.subr.bf16.mxu0 0
    %1895 = vmatpush1.bf16.msra.mxu0 0
    %1896 = vmatprep.subr.bf16.mxu0 0
    %1897 = vmatpush1.bf16.msra.mxu0 0
    %1898 = vmatprep.subr.bf16.mxu0 0
    %1899 = vmatpush1.bf16.msra.mxu0 0
    %1900 = vmatprep.subr.bf16.mxu0 0
    %1901 = vmatpush1.bf16.msra.mxu0 0
    %1902 = vmatprep.subr.bf16.mxu0 0
    %1903 = vmatpush1.bf16.msra.mxu0 0
    %1904 = vmatprep.subr.bf16.mxu0 0
    %1905 = vmatpush1.bf16.msra.mxu0 0
    %1906 = vmatprep.subr.bf16.mxu0 0
    %1907 = vmatpush1.bf16.msra.mxu0 0
    %1908 = vmatprep.subr.bf16.mxu0 0
    %1909 = vmatpush1.bf16.msra.mxu0 0
    %1910 = vmatprep.mubr.bf16.mxu0 0
    %1911 = vmatmul.mubr.bf16.gmra.mrb[0].mxu0 %v1873
    %v1912 = vpop.f32.mrb[0].mxu0
    %v1913 = vadd.f32 0.0, %v1912
    %v1914 = vpop.f32.mrb[0].mxu0
    %v1915 = vpop.f32.mrb[0].mxu0
    %v1916 = vadd.f32 0.0, %v1915
    %v1917 = vpop.f32.mrb[0].mxu0
    %1918 = vdwg.mxu0
    %v1919 = vadd.f32 %v1453, %v1913
    %v1920 = vadd.f32 %v1454, %v1916
    %v1921 = vlaneseq
    %v1922 = vshrl.u32 %v1921, 7
    %v1923 = vsub.s32 0, %v1922
    %v1924 = vrot.slane %v56, %v1923
    %v1925 = vadd.f32 %v1919, %v1924
    %v1926 = vadd.f32 %v1920, %v1924
    %v1927 = vadd.f32 %v40, %v1925
    %v1928 = vadd.f32 %v41, %v1926
    %v1929 = vsel %vm95, %v1927, 0.0
    %1930 = vadd.xlane.f32.xlu0 %v1929
    %v1931 = vpop.xlane.xlu0 %1930
    %v1932 = vsel %vm95, %v1928, 0.0
    %1933 = vadd.xlane.f32.xlu0 %v1932
    %v1934 = vpop.xlane.xlu0 %1933
    %v1935 = vrcp.pop 32.0
    %v1936 = vmul.f32 %v1931, %v1935
    %v1937 = vmul.f32 %v1934, %v1935
    %v1938 = vsub.f32 %v1927, %v1936
    %v1939 = vsub.f32 %v1928, %v1937
    %v1940 = vmul.f32 %v1938, %v1938
    %v1941 = vmul.f32 %v1939, %v1939
    %v1942 = vsel %vm95, %v1940, 0.0
    %1943 = vadd.xlane.f32.xlu0 %v1942
    %v1944 = vpop.xlane.xlu0 %1943
    %v1945 = vsel %vm95, %v1941, 0.0
    %1946 = vadd.xlane.f32.xlu0 %v1945
    %v1947 = vpop.xlane.xlu0 %1946
    %v1948 = vmul.f32 %v1944, %v1935
    %v1949 = vmul.f32 %v1947, %v1935
    %v1950 = vadd.f32 %v1948, 1e-05
    %v1951 = vadd.f32 %v1949, 1e-05
    %v1952 = vrsqrt.pop %v1950
    %v1953 = vrsqrt.pop %v1951
    %v1954 = vmul.f32 %v1938, %v1952
    %v1955 = vmul.f32 %v1939, %v1953
    %v1956 = vlaneseq
    %v1957 = vshrl.u32 %v1956, 7
    %v1958 = vsub.s32 1, %v1957
    %v1959 = vrot.slane %v56, %v1958
    %v1960 = vmul.f32 %v1954, %v1959
    %v1961 = vmul.f32 %v1955, %v1959
    %v1962 = vlaneseq
    %v1963 = vshrl.u32 %v1962, 7
    %v1964 = vsub.s32 2, %v1963
    %v1965 = vrot.slane %v56, %v1964
    %v1966 = vadd.f32 %v1960, %v1965
    %v1967 = vadd.f32 %v1961, %v1965
    %v1968 = vpack.c.bf16 %v1967, %v1966
    %v1969 = vld [vmem:[%s4] sm:$0xf]
    %v1970 = vld [vmem:[%s4 + $0x4] sm:$0xf]
    %v1971 = vld [vmem:[%s4 + $0x8] sm:$0xf]
    %v1972 = vld [vmem:[%s4 + $0xc] sm:$0xf]
    %v1973 = vld [vmem:[%s8] sm:$0x1]
    %v1975 = vlaneseq
    %v1976 = vshrl.u32 %v1975, 7
    %v1977 = vsub.s32 0, %v1976
    %v1978 = vrot.slane %v1973, %v1977
    %v1984 = vunpack.c.l.b16 %v1969
    %v1985 = vunpack.c.l.b16 %v1970
    %v1986 = vunpack.c.l.b16 %v1971
    %v1987 = vunpack.c.l.b16 %v1972
    %v1988 = vpack.c.b16 %v1985, %v1984
    %v1989 = vpack.c.b16 %v1987, %v1986
    %v1993 = vsel %vm95, %v1968, 0
    %1995 = vmatprep.subr.bf16.mxu0 0
    %1996 = vmatpush1.bf16.msra.mxu0 %v1988
    %1997 = vmatprep.subr.bf16.mxu0 0
    %1998 = vmatpush1.bf16.msra.mxu0 %v1989
    %1999 = vmatprep.subr.bf16.mxu0 0
    %2000 = vmatpush1.bf16.msra.mxu0 0
    %2001 = vmatprep.subr.bf16.mxu0 0
    %2002 = vmatpush1.bf16.msra.mxu0 0
    %2003 = vmatprep.subr.bf16.mxu0 0
    %2004 = vmatpush1.bf16.msra.mxu0 0
    %2005 = vmatprep.subr.bf16.mxu0 0
    %2006 = vmatpush1.bf16.msra.mxu0 0
    %2007 = vmatprep.subr.bf16.mxu0 0
    %2008 = vmatpush1.bf16.msra.mxu0 0
    %2009 = vmatprep.subr.bf16.mxu0 0
    %2010 = vmatpush1.bf16.msra.mxu0 0
    %2011 = vmatprep.subr.bf16.mxu0 0
    %2012 = vmatpush1.bf16.msra.mxu0 0
    %2013 = vmatprep.subr.bf16.mxu0 0
    %2014 = vmatpush1.bf16.msra.mxu0 0
    %2015 = vmatprep.subr.bf16.mxu0 0
    %2016 = vmatpush1.bf16.msra.mxu0 0
    %2017 = vmatprep.subr.bf16.mxu0 0
    %2018 = vmatpush1.bf16.msra.mxu0 0
    %2019 = vmatprep.subr.bf16.mxu0 0
    %2020 = vmatpush1.bf16.msra.mxu0 0
    %2021 = vmatprep.subr.bf16.mxu0 0
    %2022 = vmatpush1.bf16.msra.mxu0 0
    %2023 = vmatprep.subr.bf16.mxu0 0
    %2024 = vmatpush1.bf16.msra.mxu0 0
    %2025 = vmatprep.subr.bf16.mxu0 0
    %2026 = vmatpush1.bf16.msra.mxu0 0
    %2027 = vmatprep.mubr.bf16.mxu0 0
    %2028 = vmatmul.mubr.bf16.gmra.mrb[0].mxu0 %v1993
    %v2029 = vpop.f32.mrb[0].mxu0
    %v2030 = vadd.f32 %v1978, %v2029
    %v2031 = vpop.f32.mrb[0].mxu0
    %v2032 = vpop.f32.mrb[0].mxu0
    %v2033 = vadd.f32 %v1978, %v2032
    %v2034 = vpop.f32.mrb[0].mxu0
    %2035 = vdwg.mxu0
    %v2036 = vmul.f32 %v2030, 0.5
    %v2037 = vmul.f32 %v2033, 0.5
    %v2038 = vmul.f32 %v2030, 0.044715
    %v2039 = vmul.f32 %v2033, 0.044715
    %v2040 = vmul.f32 %v2038, %v2030
    %v2041 = vmul.f32 %v2039, %v2033
    %v2042 = vmul.f32 %v2040, %v2030
    %v2043 = vmul.f32 %v2041, %v2033
    %v2044 = vadd.f32 %v2030, %v2042
    %v2045 = vadd.f32 %v2033, %v2043
    %v2046 = vmul.f32 %v2044, 0.7978846
    %v2047 = vmul.f32 %v2045, 0.7978846
    %v2048 = vtanh.pop %v2046
    %v2049 = vtanh.pop %v2047
    %v2050 = vadd.f32 %v2048, 1.0
    %v2051 = vadd.f32 %v2049, 1.0
    %v2052 = vmul.f32 %v2036, %v2050
    %v2053 = vmul.f32 %v2037, %v2051
    %v2054 = vpack.c.bf16 %v2053, %v2052
    %v2055 = vld [vmem:[%s5] sm:$0xf]
    %v2056 = vld [vmem:[%s5 + $0x4] sm:$0xf]
    %v2057 = vld [vmem:[%s5 + $0x8] sm:$0xf]
    %v2058 = vld [vmem:[%s5 + $0xc] sm:$0xf]
    %v2059 = vld [vmem:[%s5 + $0x10] sm:$0xf]
    %v2060 = vld [vmem:[%s5 + $0x14] sm:$0xf]
    %v2061 = vld [vmem:[%s5 + $0x18] sm:$0xf]
    %v2062 = vld [vmem:[%s5 + $0x1c] sm:$0xf]
    %v2063 = vlaneseq
    %v2064 = vshrl.u32 %v2063, 7
    %v2065 = vsub.s32 3, %v2064
    %v2066 = vrot.slane %v56, %v2065
    %v2075 = vunpack.c.l.b16 %v2055
    %v2076 = vunpack.c.l.b16 %v2056
    %v2077 = vunpack.c.l.b16 %v2057
    %v2078 = vunpack.c.l.b16 %v2058
    %v2079 = vunpack.c.l.b16 %v2059
    %v2080 = vunpack.c.l.b16 %v2060
    %v2081 = vunpack.c.l.b16 %v2061
    %v2082 = vunpack.c.l.b16 %v2062
    %v2083 = vpack.c.b16 %v2076, %v2075
    %v2084 = vpack.c.b16 %v2078, %v2077
    %v2085 = vpack.c.b16 %v2080, %v2079
    %v2086 = vpack.c.b16 %v2082, %v2081
    %vm2091 = vcmask 523264
    %v2093 = vsel %vm2091, %v2054, 0
    %2095 = vmatprep.subr.bf16.mxu0 0
    %2096 = vmatpush1.bf16.msra.mxu0 %v2083
    %2097 = vmatprep.subr.bf16.mxu0 0
    %2098 = vmatpush1.bf16.msra.mxu0 %v2084
    %2099 = vmatprep.subr.bf16.mxu0 0
    %2100 = vmatpush1.bf16.msra.mxu0 %v2085
    %2101 = vmatprep.subr.bf16.mxu0 0
    %2102 = vmatpush1.bf16.msra.mxu0 %v2086
    %2103 = vmatprep.subr.bf16.mxu0 0
    %2104 = vmatpush1.bf16.msra.mxu0 0
    %2105 = vmatprep.subr.bf16.mxu0 0
    %2106 = vmatpush1.bf16.msra.mxu0 0
    %2107 = vmatprep.subr.bf16.mxu0 0
    %2108 = vmatpush1.bf16.msra.mxu0 0
    %2109 = vmatprep.subr.bf16.mxu0 0
    %2110 = vmatpush1.bf16.msra.mxu0 0
    %2111 = vmatprep.subr.bf16.mxu0 0
    %2112 = vmatpush1.bf16.msra.mxu0 0
    %2113 = vmatprep.subr.bf16.mxu0 0
    %2114 = vmatpush1.bf16.msra.mxu0 0
    %2115 = vmatprep.subr.bf16.mxu0 0
    %2116 = vmatpush1.bf16.msra.mxu0 0
    %2117 = vmatprep.subr.bf16.mxu0 0
    %2118 = vmatpush1.bf16.msra.mxu0 0
    %2119 = vmatprep.subr.bf16.mxu0 0
    %2120 = vmatpush1.bf16.msra.mxu0 0
    %2121 = vmatprep.subr.bf16.mxu0 0
    %2122 = vmatpush1.bf16.msra.mxu0 0
    %2123 = vmatprep.subr.bf16.mxu0 0
    %2124 = vmatpush1.bf16.msra.mxu0 0
    %2125 = vmatprep.subr.bf16.mxu0 0
    %2126 = vmatpush1.bf16.msra.mxu0 0
    %2127 = vmatprep.mubr.bf16.mxu0 0
    %2128 = vmatmul.mubr.bf16.gmra.mrb[0].mxu0 %v2093
    %v2129 = vpop.f32.mrb[0].mxu0
    %v2130 = vadd.f32 %v2066, %v2129
    %v2131 = vpop.f32.mrb[0].mxu0
    %v2132 = vpop.f32.mrb[0].mxu0
    %v2133 = vadd.f32 %v2066, %v2132
    %v2134 = vpop.f32.mrb[0].mxu0
    %2135 = vdwg.mxu0
    %v2136 = vadd.f32 %v1966, %v2130
    %v2137 = vadd.f32 %v1967, %v2133
    %v2138 = vsel %vm95, %v2136, 0.0
    %2139 = vadd.xlane.f32.xlu0 %v2138
    %v2140 = vpop.xlane.xlu0 %2139
    %v2141 = vsel %vm95, %v2137, 0.0
    %2142 = vadd.xlane.f32.xlu0 %v2141
    %v2143 = vpop.xlane.xlu0 %2142
    %v2144 = vmul.f32 %v2140, %v1935
    %v2145 = vmul.f32 %v2143, %v1935
    %v2146 = vsub.f32 %v2136, %v2144
    %v2147 = vsub.f32 %v2137, %v2145
    %v2148 = vmul.f32 %v2146, %v2146
    %v2149 = vmul.f32 %v2147, %v2147
    %v2150 = vsel %vm95, %v2148, 0.0
    %2151 = vadd.xlane.f32.xlu0 %v2150
    %v2152 = vpop.xlane.xlu0 %2151
    %v2153 = vsel %vm95, %v2149, 0.0
    %2154 = vadd.xlane.f32.xlu0 %v2153
    %v2155 = vpop.xlane.xlu0 %2154
    %v2156 = vmul.f32 %v2152, %v1935
    %v2157 = vmul.f32 %v2155, %v1935
    %v2158 = vadd.f32 %v2156, 1e-05
    %v2159 = vadd.f32 %v2157, 1e-05
    %v2160 = vrsqrt.pop %v2158
    %v2161 = vrsqrt.pop %v2159
    %v2162 = vmul.f32 %v2146, %v2160
    %v2163 = vmul.f32 %v2147, %v2161
    %v2164 = vlaneseq
    %v2165 = vshrl.u32 %v2164, 7
    %v2166 = vsub.s32 4, %v2165
    %v2167 = vrot.slane %v56, %v2166
    %v2168 = vmul.f32 %v2162, %v2167
    %v2169 = vmul.f32 %v2163, %v2167
    %v2170 = vlaneseq
    %v2171 = vshrl.u32 %v2170, 7
    %v2172 = vsub.s32 5, %v2171
    %v2173 = vrot.slane %v56, %v2172
    %v2174 = vadd.f32 %v2168, %v2173
    %v2175 = vadd.f32 %v2169, %v2173
    %s2176 = scalar_lea.vmem %s7, 8
    %v2177 = vld [vmem:[%s2176] sm:$0x3f]
    %v2178 = vpack.c.bf16 %v2175, %v2174
    %s2179 = scalar_lea.vmem %s2, 192
    %v2180 = vld [vmem:[%s2179] sm:$0xf]
    %v2181 = vld [vmem:[%s2179 + $0x4] sm:$0xf]
    %v2182 = vld [vmem:[%s2179 + $0x8] sm:$0xf]
    %v2183 = vld [vmem:[%s2179 + $0xc] sm:$0xf]
    %s2184 = scalar_lea.vmem %s2, 256
    %v2185 = vld [vmem:[%s2184] sm:$0xf]
    %v2186 = vld [vmem:[%s2184 + $0x4] sm:$0xf]
    %v2187 = vld [vmem:[%s2184 + $0x8] sm:$0xf]
    %v2188 = vld [vmem:[%s2184 + $0xc] sm:$0xf]
    %s2189 = scalar_lea.vmem %s2, 320
    %v2190 = vld [vmem:[%s2189] sm:$0xf]
    %v2191 = vld [vmem:[%s2189 + $0x4] sm:$0xf]
    %v2192 = vld [vmem:[%s2189 + $0x8] sm:$0xf]
    %v2193 = vld [vmem:[%s2189 + $0xc] sm:$0xf]
    %s2194 = scalar_lea.vmem %s6, 12
    %v2195 = vld [vmem:[%s2194] sm:$0x1]
    %s2196 = scalar_lea.vmem %s6, 16
    %v2197 = vld [vmem:[%s2196] sm:$0x1]
    %s2198 = scalar_lea.vmem %s6, 20
    %v2199 = vld [vmem:[%s2198] sm:$0x1]
    %v2201 = vlaneseq
    %v2202 = vshrl.u32 %v2201, 7
    %v2203 = vsub.s32 0, %v2202
    %v2204 = vrot.slane %v2195, %v2203
    %v2210 = vunpack.c.l.b16 %v2180
    %v2211 = vunpack.c.l.b16 %v2181
    %v2212 = vunpack.c.l.b16 %v2182
    %v2213 = vunpack.c.l.b16 %v2183
    %v2214 = vpack.c.b16 %v2211, %v2210
    %v2215 = vpack.c.b16 %v2213, %v2212
    %v2219 = vsel %vm95, %v2178, 0
    %2221 = vmatprep.subr.bf16.mxu0 0
    %2222 = vmatpush1.bf16.msra.mxu0 %v2214
    %2223 = vmatprep.subr.bf16.mxu0 0
    %2224 = vmatpush1.bf16.msra.mxu0 %v2215
    %2225 = vmatprep.subr.bf16.mxu0 0
    %2226 = vmatpush1.bf16.msra.mxu0 0
    %2227 = vmatprep.subr.bf16.mxu0 0
    %2228 = vmatpush1.bf16.msra.mxu0 0
    %2229 = vmatprep.subr.bf16.mxu0 0
    %2230 = vmatpush1.bf16.msra.mxu0 0
    %2231 = vmatprep.subr.bf16.mxu0 0
    %2232 = vmatpush1.bf16.msra.mxu0 0
    %2233 = vmatprep.subr.bf16.mxu0 0
    %2234 = vmatpush1.bf16.msra.mxu0 0
    %2235 = vmatprep.subr.bf16.mxu0 0
    %2236 = vmatpush1.bf16.msra.mxu0 0
    %2237 = vmatprep.subr.bf16.mxu0 0
    %2238 = vmatpush1.bf16.msra.mxu0 0
    %2239 = vmatprep.subr.bf16.mxu0 0
    %2240 = vmatpush1.bf16.msra.mxu0 0
    %2241 = vmatprep.subr.bf16.mxu0 0
    %2242 = vmatpush1.bf16.msra.mxu0 0
    %2243 = vmatprep.subr.bf16.mxu0 0
    %2244 = vmatpush1.bf16.msra.mxu0 0
    %2245 = vmatprep.subr.bf16.mxu0 0
    %2246 = vmatpush1.bf16.msra.mxu0 0
    %2247 = vmatprep.subr.bf16.mxu0 0
    %2248 = vmatpush1.bf16.msra.mxu0 0
    %2249 = vmatprep.subr.bf16.mxu0 0
    %2250 = vmatpush1.bf16.msra.mxu0 0
    %2251 = vmatprep.subr.bf16.mxu0 0
    %2252 = vmatpush1.bf16.msra.mxu0 0
    %2253 = vmatprep.mubr.bf16.mxu0 0
    %2254 = vmatmul.mubr.bf16.gmra.mrb[0].mxu0 %v2219
    %v2255 = vpop.f32.mrb[0].mxu0
    %v2256 = vadd.f32 %v2204, %v2255
    %v2257 = vpop.f32.mrb[0].mxu0
    %v2258 = vpop.f32.mrb[0].mxu0
    %v2259 = vadd.f32 %v2204, %v2258
    %v2260 = vpop.f32.mrb[0].mxu0
    %2261 = vdwg.mxu0
    %v2262 = vmul.f32 %v2256, 0.35355338
    %v2263 = vmul.f32 %v2259, 0.35355338
    %v2265 = vlaneseq
    %v2266 = vshrl.u32 %v2265, 7
    %v2267 = vsub.s32 0, %v2266
    %v2268 = vrot.slane %v2197, %v2267
    %v2274 = vunpack.c.l.b16 %v2185
    %v2275 = vunpack.c.l.b16 %v2186
    %v2276 = vunpack.c.l.b16 %v2187
    %v2277 = vunpack.c.l.b16 %v2188
    %v2278 = vpack.c.b16 %v2275, %v2274
    %v2279 = vpack.c.b16 %v2277, %v2276
    %2282 = vmatprep.subr.bf16.mxu0 0
    %2283 = vmatpush1.bf16.msra.mxu0 %v2278
    %2284 = vmatprep.subr.bf16.mxu0 0
    %2285 = vmatpush1.bf16.msra.mxu0 %v2279
    %2286 = vmatprep.subr.bf16.mxu0 0
    %2287 = vmatpush1.bf16.msra.mxu0 0
    %2288 = vmatprep.subr.bf16.mxu0 0
    %2289 = vmatpush1.bf16.msra.mxu0 0
    %2290 = vmatprep.subr.bf16.mxu0 0
    %2291 = vmatpush1.bf16.msra.mxu0 0
    %2292 = vmatprep.subr.bf16.mxu0 0
    %2293 = vmatpush1.bf16.msra.mxu0 0
    %2294 = vmatprep.subr.bf16.mxu0 0
    %2295 = vmatpush1.bf16.msra.mxu0 0
    %2296 = vmatprep.subr.bf16.mxu0 0
    %2297 = vmatpush1.bf16.msra.mxu0 0
    %2298 = vmatprep.subr.bf16.mxu0 0
    %2299 = vmatpush1.bf16.msra.mxu0 0
    %2300 = vmatprep.subr.bf16.mxu0 0
    %2301 = vmatpush1.bf16.msra.mxu0 0
    %2302 = vmatprep.subr.bf16.mxu0 0
    %2303 = vmatpush1.bf16.msra.mxu0 0
    %2304 = vmatprep.subr.bf16.mxu0 0
    %2305 = vmatpush1.bf16.msra.mxu0 0
    %2306 = vmatprep.subr.bf16.mxu0 0
    %2307 = vmatpush1.bf16.msra.mxu0 0
    %2308 = vmatprep.subr.bf16.mxu0 0
    %2309 = vmatpush1.bf16.msra.mxu0 0
    %2310 = vmatprep.subr.bf16.mxu0 0
    %2311 = vmatpush1.bf16.msra.mxu0 0
    %2312 = vmatprep.subr.bf16.mxu0 0
    %2313 = vmatpush1.bf16.msra.mxu0 0
    %2314 = vmatprep.mubr.bf16.mxu0 0
    %2315 = vmatmul.mubr.bf16.gmra.mrb[0].mxu0 %v2219
    %v2316 = vpop.f32.mrb[0].mxu0
    %v2317 = vadd.f32 %v2268, %v2316
    %v2318 = vpop.f32.mrb[0].mxu0
    %v2319 = vpop.f32.mrb[0].mxu0
    %v2320 = vadd.f32 %v2268, %v2319
    %v2321 = vpop.f32.mrb[0].mxu0
    %2322 = vdwg.mxu0
    %v2324 = vlaneseq
    %v2325 = vshrl.u32 %v2324, 7
    %v2326 = vsub.s32 0, %v2325
    %v2327 = vrot.slane %v2199, %v2326
    %v2333 = vunpack.c.l.b16 %v2190
    %v2334 = vunpack.c.l.b16 %v2191
    %v2335 = vunpack.c.l.b16 %v2192
    %v2336 = vunpack.c.l.b16 %v2193
    %v2337 = vpack.c.b16 %v2334, %v2333
    %v2338 = vpack.c.b16 %v2336, %v2335
    %2341 = vmatprep.subr.bf16.mxu0 0
    %2342 = vmatpush1.bf16.msra.mxu0 %v2337
    %2343 = vmatprep.subr.bf16.mxu0 0
    %2344 = vmatpush1.bf16.msra.mxu0 %v2338
    %2345 = vmatprep.subr.bf16.mxu0 0
    %2346 = vmatpush1.bf16.msra.mxu0 0
    %2347 = vmatprep.subr.bf16.mxu0 0
    %2348 = vmatpush1.bf16.msra.mxu0 0
    %2349 = vmatprep.subr.bf16.mxu0 0
    %2350 = vmatpush1.bf16.msra.mxu0 0
    %2351 = vmatprep.subr.bf16.mxu0 0
    %2352 = vmatpush1.bf16.msra.mxu0 0
    %2353 = vmatprep.subr.bf16.mxu0 0
    %2354 = vmatpush1.bf16.msra.mxu0 0
    %2355 = vmatprep.subr.bf16.mxu0 0
    %2356 = vmatpush1.bf16.msra.mxu0 0
    %2357 = vmatprep.subr.bf16.mxu0 0
    %2358 = vmatpush1.bf16.msra.mxu0 0
    %2359 = vmatprep.subr.bf16.mxu0 0
    %2360 = vmatpush1.bf16.msra.mxu0 0
    %2361 = vmatprep.subr.bf16.mxu0 0
    %2362 = vmatpush1.bf16.msra.mxu0 0
    %2363 = vmatprep.subr.bf16.mxu0 0
    %2364 = vmatpush1.bf16.msra.mxu0 0
    %2365 = vmatprep.subr.bf16.mxu0 0
    %2366 = vmatpush1.bf16.msra.mxu0 0
    %2367 = vmatprep.subr.bf16.mxu0 0
    %2368 = vmatpush1.bf16.msra.mxu0 0
    %2369 = vmatprep.subr.bf16.mxu0 0
    %2370 = vmatpush1.bf16.msra.mxu0 0
    %2371 = vmatprep.subr.bf16.mxu0 0
    %2372 = vmatpush1.bf16.msra.mxu0 0
    %2373 = vmatprep.mubr.bf16.mxu0 0
    %2374 = vmatmul.mubr.bf16.gmra.mrb[0].mxu0 %v2219
    %v2375 = vpop.f32.mrb[0].mxu0
    %v2376 = vadd.f32 %v2327, %v2375
    %v2377 = vpop.f32.mrb[0].mxu0
    %v2378 = vpop.f32.mrb[0].mxu0
    %v2379 = vadd.f32 %v2327, %v2378
    %v2380 = vpop.f32.mrb[0].mxu0
    %2381 = vdwg.mxu0
    %v2382 = vpack.c.bf16 %v2262, %v2262
    %v2383 = vpack.c.bf16 %v2263, %v2263
    %v2384 = vpack.c.bf16 %v2317, %v2317
    %v2385 = vpack.c.bf16 %v2320, %v2320
    %v2387 = vsel %vm264, %v2382, 0
    %v2390 = vsel %vm264, %v2384, 0
    %2392 = vmatprep.subr.bf16.mxu0 0
    %2393 = vmatpush1.bf16.xpose.msra.mxu0 %v2390
    %2394 = vmatprep.subr.bf16.mxu0 0
    %2395 = vmatpush1.bf16.xpose.msra.mxu0 0
    %2396 = vmatprep.subr.bf16.mxu0 0
    %2397 = vmatpush1.bf16.xpose.msra.mxu0 0
    %2398 = vmatprep.subr.bf16.mxu0 0
    %2399 = vmatpush1.bf16.xpose.msra.mxu0 0
    %2400 = vmatprep.subr.bf16.mxu0 0
    %2401 = vmatpush1.bf16.xpose.msra.mxu0 0
    %2402 = vmatprep.subr.bf16.mxu0 0
    %2403 = vmatpush1.bf16.xpose.msra.mxu0 0
    %2404 = vmatprep.subr.bf16.mxu0 0
    %2405 = vmatpush1.bf16.xpose.msra.mxu0 0
    %2406 = vmatprep.subr.bf16.mxu0 0
    %2407 = vmatpush1.bf16.xpose.msra.mxu0 0
    %2408 = vmatprep.subr.bf16.mxu0 0
    %2409 = vmatpush1.bf16.xpose.msra.mxu0 0
    %2410 = vmatprep.subr.bf16.mxu0 0
    %2411 = vmatpush1.bf16.xpose.msra.mxu0 0
    %2412 = vmatprep.subr.bf16.mxu0 0
    %2413 = vmatpush1.bf16.xpose.msra.mxu0 0
    %2414 = vmatprep.subr.bf16.mxu0 0
    %2415 = vmatpush1.bf16.xpose.msra.mxu0 0
    %2416 = vmatprep.subr.bf16.mxu0 0
    %2417 = vmatpush1.bf16.xpose.msra.mxu0 0
    %2418 = vmatprep.subr.bf16.mxu0 0
    %2419 = vmatpush1.bf16.xpose.msra.mxu0 0
    %2420 = vmatprep.subr.bf16.mxu0 0
    %2421 = vmatpush1.bf16.xpose.msra.mxu0 0
    %2422 = vmatprep.subr.bf16.mxu0 0
    %2423 = vmatpush1.bf16.xpose.msra.mxu0 0
    %2424 = vmatprep.mubr.bf16.mxu0 0
    %2425 = vmatmul.mubr.bf16.gmra.mrb[0].mxu0 %v2387
    %v2426 = vpop.f32.mrb[0].mxu0
    %v2427 = vadd.f32 %v49, %v2426
    %v2428 = vpop.f32.mrb[0].mxu0
    %v2429 = vpop.f32.mrb[0].mxu0
    %v2430 = vpop.f32.mrb[0].mxu0
    %2431 = vdwg.mxu0
    %v2433 = vsel %vm264, %v2383, 0
    %v2436 = vsel %vm264, %v2385, 0
    %2438 = vmatprep.subr.bf16.mxu0 0
    %2439 = vmatpush1.bf16.xpose.msra.mxu0 %v2436
    %2440 = vmatprep.subr.bf16.mxu0 0
    %2441 = vmatpush1.bf16.xpose.msra.mxu0 0
    %2442 = vmatprep.subr.bf16.mxu0 0
    %2443 = vmatpush1.bf16.xpose.msra.mxu0 0
    %2444 = vmatprep.subr.bf16.mxu0 0
    %2445 = vmatpush1.bf16.xpose.msra.mxu0 0
    %2446 = vmatprep.subr.bf16.mxu0 0
    %2447 = vmatpush1.bf16.xpose.msra.mxu0 0
    %2448 = vmatprep.subr.bf16.mxu0 0
    %2449 = vmatpush1.bf16.xpose.msra.mxu0 0
    %2450 = vmatprep.subr.bf16.mxu0 0
    %2451 = vmatpush1.bf16.xpose.msra.mxu0 0
    %2452 = vmatprep.subr.bf16.mxu0 0
    %2453 = vmatpush1.bf16.xpose.msra.mxu0 0
    %2454 = vmatprep.subr.bf16.mxu0 0
    %2455 = vmatpush1.bf16.xpose.msra.mxu0 0
    %2456 = vmatprep.subr.bf16.mxu0 0
    %2457 = vmatpush1.bf16.xpose.msra.mxu0 0
    %2458 = vmatprep.subr.bf16.mxu0 0
    %2459 = vmatpush1.bf16.xpose.msra.mxu0 0
    %2460 = vmatprep.subr.bf16.mxu0 0
    %2461 = vmatpush1.bf16.xpose.msra.mxu0 0
    %2462 = vmatprep.subr.bf16.mxu0 0
    %2463 = vmatpush1.bf16.xpose.msra.mxu0 0
    %2464 = vmatprep.subr.bf16.mxu0 0
    %2465 = vmatpush1.bf16.xpose.msra.mxu0 0
    %2466 = vmatprep.subr.bf16.mxu0 0
    %2467 = vmatpush1.bf16.xpose.msra.mxu0 0
    %2468 = vmatprep.subr.bf16.mxu0 0
    %2469 = vmatpush1.bf16.xpose.msra.mxu0 0
    %2470 = vmatprep.mubr.bf16.mxu0 0
    %2471 = vmatmul.mubr.bf16.gmra.mrb[0].mxu0 %v2433
    %v2472 = vpop.f32.mrb[0].mxu0
    %v2473 = vadd.f32 %v53, %v2472
    %v2474 = vpop.f32.mrb[0].mxu0
    %v2475 = vpop.f32.mrb[0].mxu0
    %v2476 = vpop.f32.mrb[0].mxu0
    %2477 = vdwg.mxu0
    %v2478 = vsel %vm264, %v2427, -inf
    %2479 = vmax.xlane.f32.xlu0 %v2478
    %v2480 = vpop.xlane.xlu0 %2479
    %v2481 = vsel %vm264, %v2473, -inf
    %2482 = vmax.xlane.f32.xlu0 %v2481
    %v2483 = vpop.xlane.xlu0 %2482
    %v2484 = vsub.f32 %v2427, %v2480
    %v2485 = vsub.f32 %v2473, %v2483
    %v2486 = vmul.f32 %v2484, 1.442695
    %v2487 = vpow.pop %v2486
    %v2488 = vmul.f32 %v2485, 1.442695
    %v2489 = vpow.pop %v2488
    %v2490 = vsel %vm264, %v2487, 0.0
    %2491 = vadd.xlane.f32.xlu0 %v2490
    %v2492 = vpop.xlane.xlu0 %2491
    %v2493 = vsel %vm264, %v2489, 0.0
    %2494 = vadd.xlane.f32.xlu0 %v2493
    %v2495 = vpop.xlane.xlu0 %2494
    %v2496 = vrcp.pop %v2492
    %v2497 = vrcp.pop %v2495
    %v2498 = vmul.f32 %v2487, %v2496
    %v2499 = vmul.f32 %v2489, %v2497
    %v2500 = vpack.c.bf16 %v2498, %v2498
    %v2501 = vpack.c.bf16 %v2499, %v2499
    %v2502 = vpack.c.bf16 %v2376, %v2376
    %v2503 = vpack.c.bf16 %v2379, %v2379
    %v2505 = vsel %vm264, %v2500, 0
    %v2508 = vsel %vm386, %v2502, 0
    %2510 = vmatprep.subr.bf16.mxu0 0
    %2511 = vmatpush1.bf16.msra.mxu0 %v2508
    %2512 = vmatprep.subr.bf16.mxu0 0
    %2513 = vmatpush1.bf16.msra.mxu0 0
    %2514 = vmatprep.subr.bf16.mxu0 0
    %2515 = vmatpush1.bf16.msra.mxu0 0
    %2516 = vmatprep.subr.bf16.mxu0 0
    %2517 = vmatpush1.bf16.msra.mxu0 0
    %2518 = vmatprep.subr.bf16.mxu0 0
    %2519 = vmatpush1.bf16.msra.mxu0 0
    %2520 = vmatprep.subr.bf16.mxu0 0
    %2521 = vmatpush1.bf16.msra.mxu0 0
    %2522 = vmatprep.subr.bf16.mxu0 0
    %2523 = vmatpush1.bf16.msra.mxu0 0
    %2524 = vmatprep.subr.bf16.mxu0 0
    %2525 = vmatpush1.bf16.msra.mxu0 0
    %2526 = vmatprep.subr.bf16.mxu0 0
    %2527 = vmatpush1.bf16.msra.mxu0 0
    %2528 = vmatprep.subr.bf16.mxu0 0
    %2529 = vmatpush1.bf16.msra.mxu0 0
    %2530 = vmatprep.subr.bf16.mxu0 0
    %2531 = vmatpush1.bf16.msra.mxu0 0
    %2532 = vmatprep.subr.bf16.mxu0 0
    %2533 = vmatpush1.bf16.msra.mxu0 0
    %2534 = vmatprep.subr.bf16.mxu0 0
    %2535 = vmatpush1.bf16.msra.mxu0 0
    %2536 = vmatprep.subr.bf16.mxu0 0
    %2537 = vmatpush1.bf16.msra.mxu0 0
    %2538 = vmatprep.subr.bf16.mxu0 0
    %2539 = vmatpush1.bf16.msra.mxu0 0
    %2540 = vmatprep.subr.bf16.mxu0 0
    %2541 = vmatpush1.bf16.msra.mxu0 0
    %2542 = vmatprep.mubr.bf16.mxu0 0
    %2543 = vmatmul.mubr.bf16.gmra.mrb[0].mxu0 %v2505
    %v2544 = vpop.f32.mrb[0].mxu0
    %v2545 = vadd.f32 0.0, %v2544
    %v2546 = vpop.f32.mrb[0].mxu0
    %v2547 = vpop.f32.mrb[0].mxu0
    %v2548 = vpop.f32.mrb[0].mxu0
    %2549 = vdwg.mxu0
    %v2551 = vsel %vm264, %v2501, 0
    %v2554 = vsel %vm386, %v2503, 0
    %2556 = vmatprep.subr.bf16.mxu0 0
    %2557 = vmatpush1.bf16.msra.mxu0 %v2554
    %2558 = vmatprep.subr.bf16.mxu0 0
    %2559 = vmatpush1.bf16.msra.mxu0 0
    %2560 = vmatprep.subr.bf16.mxu0 0
    %2561 = vmatpush1.bf16.msra.mxu0 0
    %2562 = vmatprep.subr.bf16.mxu0 0
    %2563 = vmatpush1.bf16.msra.mxu0 0
    %2564 = vmatprep.subr.bf16.mxu0 0
    %2565 = vmatpush1.bf16.msra.mxu0 0
    %2566 = vmatprep.subr.bf16.mxu0 0
    %2567 = vmatpush1.bf16.msra.mxu0 0
    %2568 = vmatprep.subr.bf16.mxu0 0
    %2569 = vmatpush1.bf16.msra.mxu0 0
    %2570 = vmatprep.subr.bf16.mxu0 0
    %2571 = vmatpush1.bf16.msra.mxu0 0
    %2572 = vmatprep.subr.bf16.mxu0 0
    %2573 = vmatpush1.bf16.msra.mxu0 0
    %2574 = vmatprep.subr.bf16.mxu0 0
    %2575 = vmatpush1.bf16.msra.mxu0 0
    %2576 = vmatprep.subr.bf16.mxu0 0
    %2577 = vmatpush1.bf16.msra.mxu0 0
    %2578 = vmatprep.subr.bf16.mxu0 0
    %2579 = vmatpush1.bf16.msra.mxu0 0
    %2580 = vmatprep.subr.bf16.mxu0 0
    %2581 = vmatpush1.bf16.msra.mxu0 0
    %2582 = vmatprep.subr.bf16.mxu0 0
    %2583 = vmatpush1.bf16.msra.mxu0 0
    %2584 = vmatprep.subr.bf16.mxu0 0
    %2585 = vmatpush1.bf16.msra.mxu0 0
    %2586 = vmatprep.subr.bf16.mxu0 0
    %2587 = vmatpush1.bf16.msra.mxu0 0
    %2588 = vmatprep.mubr.bf16.mxu0 0
    %2589 = vmatmul.mubr.bf16.gmra.mrb[0].mxu0 %v2551
    %v2590 = vpop.f32.mrb[0].mxu0
    %v2591 = vadd.f32 0.0, %v2590
    %v2592 = vpop.f32.mrb[0].mxu0
    %v2593 = vpop.f32.mrb[0].mxu0
    %v2594 = vpop.f32.mrb[0].mxu0
    %2595 = vdwg.mxu0
    %v2596 = vpack.c.bf16 %v2591, %v2545
    %s2597 = scalar_lea.vmem %s3, 16
    %v2598 = vld [vmem:[%s2597] sm:$0xf]
    %s2599 = scalar_lea.vmem %s2, 208
    %v2600 = vld [vmem:[%s2599] sm:$0xf]
    %v2601 = vld [vmem:[%s2599 + $0x4] sm:$0xf]
    %v2602 = vld [vmem:[%s2599 + $0x8] sm:$0xf]
    %v2603 = vld [vmem:[%s2599 + $0xc] sm:$0xf]
    %s2604 = scalar_lea.vmem %s2, 272
    %v2605 = vld [vmem:[%s2604] sm:$0xf]
    %v2606 = vld [vmem:[%s2604 + $0x4] sm:$0xf]
    %v2607 = vld [vmem:[%s2604 + $0x8] sm:$0xf]
    %v2608 = vld [vmem:[%s2604 + $0xc] sm:$0xf]
    %s2609 = scalar_lea.vmem %s2, 336
    %v2610 = vld [vmem:[%s2609] sm:$0xf]
    %v2611 = vld [vmem:[%s2609 + $0x4] sm:$0xf]
    %v2612 = vld [vmem:[%s2609 + $0x8] sm:$0xf]
    %v2613 = vld [vmem:[%s2609 + $0xc] sm:$0xf]
    %s2614 = scalar_lea.vmem %s6, 13
    %v2615 = vld [vmem:[%s2614] sm:$0x1]
    %s2616 = scalar_lea.vmem %s6, 17
    %v2617 = vld [vmem:[%s2616] sm:$0x1]
    %s2618 = scalar_lea.vmem %s6, 21
    %v2619 = vld [vmem:[%s2618] sm:$0x1]
    %v2621 = vlaneseq
    %v2622 = vshrl.u32 %v2621, 7
    %v2623 = vsub.s32 0, %v2622
    %v2624 = vrot.slane %v2615, %v2623
    %v2630 = vunpack.c.l.b16 %v2600
    %v2631 = vunpack.c.l.b16 %v2601
    %v2632 = vunpack.c.l.b16 %v2602
    %v2633 = vunpack.c.l.b16 %v2603
    %v2634 = vpack.c.b16 %v2631, %v2630
    %v2635 = vpack.c.b16 %v2633, %v2632
    %2638 = vmatprep.subr.bf16.mxu0 0
    %2639 = vmatpush1.bf16.msra.mxu0 %v2634
    %2640 = vmatprep.subr.bf16.mxu0 0
    %2641 = vmatpush1.bf16.msra.mxu0 %v2635
    %2642 = vmatprep.subr.bf16.mxu0 0
    %2643 = vmatpush1.bf16.msra.mxu0 0
    %2644 = vmatprep.subr.bf16.mxu0 0
    %2645 = vmatpush1.bf16.msra.mxu0 0
    %2646 = vmatprep.subr.bf16.mxu0 0
    %2647 = vmatpush1.bf16.msra.mxu0 0
    %2648 = vmatprep.subr.bf16.mxu0 0
    %2649 = vmatpush1.bf16.msra.mxu0 0
    %2650 = vmatprep.subr.bf16.mxu0 0
    %2651 = vmatpush1.bf16.msra.mxu0 0
    %2652 = vmatprep.subr.bf16.mxu0 0
    %2653 = vmatpush1.bf16.msra.mxu0 0
    %2654 = vmatprep.subr.bf16.mxu0 0
    %2655 = vmatpush1.bf16.msra.mxu0 0
    %2656 = vmatprep.subr.bf16.mxu0 0
    %2657 = vmatpush1.bf16.msra.mxu0 0
    %2658 = vmatprep.subr.bf16.mxu0 0
    %2659 = vmatpush1.bf16.msra.mxu0 0
    %2660 = vmatprep.subr.bf16.mxu0 0
    %2661 = vmatpush1.bf16.msra.mxu0 0
    %2662 = vmatprep.subr.bf16.mxu0 0
    %2663 = vmatpush1.bf16.msra.mxu0 0
    %2664 = vmatprep.subr.bf16.mxu0 0
    %2665 = vmatpush1.bf16.msra.mxu0 0
    %2666 = vmatprep.subr.bf16.mxu0 0
    %2667 = vmatpush1.bf16.msra.mxu0 0
    %2668 = vmatprep.subr.bf16.mxu0 0
    %2669 = vmatpush1.bf16.msra.mxu0 0
    %2670 = vmatprep.mubr.bf16.mxu0 0
    %2671 = vmatmul.mubr.bf16.gmra.mrb[0].mxu0 %v2219
    %v2672 = vpop.f32.mrb[0].mxu0
    %v2673 = vadd.f32 %v2624, %v2672
    %v2674 = vpop.f32.mrb[0].mxu0
    %v2675 = vpop.f32.mrb[0].mxu0
    %v2676 = vadd.f32 %v2624, %v2675
    %v2677 = vpop.f32.mrb[0].mxu0
    %2678 = vdwg.mxu0
    %v2679 = vmul.f32 %v2673, 0.35355338
    %v2680 = vmul.f32 %v2676, 0.35355338
    %v2682 = vlaneseq
    %v2683 = vshrl.u32 %v2682, 7
    %v2684 = vsub.s32 0, %v2683
    %v2685 = vrot.slane %v2617, %v2684
    %v2691 = vunpack.c.l.b16 %v2605
    %v2692 = vunpack.c.l.b16 %v2606
    %v2693 = vunpack.c.l.b16 %v2607
    %v2694 = vunpack.c.l.b16 %v2608
    %v2695 = vpack.c.b16 %v2692, %v2691
    %v2696 = vpack.c.b16 %v2694, %v2693
    %2699 = vmatprep.subr.bf16.mxu0 0
    %2700 = vmatpush1.bf16.msra.mxu0 %v2695
    %2701 = vmatprep.subr.bf16.mxu0 0
    %2702 = vmatpush1.bf16.msra.mxu0 %v2696
    %2703 = vmatprep.subr.bf16.mxu0 0
    %2704 = vmatpush1.bf16.msra.mxu0 0
    %2705 = vmatprep.subr.bf16.mxu0 0
    %2706 = vmatpush1.bf16.msra.mxu0 0
    %2707 = vmatprep.subr.bf16.mxu0 0
    %2708 = vmatpush1.bf16.msra.mxu0 0
    %2709 = vmatprep.subr.bf16.mxu0 0
    %2710 = vmatpush1.bf16.msra.mxu0 0
    %2711 = vmatprep.subr.bf16.mxu0 0
    %2712 = vmatpush1.bf16.msra.mxu0 0
    %2713 = vmatprep.subr.bf16.mxu0 0
    %2714 = vmatpush1.bf16.msra.mxu0 0
    %2715 = vmatprep.subr.bf16.mxu0 0
    %2716 = vmatpush1.bf16.msra.mxu0 0
    %2717 = vmatprep.subr.bf16.mxu0 0
    %2718 = vmatpush1.bf16.msra.mxu0 0
    %2719 = vmatprep.subr.bf16.mxu0 0
    %2720 = vmatpush1.bf16.msra.mxu0 0
    %2721 = vmatprep.subr.bf16.mxu0 0
    %2722 = vmatpush1.bf16.msra.mxu0 0
    %2723 = vmatprep.subr.bf16.mxu0 0
    %2724 = vmatpush1.bf16.msra.mxu0 0
    %2725 = vmatprep.subr.bf16.mxu0 0
    %2726 = vmatpush1.bf16.msra.mxu0 0
    %2727 = vmatprep.subr.bf16.mxu0 0
    %2728 = vmatpush1.bf16.msra.mxu0 0
    %2729 = vmatprep.subr.bf16.mxu0 0
    %2730 = vmatpush1.bf16.msra.mxu0 0
    %2731 = vmatprep.mubr.bf16.mxu0 0
    %2732 = vmatmul.mubr.bf16.gmra.mrb[0].mxu0 %v2219
    %v2733 = vpop.f32.mrb[0].mxu0
    %v2734 = vadd.f32 %v2685, %v2733
    %v2735 = vpop.f32.mrb[0].mxu0
    %v2736 = vpop.f32.mrb[0].mxu0
    %v2737 = vadd.f32 %v2685, %v2736
    %v2738 = vpop.f32.mrb[0].mxu0
    %2739 = vdwg.mxu0
    %v2741 = vlaneseq
    %v2742 = vshrl.u32 %v2741, 7
    %v2743 = vsub.s32 0, %v2742
    %v2744 = vrot.slane %v2619, %v2743
    %v2750 = vunpack.c.l.b16 %v2610
    %v2751 = vunpack.c.l.b16 %v2611
    %v2752 = vunpack.c.l.b16 %v2612
    %v2753 = vunpack.c.l.b16 %v2613
    %v2754 = vpack.c.b16 %v2751, %v2750
    %v2755 = vpack.c.b16 %v2753, %v2752
    %2758 = vmatprep.subr.bf16.mxu0 0
    %2759 = vmatpush1.bf16.msra.mxu0 %v2754
    %2760 = vmatprep.subr.bf16.mxu0 0
    %2761 = vmatpush1.bf16.msra.mxu0 %v2755
    %2762 = vmatprep.subr.bf16.mxu0 0
    %2763 = vmatpush1.bf16.msra.mxu0 0
    %2764 = vmatprep.subr.bf16.mxu0 0
    %2765 = vmatpush1.bf16.msra.mxu0 0
    %2766 = vmatprep.subr.bf16.mxu0 0
    %2767 = vmatpush1.bf16.msra.mxu0 0
    %2768 = vmatprep.subr.bf16.mxu0 0
    %2769 = vmatpush1.bf16.msra.mxu0 0
    %2770 = vmatprep.subr.bf16.mxu0 0
    %2771 = vmatpush1.bf16.msra.mxu0 0
    %2772 = vmatprep.subr.bf16.mxu0 0
    %2773 = vmatpush1.bf16.msra.mxu0 0
    %2774 = vmatprep.subr.bf16.mxu0 0
    %2775 = vmatpush1.bf16.msra.mxu0 0
    %2776 = vmatprep.subr.bf16.mxu0 0
    %2777 = vmatpush1.bf16.msra.mxu0 0
    %2778 = vmatprep.subr.bf16.mxu0 0
    %2779 = vmatpush1.bf16.msra.mxu0 0
    %2780 = vmatprep.subr.bf16.mxu0 0
    %2781 = vmatpush1.bf16.msra.mxu0 0
    %2782 = vmatprep.subr.bf16.mxu0 0
    %2783 = vmatpush1.bf16.msra.mxu0 0
    %2784 = vmatprep.subr.bf16.mxu0 0
    %2785 = vmatpush1.bf16.msra.mxu0 0
    %2786 = vmatprep.subr.bf16.mxu0 0
    %2787 = vmatpush1.bf16.msra.mxu0 0
    %2788 = vmatprep.subr.bf16.mxu0 0
    %2789 = vmatpush1.bf16.msra.mxu0 0
    %2790 = vmatprep.mubr.bf16.mxu0 0
    %2791 = vmatmul.mubr.bf16.gmra.mrb[0].mxu0 %v2219
    %v2792 = vpop.f32.mrb[0].mxu0
    %v2793 = vadd.f32 %v2744, %v2792
    %v2794 = vpop.f32.mrb[0].mxu0
    %v2795 = vpop.f32.mrb[0].mxu0
    %v2796 = vadd.f32 %v2744, %v2795
    %v2797 = vpop.f32.mrb[0].mxu0
    %2798 = vdwg.mxu0
    %v2799 = vpack.c.bf16 %v2679, %v2679
    %v2800 = vpack.c.bf16 %v2680, %v2680
    %v2801 = vpack.c.bf16 %v2734, %v2734
    %v2802 = vpack.c.bf16 %v2737, %v2737
    %v2804 = vsel %vm264, %v2799, 0
    %v2807 = vsel %vm264, %v2801, 0
    %2809 = vmatprep.subr.bf16.mxu0 0
    %2810 = vmatpush1.bf16.xpose.msra.mxu0 %v2807
    %2811 = vmatprep.subr.bf16.mxu0 0
    %2812 = vmatpush1.bf16.xpose.msra.mxu0 0
    %2813 = vmatprep.subr.bf16.mxu0 0
    %2814 = vmatpush1.bf16.xpose.msra.mxu0 0
    %2815 = vmatprep.subr.bf16.mxu0 0
    %2816 = vmatpush1.bf16.xpose.msra.mxu0 0
    %2817 = vmatprep.subr.bf16.mxu0 0
    %2818 = vmatpush1.bf16.xpose.msra.mxu0 0
    %2819 = vmatprep.subr.bf16.mxu0 0
    %2820 = vmatpush1.bf16.xpose.msra.mxu0 0
    %2821 = vmatprep.subr.bf16.mxu0 0
    %2822 = vmatpush1.bf16.xpose.msra.mxu0 0
    %2823 = vmatprep.subr.bf16.mxu0 0
    %2824 = vmatpush1.bf16.xpose.msra.mxu0 0
    %2825 = vmatprep.subr.bf16.mxu0 0
    %2826 = vmatpush1.bf16.xpose.msra.mxu0 0
    %2827 = vmatprep.subr.bf16.mxu0 0
    %2828 = vmatpush1.bf16.xpose.msra.mxu0 0
    %2829 = vmatprep.subr.bf16.mxu0 0
    %2830 = vmatpush1.bf16.xpose.msra.mxu0 0
    %2831 = vmatprep.subr.bf16.mxu0 0
    %2832 = vmatpush1.bf16.xpose.msra.mxu0 0
    %2833 = vmatprep.subr.bf16.mxu0 0
    %2834 = vmatpush1.bf16.xpose.msra.mxu0 0
    %2835 = vmatprep.subr.bf16.mxu0 0
    %2836 = vmatpush1.bf16.xpose.msra.mxu0 0
    %2837 = vmatprep.subr.bf16.mxu0 0
    %2838 = vmatpush1.bf16.xpose.msra.mxu0 0
    %2839 = vmatprep.subr.bf16.mxu0 0
    %2840 = vmatpush1.bf16.xpose.msra.mxu0 0
    %2841 = vmatprep.mubr.bf16.mxu0 0
    %2842 = vmatmul.mubr.bf16.gmra.mrb[0].mxu0 %v2804
    %v2843 = vpop.f32.mrb[0].mxu0
    %v2844 = vadd.f32 %v49, %v2843
    %v2845 = vpop.f32.mrb[0].mxu0
    %v2846 = vpop.f32.mrb[0].mxu0
    %v2847 = vpop.f32.mrb[0].mxu0
    %2848 = vdwg.mxu0
    %v2850 = vsel %vm264, %v2800, 0
    %v2853 = vsel %vm264, %v2802, 0
    %2855 = vmatprep.subr.bf16.mxu0 0
    %2856 = vmatpush1.bf16.xpose.msra.mxu0 %v2853
    %2857 = vmatprep.subr.bf16.mxu0 0
    %2858 = vmatpush1.bf16.xpose.msra.mxu0 0
    %2859 = vmatprep.subr.bf16.mxu0 0
    %2860 = vmatpush1.bf16.xpose.msra.mxu0 0
    %2861 = vmatprep.subr.bf16.mxu0 0
    %2862 = vmatpush1.bf16.xpose.msra.mxu0 0
    %2863 = vmatprep.subr.bf16.mxu0 0
    %2864 = vmatpush1.bf16.xpose.msra.mxu0 0
    %2865 = vmatprep.subr.bf16.mxu0 0
    %2866 = vmatpush1.bf16.xpose.msra.mxu0 0
    %2867 = vmatprep.subr.bf16.mxu0 0
    %2868 = vmatpush1.bf16.xpose.msra.mxu0 0
    %2869 = vmatprep.subr.bf16.mxu0 0
    %2870 = vmatpush1.bf16.xpose.msra.mxu0 0
    %2871 = vmatprep.subr.bf16.mxu0 0
    %2872 = vmatpush1.bf16.xpose.msra.mxu0 0
    %2873 = vmatprep.subr.bf16.mxu0 0
    %2874 = vmatpush1.bf16.xpose.msra.mxu0 0
    %2875 = vmatprep.subr.bf16.mxu0 0
    %2876 = vmatpush1.bf16.xpose.msra.mxu0 0
    %2877 = vmatprep.subr.bf16.mxu0 0
    %2878 = vmatpush1.bf16.xpose.msra.mxu0 0
    %2879 = vmatprep.subr.bf16.mxu0 0
    %2880 = vmatpush1.bf16.xpose.msra.mxu0 0
    %2881 = vmatprep.subr.bf16.mxu0 0
    %2882 = vmatpush1.bf16.xpose.msra.mxu0 0
    %2883 = vmatprep.subr.bf16.mxu0 0
    %2884 = vmatpush1.bf16.xpose.msra.mxu0 0
    %2885 = vmatprep.subr.bf16.mxu0 0
    %2886 = vmatpush1.bf16.xpose.msra.mxu0 0
    %2887 = vmatprep.mubr.bf16.mxu0 0
    %2888 = vmatmul.mubr.bf16.gmra.mrb[0].mxu0 %v2850
    %v2889 = vpop.f32.mrb[0].mxu0
    %v2890 = vadd.f32 %v53, %v2889
    %v2891 = vpop.f32.mrb[0].mxu0
    %v2892 = vpop.f32.mrb[0].mxu0
    %v2893 = vpop.f32.mrb[0].mxu0
    %2894 = vdwg.mxu0
    %v2895 = vsel %vm264, %v2844, -inf
    %2896 = vmax.xlane.f32.xlu0 %v2895
    %v2897 = vpop.xlane.xlu0 %2896
    %v2898 = vsel %vm264, %v2890, -inf
    %2899 = vmax.xlane.f32.xlu0 %v2898
    %v2900 = vpop.xlane.xlu0 %2899
    %v2901 = vsub.f32 %v2844, %v2897
    %v2902 = vsub.f32 %v2890, %v2900
    %v2903 = vmul.f32 %v2901, 1.442695
    %v2904 = vpow.pop %v2903
    %v2905 = vmul.f32 %v2902, 1.442695
    %v2906 = vpow.pop %v2905
    %v2907 = vsel %vm264, %v2904, 0.0
    %2908 = vadd.xlane.f32.xlu0 %v2907
    %v2909 = vpop.xlane.xlu0 %2908
    %v2910 = vsel %vm264, %v2906, 0.0
    %2911 = vadd.xlane.f32.xlu0 %v2910
    %v2912 = vpop.xlane.xlu0 %2911
    %v2913 = vrcp.pop %v2909
    %v2914 = vrcp.pop %v2912
    %v2915 = vmul.f32 %v2904, %v2913
    %v2916 = vmul.f32 %v2906, %v2914
    %v2917 = vpack.c.bf16 %v2915, %v2915
    %v2918 = vpack.c.bf16 %v2916, %v2916
    %v2919 = vpack.c.bf16 %v2793, %v2793
    %v2920 = vpack.c.bf16 %v2796, %v2796
    %v2922 = vsel %vm264, %v2917, 0
    %v2925 = vsel %vm386, %v2919, 0
    %2927 = vmatprep.subr.bf16.mxu0 0
    %2928 = vmatpush1.bf16.msra.mxu0 %v2925
    %2929 = vmatprep.subr.bf16.mxu0 0
    %2930 = vmatpush1.bf16.msra.mxu0 0
    %2931 = vmatprep.subr.bf16.mxu0 0
    %2932 = vmatpush1.bf16.msra.mxu0 0
    %2933 = vmatprep.subr.bf16.mxu0 0
    %2934 = vmatpush1.bf16.msra.mxu0 0
    %2935 = vmatprep.subr.bf16.mxu0 0
    %2936 = vmatpush1.bf16.msra.mxu0 0
    %2937 = vmatprep.subr.bf16.mxu0 0
    %2938 = vmatpush1.bf16.msra.mxu0 0
    %2939 = vmatprep.subr.bf16.mxu0 0
    %2940 = vmatpush1.bf16.msra.mxu0 0
    %2941 = vmatprep.subr.bf16.mxu0 0
    %2942 = vmatpush1.bf16.msra.mxu0 0
    %2943 = vmatprep.subr.bf16.mxu0 0
    %2944 = vmatpush1.bf16.msra.mxu0 0
    %2945 = vmatprep.subr.bf16.mxu0 0
    %2946 = vmatpush1.bf16.msra.mxu0 0
    %2947 = vmatprep.subr.bf16.mxu0 0
    %2948 = vmatpush1.bf16.msra.mxu0 0
    %2949 = vmatprep.subr.bf16.mxu0 0
    %2950 = vmatpush1.bf16.msra.mxu0 0
    %2951 = vmatprep.subr.bf16.mxu0 0
    %2952 = vmatpush1.bf16.msra.mxu0 0
    %2953 = vmatprep.subr.bf16.mxu0 0
    %2954 = vmatpush1.bf16.msra.mxu0 0
    %2955 = vmatprep.subr.bf16.mxu0 0
    %2956 = vmatpush1.bf16.msra.mxu0 0
    %2957 = vmatprep.subr.bf16.mxu0 0
    %2958 = vmatpush1.bf16.msra.mxu0 0
    %2959 = vmatprep.mubr.bf16.mxu0 0
    %2960 = vmatmul.mubr.bf16.gmra.mrb[0].mxu0 %v2922
    %v2961 = vpop.f32.mrb[0].mxu0
    %v2962 = vadd.f32 0.0, %v2961
    %v2963 = vpop.f32.mrb[0].mxu0
    %v2964 = vpop.f32.mrb[0].mxu0
    %v2965 = vpop.f32.mrb[0].mxu0
    %2966 = vdwg.mxu0
    %v2968 = vsel %vm264, %v2918, 0
    %v2971 = vsel %vm386, %v2920, 0
    %2973 = vmatprep.subr.bf16.mxu0 0
    %2974 = vmatpush1.bf16.msra.mxu0 %v2971
    %2975 = vmatprep.subr.bf16.mxu0 0
    %2976 = vmatpush1.bf16.msra.mxu0 0
    %2977 = vmatprep.subr.bf16.mxu0 0
    %2978 = vmatpush1.bf16.msra.mxu0 0
    %2979 = vmatprep.subr.bf16.mxu0 0
    %2980 = vmatpush1.bf16.msra.mxu0 0
    %2981 = vmatprep.subr.bf16.mxu0 0
    %2982 = vmatpush1.bf16.msra.mxu0 0
    %2983 = vmatprep.subr.bf16.mxu0 0
    %2984 = vmatpush1.bf16.msra.mxu0 0
    %2985 = vmatprep.subr.bf16.mxu0 0
    %2986 = vmatpush1.bf16.msra.mxu0 0
    %2987 = vmatprep.subr.bf16.mxu0 0
    %2988 = vmatpush1.bf16.msra.mxu0 0
    %2989 = vmatprep.subr.bf16.mxu0 0
    %2990 = vmatpush1.bf16.msra.mxu0 0
    %2991 = vmatprep.subr.bf16.mxu0 0
    %2992 = vmatpush1.bf16.msra.mxu0 0
    %2993 = vmatprep.subr.bf16.mxu0 0
    %2994 = vmatpush1.bf16.msra.mxu0 0
    %2995 = vmatprep.subr.bf16.mxu0 0
    %2996 = vmatpush1.bf16.msra.mxu0 0
    %2997 = vmatprep.subr.bf16.mxu0 0
    %2998 = vmatpush1.bf16.msra.mxu0 0
    %2999 = vmatprep.subr.bf16.mxu0 0
    %3000 = vmatpush1.bf16.msra.mxu0 0
    %3001 = vmatprep.subr.bf16.mxu0 0
    %3002 = vmatpush1.bf16.msra.mxu0 0
    %3003 = vmatprep.subr.bf16.mxu0 0
    %3004 = vmatpush1.bf16.msra.mxu0 0
    %3005 = vmatprep.mubr.bf16.mxu0 0
    %3006 = vmatmul.mubr.bf16.gmra.mrb[0].mxu0 %v2968
    %v3007 = vpop.f32.mrb[0].mxu0
    %v3008 = vadd.f32 0.0, %v3007
    %v3009 = vpop.f32.mrb[0].mxu0
    %v3010 = vpop.f32.mrb[0].mxu0
    %v3011 = vpop.f32.mrb[0].mxu0
    %3012 = vdwg.mxu0
    %v3013 = vpack.c.bf16 %v3008, %v2962
    %s3014 = scalar_lea.vmem %s3, 20
    %v3015 = vld [vmem:[%s3014] sm:$0xf]
    %v3017 = vsel %vm264, %v3013, 0
    %v3020 = vsel %vm386, %v3015, 0
    %3022 = vmatprep.subr.bf16.mxu0 0
    %3023 = vmatpush1.bf16.msra.mxu0 %v3020
    %3024 = vmatprep.subr.bf16.mxu0 0
    %3025 = vmatpush1.bf16.msra.mxu0 0
    %3026 = vmatprep.subr.bf16.mxu0 0
    %3027 = vmatpush1.bf16.msra.mxu0 0
    %3028 = vmatprep.subr.bf16.mxu0 0
    %3029 = vmatpush1.bf16.msra.mxu0 0
    %3030 = vmatprep.subr.bf16.mxu0 0
    %3031 = vmatpush1.bf16.msra.mxu0 0
    %3032 = vmatprep.subr.bf16.mxu0 0
    %3033 = vmatpush1.bf16.msra.mxu0 0
    %3034 = vmatprep.subr.bf16.mxu0 0
    %3035 = vmatpush1.bf16.msra.mxu0 0
    %3036 = vmatprep.subr.bf16.mxu0 0
    %3037 = vmatpush1.bf16.msra.mxu0 0
    %3038 = vmatprep.subr.bf16.mxu0 0
    %3039 = vmatpush1.bf16.msra.mxu0 0
    %3040 = vmatprep.subr.bf16.mxu0 0
    %3041 = vmatpush1.bf16.msra.mxu0 0
    %3042 = vmatprep.subr.bf16.mxu0 0
    %3043 = vmatpush1.bf16.msra.mxu0 0
    %3044 = vmatprep.subr.bf16.mxu0 0
    %3045 = vmatpush1.bf16.msra.mxu0 0
    %3046 = vmatprep.subr.bf16.mxu0 0
    %3047 = vmatpush1.bf16.msra.mxu0 0
    %3048 = vmatprep.subr.bf16.mxu0 0
    %3049 = vmatpush1.bf16.msra.mxu0 0
    %3050 = vmatprep.subr.bf16.mxu0 0
    %3051 = vmatpush1.bf16.msra.mxu0 0
    %3052 = vmatprep.subr.bf16.mxu0 0
    %3053 = vmatpush1.bf16.msra.mxu0 0
    %3054 = vmatprep.mubr.bf16.mxu0 0
    %3055 = vmatmul.mubr.bf16.gmra.mrb[0].mxu0 %v3017
    %v3056 = vpop.f32.mrb[0].mxu0
    %v3057 = vadd.f32 0.0, %v3056
    %v3058 = vpop.f32.mrb[0].mxu0
    %v3059 = vpop.f32.mrb[0].mxu0
    %v3060 = vadd.f32 0.0, %v3059
    %v3061 = vpop.f32.mrb[0].mxu0
    %3062 = vdwg.mxu0
    %v3064 = vsel %vm264, %v2596, 0
    %v3067 = vsel %vm386, %v2598, 0
    %3069 = vmatprep.subr.bf16.mxu0 0
    %3070 = vmatpush1.bf16.msra.mxu0 %v3067
    %3071 = vmatprep.subr.bf16.mxu0 0
    %3072 = vmatpush1.bf16.msra.mxu0 0
    %3073 = vmatprep.subr.bf16.mxu0 0
    %3074 = vmatpush1.bf16.msra.mxu0 0
    %3075 = vmatprep.subr.bf16.mxu0 0
    %3076 = vmatpush1.bf16.msra.mxu0 0
    %3077 = vmatprep.subr.bf16.mxu0 0
    %3078 = vmatpush1.bf16.msra.mxu0 0
    %3079 = vmatprep.subr.bf16.mxu0 0
    %3080 = vmatpush1.bf16.msra.mxu0 0
    %3081 = vmatprep.subr.bf16.mxu0 0
    %3082 = vmatpush1.bf16.msra.mxu0 0
    %3083 = vmatprep.subr.bf16.mxu0 0
    %3084 = vmatpush1.bf16.msra.mxu0 0
    %3085 = vmatprep.subr.bf16.mxu0 0
    %3086 = vmatpush1.bf16.msra.mxu0 0
    %3087 = vmatprep.subr.bf16.mxu0 0
    %3088 = vmatpush1.bf16.msra.mxu0 0
    %3089 = vmatprep.subr.bf16.mxu0 0
    %3090 = vmatpush1.bf16.msra.mxu0 0
    %3091 = vmatprep.subr.bf16.mxu0 0
    %3092 = vmatpush1.bf16.msra.mxu0 0
    %3093 = vmatprep.subr.bf16.mxu0 0
    %3094 = vmatpush1.bf16.msra.mxu0 0
    %3095 = vmatprep.subr.bf16.mxu0 0
    %3096 = vmatpush1.bf16.msra.mxu0 0
    %3097 = vmatprep.subr.bf16.mxu0 0
    %3098 = vmatpush1.bf16.msra.mxu0 0
    %3099 = vmatprep.subr.bf16.mxu0 0
    %3100 = vmatpush1.bf16.msra.mxu0 0
    %3101 = vmatprep.mubr.bf16.mxu0 0
    %3102 = vmatmul.mubr.bf16.gmra.mrb[0].mxu0 %v3064
    %v3103 = vpop.f32.mrb[0].mxu0
    %v3104 = vadd.f32 %v3057, %v3103
    %v3105 = vpop.f32.mrb[0].mxu0
    %v3106 = vpop.f32.mrb[0].mxu0
    %v3107 = vadd.f32 %v3060, %v3106
    %v3108 = vpop.f32.mrb[0].mxu0
    %3109 = vdwg.mxu0
    %s3110 = scalar_lea.vmem %s2, 224
    %v3111 = vld [vmem:[%s3110] sm:$0xf]
    %v3112 = vld [vmem:[%s3110 + $0x4] sm:$0xf]
    %v3113 = vld [vmem:[%s3110 + $0x8] sm:$0xf]
    %v3114 = vld [vmem:[%s3110 + $0xc] sm:$0xf]
    %s3115 = scalar_lea.vmem %s2, 288
    %v3116 = vld [vmem:[%s3115] sm:$0xf]
    %v3117 = vld [vmem:[%s3115 + $0x4] sm:$0xf]
    %v3118 = vld [vmem:[%s3115 + $0x8] sm:$0xf]
    %v3119 = vld [vmem:[%s3115 + $0xc] sm:$0xf]
    %s3120 = scalar_lea.vmem %s2, 352
    %v3121 = vld [vmem:[%s3120] sm:$0xf]
    %v3122 = vld [vmem:[%s3120 + $0x4] sm:$0xf]
    %v3123 = vld [vmem:[%s3120 + $0x8] sm:$0xf]
    %v3124 = vld [vmem:[%s3120 + $0xc] sm:$0xf]
    %s3125 = scalar_lea.vmem %s6, 14
    %v3126 = vld [vmem:[%s3125] sm:$0x1]
    %s3127 = scalar_lea.vmem %s6, 18
    %v3128 = vld [vmem:[%s3127] sm:$0x1]
    %s3129 = scalar_lea.vmem %s6, 22
    %v3130 = vld [vmem:[%s3129] sm:$0x1]
    %v3132 = vlaneseq
    %v3133 = vshrl.u32 %v3132, 7
    %v3134 = vsub.s32 0, %v3133
    %v3135 = vrot.slane %v3126, %v3134
    %v3141 = vunpack.c.l.b16 %v3111
    %v3142 = vunpack.c.l.b16 %v3112
    %v3143 = vunpack.c.l.b16 %v3113
    %v3144 = vunpack.c.l.b16 %v3114
    %v3145 = vpack.c.b16 %v3142, %v3141
    %v3146 = vpack.c.b16 %v3144, %v3143
    %3149 = vmatprep.subr.bf16.mxu0 0
    %3150 = vmatpush1.bf16.msra.mxu0 %v3145
    %3151 = vmatprep.subr.bf16.mxu0 0
    %3152 = vmatpush1.bf16.msra.mxu0 %v3146
    %3153 = vmatprep.subr.bf16.mxu0 0
    %3154 = vmatpush1.bf16.msra.mxu0 0
    %3155 = vmatprep.subr.bf16.mxu0 0
    %3156 = vmatpush1.bf16.msra.mxu0 0
    %3157 = vmatprep.subr.bf16.mxu0 0
    %3158 = vmatpush1.bf16.msra.mxu0 0
    %3159 = vmatprep.subr.bf16.mxu0 0
    %3160 = vmatpush1.bf16.msra.mxu0 0
    %3161 = vmatprep.subr.bf16.mxu0 0
    %3162 = vmatpush1.bf16.msra.mxu0 0
    %3163 = vmatprep.subr.bf16.mxu0 0
    %3164 = vmatpush1.bf16.msra.mxu0 0
    %3165 = vmatprep.subr.bf16.mxu0 0
    %3166 = vmatpush1.bf16.msra.mxu0 0
    %3167 = vmatprep.subr.bf16.mxu0 0
    %3168 = vmatpush1.bf16.msra.mxu0 0
    %3169 = vmatprep.subr.bf16.mxu0 0
    %3170 = vmatpush1.bf16.msra.mxu0 0
    %3171 = vmatprep.subr.bf16.mxu0 0
    %3172 = vmatpush1.bf16.msra.mxu0 0
    %3173 = vmatprep.subr.bf16.mxu0 0
    %3174 = vmatpush1.bf16.msra.mxu0 0
    %3175 = vmatprep.subr.bf16.mxu0 0
    %3176 = vmatpush1.bf16.msra.mxu0 0
    %3177 = vmatprep.subr.bf16.mxu0 0
    %3178 = vmatpush1.bf16.msra.mxu0 0
    %3179 = vmatprep.subr.bf16.mxu0 0
    %3180 = vmatpush1.bf16.msra.mxu0 0
    %3181 = vmatprep.mubr.bf16.mxu0 0
    %3182 = vmatmul.mubr.bf16.gmra.mrb[0].mxu0 %v2219
    %v3183 = vpop.f32.mrb[0].mxu0
    %v3184 = vadd.f32 %v3135, %v3183
    %v3185 = vpop.f32.mrb[0].mxu0
    %v3186 = vpop.f32.mrb[0].mxu0
    %v3187 = vadd.f32 %v3135, %v3186
    %v3188 = vpop.f32.mrb[0].mxu0
    %3189 = vdwg.mxu0
    %v3190 = vmul.f32 %v3184, 0.35355338
    %v3191 = vmul.f32 %v3187, 0.35355338
    %v3193 = vlaneseq
    %v3194 = vshrl.u32 %v3193, 7
    %v3195 = vsub.s32 0, %v3194
    %v3196 = vrot.slane %v3128, %v3195
    %v3202 = vunpack.c.l.b16 %v3116
    %v3203 = vunpack.c.l.b16 %v3117
    %v3204 = vunpack.c.l.b16 %v3118
    %v3205 = vunpack.c.l.b16 %v3119
    %v3206 = vpack.c.b16 %v3203, %v3202
    %v3207 = vpack.c.b16 %v3205, %v3204
    %3210 = vmatprep.subr.bf16.mxu0 0
    %3211 = vmatpush1.bf16.msra.mxu0 %v3206
    %3212 = vmatprep.subr.bf16.mxu0 0
    %3213 = vmatpush1.bf16.msra.mxu0 %v3207
    %3214 = vmatprep.subr.bf16.mxu0 0
    %3215 = vmatpush1.bf16.msra.mxu0 0
    %3216 = vmatprep.subr.bf16.mxu0 0
    %3217 = vmatpush1.bf16.msra.mxu0 0
    %3218 = vmatprep.subr.bf16.mxu0 0
    %3219 = vmatpush1.bf16.msra.mxu0 0
    %3220 = vmatprep.subr.bf16.mxu0 0
    %3221 = vmatpush1.bf16.msra.mxu0 0
    %3222 = vmatprep.subr.bf16.mxu0 0
    %3223 = vmatpush1.bf16.msra.mxu0 0
    %3224 = vmatprep.subr.bf16.mxu0 0
    %3225 = vmatpush1.bf16.msra.mxu0 0
    %3226 = vmatprep.subr.bf16.mxu0 0
    %3227 = vmatpush1.bf16.msra.mxu0 0
    %3228 = vmatprep.subr.bf16.mxu0 0
    %3229 = vmatpush1.bf16.msra.mxu0 0
    %3230 = vmatprep.subr.bf16.mxu0 0
    %3231 = vmatpush1.bf16.msra.mxu0 0
    %3232 = vmatprep.subr.bf16.mxu0 0
    %3233 = vmatpush1.bf16.msra.mxu0 0
    %3234 = vmatprep.subr.bf16.mxu0 0
    %3235 = vmatpush1.bf16.msra.mxu0 0
    %3236 = vmatprep.subr.bf16.mxu0 0
    %3237 = vmatpush1.bf16.msra.mxu0 0
    %3238 = vmatprep.subr.bf16.mxu0 0
    %3239 = vmatpush1.bf16.msra.mxu0 0
    %3240 = vmatprep.subr.bf16.mxu0 0
    %3241 = vmatpush1.bf16.msra.mxu0 0
    %3242 = vmatprep.mubr.bf16.mxu0 0
    %3243 = vmatmul.mubr.bf16.gmra.mrb[0].mxu0 %v2219
    %v3244 = vpop.f32.mrb[0].mxu0
    %v3245 = vadd.f32 %v3196, %v3244
    %v3246 = vpop.f32.mrb[0].mxu0
    %v3247 = vpop.f32.mrb[0].mxu0
    %v3248 = vadd.f32 %v3196, %v3247
    %v3249 = vpop.f32.mrb[0].mxu0
    %3250 = vdwg.mxu0
    %v3252 = vlaneseq
    %v3253 = vshrl.u32 %v3252, 7
    %v3254 = vsub.s32 0, %v3253
    %v3255 = vrot.slane %v3130, %v3254
    %v3261 = vunpack.c.l.b16 %v3121
    %v3262 = vunpack.c.l.b16 %v3122
    %v3263 = vunpack.c.l.b16 %v3123
    %v3264 = vunpack.c.l.b16 %v3124
    %v3265 = vpack.c.b16 %v3262, %v3261
    %v3266 = vpack.c.b16 %v3264, %v3263
    %3269 = vmatprep.subr.bf16.mxu0 0
    %3270 = vmatpush1.bf16.msra.mxu0 %v3265
    %3271 = vmatprep.subr.bf16.mxu0 0
    %3272 = vmatpush1.bf16.msra.mxu0 %v3266
    %3273 = vmatprep.subr.bf16.mxu0 0
    %3274 = vmatpush1.bf16.msra.mxu0 0
    %3275 = vmatprep.subr.bf16.mxu0 0
    %3276 = vmatpush1.bf16.msra.mxu0 0
    %3277 = vmatprep.subr.bf16.mxu0 0
    %3278 = vmatpush1.bf16.msra.mxu0 0
    %3279 = vmatprep.subr.bf16.mxu0 0
    %3280 = vmatpush1.bf16.msra.mxu0 0
    %3281 = vmatprep.subr.bf16.mxu0 0
    %3282 = vmatpush1.bf16.msra.mxu0 0
    %3283 = vmatprep.subr.bf16.mxu0 0
    %3284 = vmatpush1.bf16.msra.mxu0 0
    %3285 = vmatprep.subr.bf16.mxu0 0
    %3286 = vmatpush1.bf16.msra.mxu0 0
    %3287 = vmatprep.subr.bf16.mxu0 0
    %3288 = vmatpush1.bf16.msra.mxu0 0
    %3289 = vmatprep.subr.bf16.mxu0 0
    %3290 = vmatpush1.bf16.msra.mxu0 0
    %3291 = vmatprep.subr.bf16.mxu0 0
    %3292 = vmatpush1.bf16.msra.mxu0 0
    %3293 = vmatprep.subr.bf16.mxu0 0
    %3294 = vmatpush1.bf16.msra.mxu0 0
    %3295 = vmatprep.subr.bf16.mxu0 0
    %3296 = vmatpush1.bf16.msra.mxu0 0
    %3297 = vmatprep.subr.bf16.mxu0 0
    %3298 = vmatpush1.bf16.msra.mxu0 0
    %3299 = vmatprep.subr.bf16.mxu0 0
    %3300 = vmatpush1.bf16.msra.mxu0 0
    %3301 = vmatprep.mubr.bf16.mxu0 0
    %3302 = vmatmul.mubr.bf16.gmra.mrb[0].mxu0 %v2219
    %v3303 = vpop.f32.mrb[0].mxu0
    %v3304 = vadd.f32 %v3255, %v3303
    %v3305 = vpop.f32.mrb[0].mxu0
    %v3306 = vpop.f32.mrb[0].mxu0
    %v3307 = vadd.f32 %v3255, %v3306
    %v3308 = vpop.f32.mrb[0].mxu0
    %3309 = vdwg.mxu0
    %v3310 = vpack.c.bf16 %v3190, %v3190
    %v3311 = vpack.c.bf16 %v3191, %v3191
    %v3312 = vpack.c.bf16 %v3245, %v3245
    %v3313 = vpack.c.bf16 %v3248, %v3248
    %v3315 = vsel %vm264, %v3310, 0
    %v3318 = vsel %vm264, %v3312, 0
    %3320 = vmatprep.subr.bf16.mxu0 0
    %3321 = vmatpush1.bf16.xpose.msra.mxu0 %v3318
    %3322 = vmatprep.subr.bf16.mxu0 0
    %3323 = vmatpush1.bf16.xpose.msra.mxu0 0
    %3324 = vmatprep.subr.bf16.mxu0 0
    %3325 = vmatpush1.bf16.xpose.msra.mxu0 0
    %3326 = vmatprep.subr.bf16.mxu0 0
    %3327 = vmatpush1.bf16.xpose.msra.mxu0 0
    %3328 = vmatprep.subr.bf16.mxu0 0
    %3329 = vmatpush1.bf16.xpose.msra.mxu0 0
    %3330 = vmatprep.subr.bf16.mxu0 0
    %3331 = vmatpush1.bf16.xpose.msra.mxu0 0
    %3332 = vmatprep.subr.bf16.mxu0 0
    %3333 = vmatpush1.bf16.xpose.msra.mxu0 0
    %3334 = vmatprep.subr.bf16.mxu0 0
    %3335 = vmatpush1.bf16.xpose.msra.mxu0 0
    %3336 = vmatprep.subr.bf16.mxu0 0
    %3337 = vmatpush1.bf16.xpose.msra.mxu0 0
    %3338 = vmatprep.subr.bf16.mxu0 0
    %3339 = vmatpush1.bf16.xpose.msra.mxu0 0
    %3340 = vmatprep.subr.bf16.mxu0 0
    %3341 = vmatpush1.bf16.xpose.msra.mxu0 0
    %3342 = vmatprep.subr.bf16.mxu0 0
    %3343 = vmatpush1.bf16.xpose.msra.mxu0 0
    %3344 = vmatprep.subr.bf16.mxu0 0
    %3345 = vmatpush1.bf16.xpose.msra.mxu0 0
    %3346 = vmatprep.subr.bf16.mxu0 0
    %3347 = vmatpush1.bf16.xpose.msra.mxu0 0
    %3348 = vmatprep.subr.bf16.mxu0 0
    %3349 = vmatpush1.bf16.xpose.msra.mxu0 0
    %3350 = vmatprep.subr.bf16.mxu0 0
    %3351 = vmatpush1.bf16.xpose.msra.mxu0 0
    %3352 = vmatprep.mubr.bf16.mxu0 0
    %3353 = vmatmul.mubr.bf16.gmra.mrb[0].mxu0 %v3315
    %v3354 = vpop.f32.mrb[0].mxu0
    %v3355 = vadd.f32 %v49, %v3354
    %v3356 = vpop.f32.mrb[0].mxu0
    %v3357 = vpop.f32.mrb[0].mxu0
    %v3358 = vpop.f32.mrb[0].mxu0
    %3359 = vdwg.mxu0
    %v3361 = vsel %vm264, %v3311, 0
    %v3364 = vsel %vm264, %v3313, 0
    %3366 = vmatprep.subr.bf16.mxu0 0
    %3367 = vmatpush1.bf16.xpose.msra.mxu0 %v3364
    %3368 = vmatprep.subr.bf16.mxu0 0
    %3369 = vmatpush1.bf16.xpose.msra.mxu0 0
    %3370 = vmatprep.subr.bf16.mxu0 0
    %3371 = vmatpush1.bf16.xpose.msra.mxu0 0
    %3372 = vmatprep.subr.bf16.mxu0 0
    %3373 = vmatpush1.bf16.xpose.msra.mxu0 0
    %3374 = vmatprep.subr.bf16.mxu0 0
    %3375 = vmatpush1.bf16.xpose.msra.mxu0 0
    %3376 = vmatprep.subr.bf16.mxu0 0
    %3377 = vmatpush1.bf16.xpose.msra.mxu0 0
    %3378 = vmatprep.subr.bf16.mxu0 0
    %3379 = vmatpush1.bf16.xpose.msra.mxu0 0
    %3380 = vmatprep.subr.bf16.mxu0 0
    %3381 = vmatpush1.bf16.xpose.msra.mxu0 0
    %3382 = vmatprep.subr.bf16.mxu0 0
    %3383 = vmatpush1.bf16.xpose.msra.mxu0 0
    %3384 = vmatprep.subr.bf16.mxu0 0
    %3385 = vmatpush1.bf16.xpose.msra.mxu0 0
    %3386 = vmatprep.subr.bf16.mxu0 0
    %3387 = vmatpush1.bf16.xpose.msra.mxu0 0
    %3388 = vmatprep.subr.bf16.mxu0 0
    %3389 = vmatpush1.bf16.xpose.msra.mxu0 0
    %3390 = vmatprep.subr.bf16.mxu0 0
    %3391 = vmatpush1.bf16.xpose.msra.mxu0 0
    %3392 = vmatprep.subr.bf16.mxu0 0
    %3393 = vmatpush1.bf16.xpose.msra.mxu0 0
    %3394 = vmatprep.subr.bf16.mxu0 0
    %3395 = vmatpush1.bf16.xpose.msra.mxu0 0
    %3396 = vmatprep.subr.bf16.mxu0 0
    %3397 = vmatpush1.bf16.xpose.msra.mxu0 0
    %3398 = vmatprep.mubr.bf16.mxu0 0
    %3399 = vmatmul.mubr.bf16.gmra.mrb[0].mxu0 %v3361
    %v3400 = vpop.f32.mrb[0].mxu0
    %v3401 = vadd.f32 %v53, %v3400
    %v3402 = vpop.f32.mrb[0].mxu0
    %v3403 = vpop.f32.mrb[0].mxu0
    %v3404 = vpop.f32.mrb[0].mxu0
    %3405 = vdwg.mxu0
    %v3406 = vsel %vm264, %v3355, -inf
    %3407 = vmax.xlane.f32.xlu0 %v3406
    %v3408 = vpop.xlane.xlu0 %3407
    %v3409 = vsel %vm264, %v3401, -inf
    %3410 = vmax.xlane.f32.xlu0 %v3409
    %v3411 = vpop.xlane.xlu0 %3410
    %v3412 = vsub.f32 %v3355, %v3408
    %v3413 = vsub.f32 %v3401, %v3411
    %v3414 = vmul.f32 %v3412, 1.442695
    %v3415 = vpow.pop %v3414
    %v3416 = vmul.f32 %v3413, 1.442695
    %v3417 = vpow.pop %v3416
    %v3418 = vsel %vm264, %v3415, 0.0
    %3419 = vadd.xlane.f32.xlu0 %v3418
    %v3420 = vpop.xlane.xlu0 %3419
    %v3421 = vsel %vm264, %v3417, 0.0
    %3422 = vadd.xlane.f32.xlu0 %v3421
    %v3423 = vpop.xlane.xlu0 %3422
    %v3424 = vrcp.pop %v3420
    %v3425 = vrcp.pop %v3423
    %v3426 = vmul.f32 %v3415, %v3424
    %v3427 = vmul.f32 %v3417, %v3425
    %v3428 = vpack.c.bf16 %v3426, %v3426
    %v3429 = vpack.c.bf16 %v3427, %v3427
    %v3430 = vpack.c.bf16 %v3304, %v3304
    %v3431 = vpack.c.bf16 %v3307, %v3307
    %v3433 = vsel %vm264, %v3428, 0
    %v3436 = vsel %vm386, %v3430, 0
    %3438 = vmatprep.subr.bf16.mxu0 0
    %3439 = vmatpush1.bf16.msra.mxu0 %v3436
    %3440 = vmatprep.subr.bf16.mxu0 0
    %3441 = vmatpush1.bf16.msra.mxu0 0
    %3442 = vmatprep.subr.bf16.mxu0 0
    %3443 = vmatpush1.bf16.msra.mxu0 0
    %3444 = vmatprep.subr.bf16.mxu0 0
    %3445 = vmatpush1.bf16.msra.mxu0 0
    %3446 = vmatprep.subr.bf16.mxu0 0
    %3447 = vmatpush1.bf16.msra.mxu0 0
    %3448 = vmatprep.subr.bf16.mxu0 0
    %3449 = vmatpush1.bf16.msra.mxu0 0
    %3450 = vmatprep.subr.bf16.mxu0 0
    %3451 = vmatpush1.bf16.msra.mxu0 0
    %3452 = vmatprep.subr.bf16.mxu0 0
    %3453 = vmatpush1.bf16.msra.mxu0 0
    %3454 = vmatprep.subr.bf16.mxu0 0
    %3455 = vmatpush1.bf16.msra.mxu0 0
    %3456 = vmatprep.subr.bf16.mxu0 0
    %3457 = vmatpush1.bf16.msra.mxu0 0
    %3458 = vmatprep.subr.bf16.mxu0 0
    %3459 = vmatpush1.bf16.msra.mxu0 0
    %3460 = vmatprep.subr.bf16.mxu0 0
    %3461 = vmatpush1.bf16.msra.mxu0 0
    %3462 = vmatprep.subr.bf16.mxu0 0
    %3463 = vmatpush1.bf16.msra.mxu0 0
    %3464 = vmatprep.subr.bf16.mxu0 0
    %3465 = vmatpush1.bf16.msra.mxu0 0
    %3466 = vmatprep.subr.bf16.mxu0 0
    %3467 = vmatpush1.bf16.msra.mxu0 0
    %3468 = vmatprep.subr.bf16.mxu0 0
    %3469 = vmatpush1.bf16.msra.mxu0 0
    %3470 = vmatprep.mubr.bf16.mxu0 0
    %3471 = vmatmul.mubr.bf16.gmra.mrb[0].mxu0 %v3433
    %v3472 = vpop.f32.mrb[0].mxu0
    %v3473 = vadd.f32 0.0, %v3472
    %v3474 = vpop.f32.mrb[0].mxu0
    %v3475 = vpop.f32.mrb[0].mxu0
    %v3476 = vpop.f32.mrb[0].mxu0
    %3477 = vdwg.mxu0
    %v3479 = vsel %vm264, %v3429, 0
    %v3482 = vsel %vm386, %v3431, 0
    %3484 = vmatprep.subr.bf16.mxu0 0
    %3485 = vmatpush1.bf16.msra.mxu0 %v3482
    %3486 = vmatprep.subr.bf16.mxu0 0
    %3487 = vmatpush1.bf16.msra.mxu0 0
    %3488 = vmatprep.subr.bf16.mxu0 0
    %3489 = vmatpush1.bf16.msra.mxu0 0
    %3490 = vmatprep.subr.bf16.mxu0 0
    %3491 = vmatpush1.bf16.msra.mxu0 0
    %3492 = vmatprep.subr.bf16.mxu0 0
    %3493 = vmatpush1.bf16.msra.mxu0 0
    %3494 = vmatprep.subr.bf16.mxu0 0
    %3495 = vmatpush1.bf16.msra.mxu0 0
    %3496 = vmatprep.subr.bf16.mxu0 0
    %3497 = vmatpush1.bf16.msra.mxu0 0
    %3498 = vmatprep.subr.bf16.mxu0 0
    %3499 = vmatpush1.bf16.msra.mxu0 0
    %3500 = vmatprep.subr.bf16.mxu0 0
    %3501 = vmatpush1.bf16.msra.mxu0 0
    %3502 = vmatprep.subr.bf16.mxu0 0
    %3503 = vmatpush1.bf16.msra.mxu0 0
    %3504 = vmatprep.subr.bf16.mxu0 0
    %3505 = vmatpush1.bf16.msra.mxu0 0
    %3506 = vmatprep.subr.bf16.mxu0 0
    %3507 = vmatpush1.bf16.msra.mxu0 0
    %3508 = vmatprep.subr.bf16.mxu0 0
    %3509 = vmatpush1.bf16.msra.mxu0 0
    %3510 = vmatprep.subr.bf16.mxu0 0
    %3511 = vmatpush1.bf16.msra.mxu0 0
    %3512 = vmatprep.subr.bf16.mxu0 0
    %3513 = vmatpush1.bf16.msra.mxu0 0
    %3514 = vmatprep.subr.bf16.mxu0 0
    %3515 = vmatpush1.bf16.msra.mxu0 0
    %3516 = vmatprep.mubr.bf16.mxu0 0
    %3517 = vmatmul.mubr.bf16.gmra.mrb[0].mxu0 %v3479
    %v3518 = vpop.f32.mrb[0].mxu0
    %v3519 = vadd.f32 0.0, %v3518
    %v3520 = vpop.f32.mrb[0].mxu0
    %v3521 = vpop.f32.mrb[0].mxu0
    %v3522 = vpop.f32.mrb[0].mxu0
    %3523 = vdwg.mxu0
    %v3524 = vpack.c.bf16 %v3519, %v3473
    %s3525 = scalar_lea.vmem %s3, 24
    %v3526 = vld [vmem:[%s3525] sm:$0xf]
    %v3528 = vsel %vm264, %v3524, 0
    %v3531 = vsel %vm386, %v3526, 0
    %3533 = vmatprep.subr.bf16.mxu0 0
    %3534 = vmatpush1.bf16.msra.mxu0 %v3531
    %3535 = vmatprep.subr.bf16.mxu0 0
    %3536 = vmatpush1.bf16.msra.mxu0 0
    %3537 = vmatprep.subr.bf16.mxu0 0
    %3538 = vmatpush1.bf16.msra.mxu0 0
    %3539 = vmatprep.subr.bf16.mxu0 0
    %3540 = vmatpush1.bf16.msra.mxu0 0
    %3541 = vmatprep.subr.bf16.mxu0 0
    %3542 = vmatpush1.bf16.msra.mxu0 0
    %3543 = vmatprep.subr.bf16.mxu0 0
    %3544 = vmatpush1.bf16.msra.mxu0 0
    %3545 = vmatprep.subr.bf16.mxu0 0
    %3546 = vmatpush1.bf16.msra.mxu0 0
    %3547 = vmatprep.subr.bf16.mxu0 0
    %3548 = vmatpush1.bf16.msra.mxu0 0
    %3549 = vmatprep.subr.bf16.mxu0 0
    %3550 = vmatpush1.bf16.msra.mxu0 0
    %3551 = vmatprep.subr.bf16.mxu0 0
    %3552 = vmatpush1.bf16.msra.mxu0 0
    %3553 = vmatprep.subr.bf16.mxu0 0
    %3554 = vmatpush1.bf16.msra.mxu0 0
    %3555 = vmatprep.subr.bf16.mxu0 0
    %3556 = vmatpush1.bf16.msra.mxu0 0
    %3557 = vmatprep.subr.bf16.mxu0 0
    %3558 = vmatpush1.bf16.msra.mxu0 0
    %3559 = vmatprep.subr.bf16.mxu0 0
    %3560 = vmatpush1.bf16.msra.mxu0 0
    %3561 = vmatprep.subr.bf16.mxu0 0
    %3562 = vmatpush1.bf16.msra.mxu0 0
    %3563 = vmatprep.subr.bf16.mxu0 0
    %3564 = vmatpush1.bf16.msra.mxu0 0
    %3565 = vmatprep.mubr.bf16.mxu0 0
    %3566 = vmatmul.mubr.bf16.gmra.mrb[0].mxu0 %v3528
    %v3567 = vpop.f32.mrb[0].mxu0
    %v3568 = vadd.f32 0.0, %v3567
    %v3569 = vpop.f32.mrb[0].mxu0
    %v3570 = vpop.f32.mrb[0].mxu0
    %v3571 = vadd.f32 0.0, %v3570
    %v3572 = vpop.f32.mrb[0].mxu0
    %3573 = vdwg.mxu0
    %v3574 = vadd.f32 %v3104, %v3568
    %v3575 = vadd.f32 %v3107, %v3571
    %s3576 = scalar_lea.vmem %s2, 240
    %v3577 = vld [vmem:[%s3576] sm:$0xf]
    %v3578 = vld [vmem:[%s3576 + $0x4] sm:$0xf]
    %v3579 = vld [vmem:[%s3576 + $0x8] sm:$0xf]
    %v3580 = vld [vmem:[%s3576 + $0xc] sm:$0xf]
    %s3581 = scalar_lea.vmem %s2, 304
    %v3582 = vld [vmem:[%s3581] sm:$0xf]
    %v3583 = vld [vmem:[%s3581 + $0x4] sm:$0xf]
    %v3584 = vld [vmem:[%s3581 + $0x8] sm:$0xf]
    %v3585 = vld [vmem:[%s3581 + $0xc] sm:$0xf]
    %s3586 = scalar_lea.vmem %s2, 368
    %v3587 = vld [vmem:[%s3586] sm:$0xf]
    %v3588 = vld [vmem:[%s3586 + $0x4] sm:$0xf]
    %v3589 = vld [vmem:[%s3586 + $0x8] sm:$0xf]
    %v3590 = vld [vmem:[%s3586 + $0xc] sm:$0xf]
    %s3591 = scalar_lea.vmem %s6, 15
    %v3592 = vld [vmem:[%s3591] sm:$0x1]
    %s3593 = scalar_lea.vmem %s6, 19
    %v3594 = vld [vmem:[%s3593] sm:$0x1]
    %s3595 = scalar_lea.vmem %s6, 23
    %v3596 = vld [vmem:[%s3595] sm:$0x1]
    %v3598 = vlaneseq
    %v3599 = vshrl.u32 %v3598, 7
    %v3600 = vsub.s32 0, %v3599
    %v3601 = vrot.slane %v3592, %v3600
    %v3607 = vunpack.c.l.b16 %v3577
    %v3608 = vunpack.c.l.b16 %v3578
    %v3609 = vunpack.c.l.b16 %v3579
    %v3610 = vunpack.c.l.b16 %v3580
    %v3611 = vpack.c.b16 %v3608, %v3607
    %v3612 = vpack.c.b16 %v3610, %v3609
    %3615 = vmatprep.subr.bf16.mxu0 0
    %3616 = vmatpush1.bf16.msra.mxu0 %v3611
    %3617 = vmatprep.subr.bf16.mxu0 0
    %3618 = vmatpush1.bf16.msra.mxu0 %v3612
    %3619 = vmatprep.subr.bf16.mxu0 0
    %3620 = vmatpush1.bf16.msra.mxu0 0
    %3621 = vmatprep.subr.bf16.mxu0 0
    %3622 = vmatpush1.bf16.msra.mxu0 0
    %3623 = vmatprep.subr.bf16.mxu0 0
    %3624 = vmatpush1.bf16.msra.mxu0 0
    %3625 = vmatprep.subr.bf16.mxu0 0
    %3626 = vmatpush1.bf16.msra.mxu0 0
    %3627 = vmatprep.subr.bf16.mxu0 0
    %3628 = vmatpush1.bf16.msra.mxu0 0
    %3629 = vmatprep.subr.bf16.mxu0 0
    %3630 = vmatpush1.bf16.msra.mxu0 0
    %3631 = vmatprep.subr.bf16.mxu0 0
    %3632 = vmatpush1.bf16.msra.mxu0 0
    %3633 = vmatprep.subr.bf16.mxu0 0
    %3634 = vmatpush1.bf16.msra.mxu0 0
    %3635 = vmatprep.subr.bf16.mxu0 0
    %3636 = vmatpush1.bf16.msra.mxu0 0
    %3637 = vmatprep.subr.bf16.mxu0 0
    %3638 = vmatpush1.bf16.msra.mxu0 0
    %3639 = vmatprep.subr.bf16.mxu0 0
    %3640 = vmatpush1.bf16.msra.mxu0 0
    %3641 = vmatprep.subr.bf16.mxu0 0
    %3642 = vmatpush1.bf16.msra.mxu0 0
    %3643 = vmatprep.subr.bf16.mxu0 0
    %3644 = vmatpush1.bf16.msra.mxu0 0
    %3645 = vmatprep.subr.bf16.mxu0 0
    %3646 = vmatpush1.bf16.msra.mxu0 0
    %3647 = vmatprep.mubr.bf16.mxu0 0
    %3648 = vmatmul.mubr.bf16.gmra.mrb[0].mxu0 %v2219
    %v3649 = vpop.f32.mrb[0].mxu0
    %v3650 = vadd.f32 %v3601, %v3649
    %v3651 = vpop.f32.mrb[0].mxu0
    %v3652 = vpop.f32.mrb[0].mxu0
    %v3653 = vadd.f32 %v3601, %v3652
    %v3654 = vpop.f32.mrb[0].mxu0
    %3655 = vdwg.mxu0
    %v3656 = vmul.f32 %v3650, 0.35355338
    %v3657 = vmul.f32 %v3653, 0.35355338
    %v3659 = vlaneseq
    %v3660 = vshrl.u32 %v3659, 7
    %v3661 = vsub.s32 0, %v3660
    %v3662 = vrot.slane %v3594, %v3661
    %v3668 = vunpack.c.l.b16 %v3582
    %v3669 = vunpack.c.l.b16 %v3583
    %v3670 = vunpack.c.l.b16 %v3584
    %v3671 = vunpack.c.l.b16 %v3585
    %v3672 = vpack.c.b16 %v3669, %v3668
    %v3673 = vpack.c.b16 %v3671, %v3670
    %3676 = vmatprep.subr.bf16.mxu0 0
    %3677 = vmatpush1.bf16.msra.mxu0 %v3672
    %3678 = vmatprep.subr.bf16.mxu0 0
    %3679 = vmatpush1.bf16.msra.mxu0 %v3673
    %3680 = vmatprep.subr.bf16.mxu0 0
    %3681 = vmatpush1.bf16.msra.mxu0 0
    %3682 = vmatprep.subr.bf16.mxu0 0
    %3683 = vmatpush1.bf16.msra.mxu0 0
    %3684 = vmatprep.subr.bf16.mxu0 0
    %3685 = vmatpush1.bf16.msra.mxu0 0
    %3686 = vmatprep.subr.bf16.mxu0 0
    %3687 = vmatpush1.bf16.msra.mxu0 0
    %3688 = vmatprep.subr.bf16.mxu0 0
    %3689 = vmatpush1.bf16.msra.mxu0 0
    %3690 = vmatprep.subr.bf16.mxu0 0
    %3691 = vmatpush1.bf16.msra.mxu0 0
    %3692 = vmatprep.subr.bf16.mxu0 0
    %3693 = vmatpush1.bf16.msra.mxu0 0
    %3694 = vmatprep.subr.bf16.mxu0 0
    %3695 = vmatpush1.bf16.msra.mxu0 0
    %3696 = vmatprep.subr.bf16.mxu0 0
    %3697 = vmatpush1.bf16.msra.mxu0 0
    %3698 = vmatprep.subr.bf16.mxu0 0
    %3699 = vmatpush1.bf16.msra.mxu0 0
    %3700 = vmatprep.subr.bf16.mxu0 0
    %3701 = vmatpush1.bf16.msra.mxu0 0
    %3702 = vmatprep.subr.bf16.mxu0 0
    %3703 = vmatpush1.bf16.msra.mxu0 0
    %3704 = vmatprep.subr.bf16.mxu0 0
    %3705 = vmatpush1.bf16.msra.mxu0 0
    %3706 = vmatprep.subr.bf16.mxu0 0
    %3707 = vmatpush1.bf16.msra.mxu0 0
    %3708 = vmatprep.mubr.bf16.mxu0 0
    %3709 = vmatmul.mubr.bf16.gmra.mrb[0].mxu0 %v2219
    %v3710 = vpop.f32.mrb[0].mxu0
    %v3711 = vadd.f32 %v3662, %v3710
    %v3712 = vpop.f32.mrb[0].mxu0
    %v3713 = vpop.f32.mrb[0].mxu0
    %v3714 = vadd.f32 %v3662, %v3713
    %v3715 = vpop.f32.mrb[0].mxu0
    %3716 = vdwg.mxu0
    %v3718 = vlaneseq
    %v3719 = vshrl.u32 %v3718, 7
    %v3720 = vsub.s32 0, %v3719
    %v3721 = vrot.slane %v3596, %v3720
    %v3727 = vunpack.c.l.b16 %v3587
    %v3728 = vunpack.c.l.b16 %v3588
    %v3729 = vunpack.c.l.b16 %v3589
    %v3730 = vunpack.c.l.b16 %v3590
    %v3731 = vpack.c.b16 %v3728, %v3727
    %v3732 = vpack.c.b16 %v3730, %v3729
    %3735 = vmatprep.subr.bf16.mxu0 0
    %3736 = vmatpush1.bf16.msra.mxu0 %v3731
    %3737 = vmatprep.subr.bf16.mxu0 0
    %3738 = vmatpush1.bf16.msra.mxu0 %v3732
    %3739 = vmatprep.subr.bf16.mxu0 0
    %3740 = vmatpush1.bf16.msra.mxu0 0
    %3741 = vmatprep.subr.bf16.mxu0 0
    %3742 = vmatpush1.bf16.msra.mxu0 0
    %3743 = vmatprep.subr.bf16.mxu0 0
    %3744 = vmatpush1.bf16.msra.mxu0 0
    %3745 = vmatprep.subr.bf16.mxu0 0
    %3746 = vmatpush1.bf16.msra.mxu0 0
    %3747 = vmatprep.subr.bf16.mxu0 0
    %3748 = vmatpush1.bf16.msra.mxu0 0
    %3749 = vmatprep.subr.bf16.mxu0 0
    %3750 = vmatpush1.bf16.msra.mxu0 0
    %3751 = vmatprep.subr.bf16.mxu0 0
    %3752 = vmatpush1.bf16.msra.mxu0 0
    %3753 = vmatprep.subr.bf16.mxu0 0
    %3754 = vmatpush1.bf16.msra.mxu0 0
    %3755 = vmatprep.subr.bf16.mxu0 0
    %3756 = vmatpush1.bf16.msra.mxu0 0
    %3757 = vmatprep.subr.bf16.mxu0 0
    %3758 = vmatpush1.bf16.msra.mxu0 0
    %3759 = vmatprep.subr.bf16.mxu0 0
    %3760 = vmatpush1.bf16.msra.mxu0 0
    %3761 = vmatprep.subr.bf16.mxu0 0
    %3762 = vmatpush1.bf16.msra.mxu0 0
    %3763 = vmatprep.subr.bf16.mxu0 0
    %3764 = vmatpush1.bf16.msra.mxu0 0
    %3765 = vmatprep.subr.bf16.mxu0 0
    %3766 = vmatpush1.bf16.msra.mxu0 0
    %3767 = vmatprep.mubr.bf16.mxu0 0
    %3768 = vmatmul.mubr.bf16.gmra.mrb[0].mxu0 %v2219
    %v3769 = vpop.f32.mrb[0].mxu0
    %v3770 = vadd.f32 %v3721, %v3769
    %v3771 = vpop.f32.mrb[0].mxu0
    %v3772 = vpop.f32.mrb[0].mxu0
    %v3773 = vadd.f32 %v3721, %v3772
    %v3774 = vpop.f32.mrb[0].mxu0
    %3775 = vdwg.mxu0
    %v3776 = vpack.c.bf16 %v3656, %v3656
    %v3777 = vpack.c.bf16 %v3657, %v3657
    %v3778 = vpack.c.bf16 %v3711, %v3711
    %v3779 = vpack.c.bf16 %v3714, %v3714
    %v3781 = vsel %vm264, %v3776, 0
    %v3784 = vsel %vm264, %v3778, 0
    %3786 = vmatprep.subr.bf16.mxu0 0
    %3787 = vmatpush1.bf16.xpose.msra.mxu0 %v3784
    %3788 = vmatprep.subr.bf16.mxu0 0
    %3789 = vmatpush1.bf16.xpose.msra.mxu0 0
    %3790 = vmatprep.subr.bf16.mxu0 0
    %3791 = vmatpush1.bf16.xpose.msra.mxu0 0
    %3792 = vmatprep.subr.bf16.mxu0 0
    %3793 = vmatpush1.bf16.xpose.msra.mxu0 0
    %3794 = vmatprep.subr.bf16.mxu0 0
    %3795 = vmatpush1.bf16.xpose.msra.mxu0 0
    %3796 = vmatprep.subr.bf16.mxu0 0
    %3797 = vmatpush1.bf16.xpose.msra.mxu0 0
    %3798 = vmatprep.subr.bf16.mxu0 0
    %3799 = vmatpush1.bf16.xpose.msra.mxu0 0
    %3800 = vmatprep.subr.bf16.mxu0 0
    %3801 = vmatpush1.bf16.xpose.msra.mxu0 0
    %3802 = vmatprep.subr.bf16.mxu0 0
    %3803 = vmatpush1.bf16.xpose.msra.mxu0 0
    %3804 = vmatprep.subr.bf16.mxu0 0
    %3805 = vmatpush1.bf16.xpose.msra.mxu0 0
    %3806 = vmatprep.subr.bf16.mxu0 0
    %3807 = vmatpush1.bf16.xpose.msra.mxu0 0
    %3808 = vmatprep.subr.bf16.mxu0 0
    %3809 = vmatpush1.bf16.xpose.msra.mxu0 0
    %3810 = vmatprep.subr.bf16.mxu0 0
    %3811 = vmatpush1.bf16.xpose.msra.mxu0 0
    %3812 = vmatprep.subr.bf16.mxu0 0
    %3813 = vmatpush1.bf16.xpose.msra.mxu0 0
    %3814 = vmatprep.subr.bf16.mxu0 0
    %3815 = vmatpush1.bf16.xpose.msra.mxu0 0
    %3816 = vmatprep.subr.bf16.mxu0 0
    %3817 = vmatpush1.bf16.xpose.msra.mxu0 0
    %3818 = vmatprep.mubr.bf16.mxu0 0
    %3819 = vmatmul.mubr.bf16.gmra.mrb[0].mxu0 %v3781
    %v3820 = vpop.f32.mrb[0].mxu0
    %v3821 = vadd.f32 %v49, %v3820
    %v3822 = vpop.f32.mrb[0].mxu0
    %v3823 = vpop.f32.mrb[0].mxu0
    %v3824 = vpop.f32.mrb[0].mxu0
    %3825 = vdwg.mxu0
    %v3827 = vsel %vm264, %v3777, 0
    %v3830 = vsel %vm264, %v3779, 0
    %3832 = vmatprep.subr.bf16.mxu0 0
    %3833 = vmatpush1.bf16.xpose.msra.mxu0 %v3830
    %3834 = vmatprep.subr.bf16.mxu0 0
    %3835 = vmatpush1.bf16.xpose.msra.mxu0 0
    %3836 = vmatprep.subr.bf16.mxu0 0
    %3837 = vmatpush1.bf16.xpose.msra.mxu0 0
    %3838 = vmatprep.subr.bf16.mxu0 0
    %3839 = vmatpush1.bf16.xpose.msra.mxu0 0
    %3840 = vmatprep.subr.bf16.mxu0 0
    %3841 = vmatpush1.bf16.xpose.msra.mxu0 0
    %3842 = vmatprep.subr.bf16.mxu0 0
    %3843 = vmatpush1.bf16.xpose.msra.mxu0 0
    %3844 = vmatprep.subr.bf16.mxu0 0
    %3845 = vmatpush1.bf16.xpose.msra.mxu0 0
    %3846 = vmatprep.subr.bf16.mxu0 0
    %3847 = vmatpush1.bf16.xpose.msra.mxu0 0
    %3848 = vmatprep.subr.bf16.mxu0 0
    %3849 = vmatpush1.bf16.xpose.msra.mxu0 0
    %3850 = vmatprep.subr.bf16.mxu0 0
    %3851 = vmatpush1.bf16.xpose.msra.mxu0 0
    %3852 = vmatprep.subr.bf16.mxu0 0
    %3853 = vmatpush1.bf16.xpose.msra.mxu0 0
    %3854 = vmatprep.subr.bf16.mxu0 0
    %3855 = vmatpush1.bf16.xpose.msra.mxu0 0
    %3856 = vmatprep.subr.bf16.mxu0 0
    %3857 = vmatpush1.bf16.xpose.msra.mxu0 0
    %3858 = vmatprep.subr.bf16.mxu0 0
    %3859 = vmatpush1.bf16.xpose.msra.mxu0 0
    %3860 = vmatprep.subr.bf16.mxu0 0
    %3861 = vmatpush1.bf16.xpose.msra.mxu0 0
    %3862 = vmatprep.subr.bf16.mxu0 0
    %3863 = vmatpush1.bf16.xpose.msra.mxu0 0
    %3864 = vmatprep.mubr.bf16.mxu0 0
    %3865 = vmatmul.mubr.bf16.gmra.mrb[0].mxu0 %v3827
    %v3866 = vpop.f32.mrb[0].mxu0
    %v3867 = vadd.f32 %v53, %v3866
    %v3868 = vpop.f32.mrb[0].mxu0
    %v3869 = vpop.f32.mrb[0].mxu0
    %v3870 = vpop.f32.mrb[0].mxu0
    %3871 = vdwg.mxu0
    %v3872 = vsel %vm264, %v3821, -inf
    %3873 = vmax.xlane.f32.xlu0 %v3872
    %v3874 = vpop.xlane.xlu0 %3873
    %v3875 = vsel %vm264, %v3867, -inf
    %3876 = vmax.xlane.f32.xlu0 %v3875
    %v3877 = vpop.xlane.xlu0 %3876
    %v3878 = vsub.f32 %v3821, %v3874
    %v3879 = vsub.f32 %v3867, %v3877
    %v3880 = vmul.f32 %v3878, 1.442695
    %v3881 = vpow.pop %v3880
    %v3882 = vmul.f32 %v3879, 1.442695
    %v3883 = vpow.pop %v3882
    %v3884 = vsel %vm264, %v3881, 0.0
    %3885 = vadd.xlane.f32.xlu0 %v3884
    %v3886 = vpop.xlane.xlu0 %3885
    %v3887 = vsel %vm264, %v3883, 0.0
    %3888 = vadd.xlane.f32.xlu0 %v3887
    %v3889 = vpop.xlane.xlu0 %3888
    %v3890 = vrcp.pop %v3886
    %v3891 = vrcp.pop %v3889
    %v3892 = vmul.f32 %v3881, %v3890
    %v3893 = vmul.f32 %v3883, %v3891
    %v3894 = vpack.c.bf16 %v3892, %v3892
    %v3895 = vpack.c.bf16 %v3893, %v3893
    %v3896 = vpack.c.bf16 %v3770, %v3770
    %v3897 = vpack.c.bf16 %v3773, %v3773
    %v3899 = vsel %vm264, %v3894, 0
    %v3902 = vsel %vm386, %v3896, 0
    %3904 = vmatprep.subr.bf16.mxu0 0
    %3905 = vmatpush1.bf16.msra.mxu0 %v3902
    %3906 = vmatprep.subr.bf16.mxu0 0
    %3907 = vmatpush1.bf16.msra.mxu0 0
    %3908 = vmatprep.subr.bf16.mxu0 0
    %3909 = vmatpush1.bf16.msra.mxu0 0
    %3910 = vmatprep.subr.bf16.mxu0 0
    %3911 = vmatpush1.bf16.msra.mxu0 0
    %3912 = vmatprep.subr.bf16.mxu0 0
    %3913 = vmatpush1.bf16.msra.mxu0 0
    %3914 = vmatprep.subr.bf16.mxu0 0
    %3915 = vmatpush1.bf16.msra.mxu0 0
    %3916 = vmatprep.subr.bf16.mxu0 0
    %3917 = vmatpush1.bf16.msra.mxu0 0
    %3918 = vmatprep.subr.bf16.mxu0 0
    %3919 = vmatpush1.bf16.msra.mxu0 0
    %3920 = vmatprep.subr.bf16.mxu0 0
    %3921 = vmatpush1.bf16.msra.mxu0 0
    %3922 = vmatprep.subr.bf16.mxu0 0
    %3923 = vmatpush1.bf16.msra.mxu0 0
    %3924 = vmatprep.subr.bf16.mxu0 0
    %3925 = vmatpush1.bf16.msra.mxu0 0
    %3926 = vmatprep.subr.bf16.mxu0 0
    %3927 = vmatpush1.bf16.msra.mxu0 0
    %3928 = vmatprep.subr.bf16.mxu0 0
    %3929 = vmatpush1.bf16.msra.mxu0 0
    %3930 = vmatprep.subr.bf16.mxu0 0
    %3931 = vmatpush1.bf16.msra.mxu0 0
    %3932 = vmatprep.subr.bf16.mxu0 0
    %3933 = vmatpush1.bf16.msra.mxu0 0
    %3934 = vmatprep.subr.bf16.mxu0 0
    %3935 = vmatpush1.bf16.msra.mxu0 0
    %3936 = vmatprep.mubr.bf16.mxu0 0
    %3937 = vmatmul.mubr.bf16.gmra.mrb[0].mxu0 %v3899
    %v3938 = vpop.f32.mrb[0].mxu0
    %v3939 = vadd.f32 0.0, %v3938
    %v3940 = vpop.f32.mrb[0].mxu0
    %v3941 = vpop.f32.mrb[0].mxu0
    %v3942 = vpop.f32.mrb[0].mxu0
    %3943 = vdwg.mxu0
    %v3945 = vsel %vm264, %v3895, 0
    %v3948 = vsel %vm386, %v3897, 0
    %3950 = vmatprep.subr.bf16.mxu0 0
    %3951 = vmatpush1.bf16.msra.mxu0 %v3948
    %3952 = vmatprep.subr.bf16.mxu0 0
    %3953 = vmatpush1.bf16.msra.mxu0 0
    %3954 = vmatprep.subr.bf16.mxu0 0
    %3955 = vmatpush1.bf16.msra.mxu0 0
    %3956 = vmatprep.subr.bf16.mxu0 0
    %3957 = vmatpush1.bf16.msra.mxu0 0
    %3958 = vmatprep.subr.bf16.mxu0 0
    %3959 = vmatpush1.bf16.msra.mxu0 0
    %3960 = vmatprep.subr.bf16.mxu0 0
    %3961 = vmatpush1.bf16.msra.mxu0 0
    %3962 = vmatprep.subr.bf16.mxu0 0
    %3963 = vmatpush1.bf16.msra.mxu0 0
    %3964 = vmatprep.subr.bf16.mxu0 0
    %3965 = vmatpush1.bf16.msra.mxu0 0
    %3966 = vmatprep.subr.bf16.mxu0 0
    %3967 = vmatpush1.bf16.msra.mxu0 0
    %3968 = vmatprep.subr.bf16.mxu0 0
    %3969 = vmatpush1.bf16.msra.mxu0 0
    %3970 = vmatprep.subr.bf16.mxu0 0
    %3971 = vmatpush1.bf16.msra.mxu0 0
    %3972 = vmatprep.subr.bf16.mxu0 0
    %3973 = vmatpush1.bf16.msra.mxu0 0
    %3974 = vmatprep.subr.bf16.mxu0 0
    %3975 = vmatpush1.bf16.msra.mxu0 0
    %3976 = vmatprep.subr.bf16.mxu0 0
    %3977 = vmatpush1.bf16.msra.mxu0 0
    %3978 = vmatprep.subr.bf16.mxu0 0
    %3979 = vmatpush1.bf16.msra.mxu0 0
    %3980 = vmatprep.subr.bf16.mxu0 0
    %3981 = vmatpush1.bf16.msra.mxu0 0
    %3982 = vmatprep.mubr.bf16.mxu0 0
    %3983 = vmatmul.mubr.bf16.gmra.mrb[0].mxu0 %v3945
    %v3984 = vpop.f32.mrb[0].mxu0
    %v3985 = vadd.f32 0.0, %v3984
    %v3986 = vpop.f32.mrb[0].mxu0
    %v3987 = vpop.f32.mrb[0].mxu0
    %v3988 = vpop.f32.mrb[0].mxu0
    %3989 = vdwg.mxu0
    %v3990 = vpack.c.bf16 %v3985, %v3939
    %s3991 = scalar_lea.vmem %s3, 28
    %v3992 = vld [vmem:[%s3991] sm:$0xf]
    %v3994 = vsel %vm264, %v3990, 0
    %v3997 = vsel %vm386, %v3992, 0
    %3999 = vmatprep.subr.bf16.mxu0 0
    %4000 = vmatpush1.bf16.msra.mxu0 %v3997
    %4001 = vmatprep.subr.bf16.mxu0 0
    %4002 = vmatpush1.bf16.msra.mxu0 0
    %4003 = vmatprep.subr.bf16.mxu0 0
    %4004 = vmatpush1.bf16.msra.mxu0 0
    %4005 = vmatprep.subr.bf16.mxu0 0
    %4006 = vmatpush1.bf16.msra.mxu0 0
    %4007 = vmatprep.subr.bf16.mxu0 0
    %4008 = vmatpush1.bf16.msra.mxu0 0
    %4009 = vmatprep.subr.bf16.mxu0 0
    %4010 = vmatpush1.bf16.msra.mxu0 0
    %4011 = vmatprep.subr.bf16.mxu0 0
    %4012 = vmatpush1.bf16.msra.mxu0 0
    %4013 = vmatprep.subr.bf16.mxu0 0
    %4014 = vmatpush1.bf16.msra.mxu0 0
    %4015 = vmatprep.subr.bf16.mxu0 0
    %4016 = vmatpush1.bf16.msra.mxu0 0
    %4017 = vmatprep.subr.bf16.mxu0 0
    %4018 = vmatpush1.bf16.msra.mxu0 0
    %4019 = vmatprep.subr.bf16.mxu0 0
    %4020 = vmatpush1.bf16.msra.mxu0 0
    %4021 = vmatprep.subr.bf16.mxu0 0
    %4022 = vmatpush1.bf16.msra.mxu0 0
    %4023 = vmatprep.subr.bf16.mxu0 0
    %4024 = vmatpush1.bf16.msra.mxu0 0
    %4025 = vmatprep.subr.bf16.mxu0 0
    %4026 = vmatpush1.bf16.msra.mxu0 0
    %4027 = vmatprep.subr.bf16.mxu0 0
    %4028 = vmatpush1.bf16.msra.mxu0 0
    %4029 = vmatprep.subr.bf16.mxu0 0
    %4030 = vmatpush1.bf16.msra.mxu0 0
    %4031 = vmatprep.mubr.bf16.mxu0 0
    %4032 = vmatmul.mubr.bf16.gmra.mrb[0].mxu0 %v3994
    %v4033 = vpop.f32.mrb[0].mxu0
    %v4034 = vadd.f32 0.0, %v4033
    %v4035 = vpop.f32.mrb[0].mxu0
    %v4036 = vpop.f32.mrb[0].mxu0
    %v4037 = vadd.f32 0.0, %v4036
    %v4038 = vpop.f32.mrb[0].mxu0
    %4039 = vdwg.mxu0
    %v4040 = vadd.f32 %v3574, %v4034
    %v4041 = vadd.f32 %v3575, %v4037
    %v4042 = vlaneseq
    %v4043 = vshrl.u32 %v4042, 7
    %v4044 = vsub.s32 0, %v4043
    %v4045 = vrot.slane %v2177, %v4044
    %v4046 = vadd.f32 %v4040, %v4045
    %v4047 = vadd.f32 %v4041, %v4045
    %v4048 = vadd.f32 %v2174, %v4046
    %v4049 = vadd.f32 %v2175, %v4047
    %v4050 = vsel %vm95, %v4048, 0.0
    %4051 = vadd.xlane.f32.xlu0 %v4050
    %v4052 = vpop.xlane.xlu0 %4051
    %v4053 = vsel %vm95, %v4049, 0.0
    %4054 = vadd.xlane.f32.xlu0 %v4053
    %v4055 = vpop.xlane.xlu0 %4054
    %v4056 = vmul.f32 %v4052, %v1935
    %v4057 = vmul.f32 %v4055, %v1935
    %v4058 = vsub.f32 %v4048, %v4056
    %v4059 = vsub.f32 %v4049, %v4057
    %v4060 = vmul.f32 %v4058, %v4058
    %v4061 = vmul.f32 %v4059, %v4059
    %v4062 = vsel %vm95, %v4060, 0.0
    %4063 = vadd.xlane.f32.xlu0 %v4062
    %v4064 = vpop.xlane.xlu0 %4063
    %v4065 = vsel %vm95, %v4061, 0.0
    %4066 = vadd.xlane.f32.xlu0 %v4065
    %v4067 = vpop.xlane.xlu0 %4066
    %v4068 = vmul.f32 %v4064, %v1935
    %v4069 = vmul.f32 %v4067, %v1935
    %v4070 = vadd.f32 %v4068, 1e-05
    %v4071 = vadd.f32 %v4069, 1e-05
    %v4072 = vrsqrt.pop %v4070
    %v4073 = vrsqrt.pop %v4071
    %v4074 = vmul.f32 %v4058, %v4072
    %v4075 = vmul.f32 %v4059, %v4073
    %v4076 = vlaneseq
    %v4077 = vshrl.u32 %v4076, 7
    %v4078 = vsub.s32 1, %v4077
    %v4079 = vrot.slane %v2177, %v4078
    %v4080 = vmul.f32 %v4074, %v4079
    %v4081 = vmul.f32 %v4075, %v4079
    %v4082 = vlaneseq
    %v4083 = vshrl.u32 %v4082, 7
    %v4084 = vsub.s32 2, %v4083
    %v4085 = vrot.slane %v2177, %v4084
    %v4086 = vadd.f32 %v4080, %v4085
    %v4087 = vadd.f32 %v4081, %v4085
    %v4088 = vpack.c.bf16 %v4087, %v4086
    %s4089 = scalar_lea.vmem %s4, 16
    %v4090 = vld [vmem:[%s4089] sm:$0xf]
    %v4091 = vld [vmem:[%s4089 + $0x4] sm:$0xf]
    %v4092 = vld [vmem:[%s4089 + $0x8] sm:$0xf]
    %v4093 = vld [vmem:[%s4089 + $0xc] sm:$0xf]
    %s4094 = scalar_lea.vmem %s8, 1
    %v4095 = vld [vmem:[%s4094] sm:$0x1]
    %v4097 = vlaneseq
    %v4098 = vshrl.u32 %v4097, 7
    %v4099 = vsub.s32 0, %v4098
    %v4100 = vrot.slane %v4095, %v4099
    %v4106 = vunpack.c.l.b16 %v4090
    %v4107 = vunpack.c.l.b16 %v4091
    %v4108 = vunpack.c.l.b16 %v4092
    %v4109 = vunpack.c.l.b16 %v4093
    %v4110 = vpack.c.b16 %v4107, %v4106
    %v4111 = vpack.c.b16 %v4109, %v4108
    %v4115 = vsel %vm95, %v4088, 0
    %4117 = vmatprep.subr.bf16.mxu0 0
    %4118 = vmatpush1.bf16.msra.mxu0 %v4110
    %4119 = vmatprep.subr.bf16.mxu0 0
    %4120 = vmatpush1.bf16.msra.mxu0 %v4111
    %4121 = vmatprep.subr.bf16.mxu0 0
    %4122 = vmatpush1.bf16.msra.mxu0 0
    %4123 = vmatprep.subr.bf16.mxu0 0
    %4124 = vmatpush1.bf16.msra.mxu0 0
    %4125 = vmatprep.subr.bf16.mxu0 0
    %4126 = vmatpush1.bf16.msra.mxu0 0
    %4127 = vmatprep.subr.bf16.mxu0 0
    %4128 = vmatpush1.bf16.msra.mxu0 0
    %4129 = vmatprep.subr.bf16.mxu0 0
    %4130 = vmatpush1.bf16.msra.mxu0 0
    %4131 = vmatprep.subr.bf16.mxu0 0
    %4132 = vmatpush1.bf16.msra.mxu0 0
    %4133 = vmatprep.subr.bf16.mxu0 0
    %4134 = vmatpush1.bf16.msra.mxu0 0
    %4135 = vmatprep.subr.bf16.mxu0 0
    %4136 = vmatpush1.bf16.msra.mxu0 0
    %4137 = vmatprep.subr.bf16.mxu0 0
    %4138 = vmatpush1.bf16.msra.mxu0 0
    %4139 = vmatprep.subr.bf16.mxu0 0
    %4140 = vmatpush1.bf16.msra.mxu0 0
    %4141 = vmatprep.subr.bf16.mxu0 0
    %4142 = vmatpush1.bf16.msra.mxu0 0
    %4143 = vmatprep.subr.bf16.mxu0 0
    %4144 = vmatpush1.bf16.msra.mxu0 0
    %4145 = vmatprep.subr.bf16.mxu0 0
    %4146 = vmatpush1.bf16.msra.mxu0 0
    %4147 = vmatprep.subr.bf16.mxu0 0
    %4148 = vmatpush1.bf16.msra.mxu0 0
    %4149 = vmatprep.mubr.bf16.mxu0 0
    %4150 = vmatmul.mubr.bf16.gmra.mrb[0].mxu0 %v4115
    %v4151 = vpop.f32.mrb[0].mxu0
    %v4152 = vadd.f32 %v4100, %v4151
    %v4153 = vpop.f32.mrb[0].mxu0
    %v4154 = vpop.f32.mrb[0].mxu0
    %v4155 = vadd.f32 %v4100, %v4154
    %v4156 = vpop.f32.mrb[0].mxu0
    %4157 = vdwg.mxu0
    %v4158 = vmul.f32 %v4152, 0.5
    %v4159 = vmul.f32 %v4155, 0.5
    %v4160 = vmul.f32 %v4152, 0.044715
    %v4161 = vmul.f32 %v4155, 0.044715
    %v4162 = vmul.f32 %v4160, %v4152
    %v4163 = vmul.f32 %v4161, %v4155
    %v4164 = vmul.f32 %v4162, %v4152
    %v4165 = vmul.f32 %v4163, %v4155
    %v4166 = vadd.f32 %v4152, %v4164
    %v4167 = vadd.f32 %v4155, %v4165
    %v4168 = vmul.f32 %v4166, 0.7978846
    %v4169 = vmul.f32 %v4167, 0.7978846
    %v4170 = vtanh.pop %v4168
    %v4171 = vtanh.pop %v4169
    %v4172 = vadd.f32 %v4170, 1.0
    %v4173 = vadd.f32 %v4171, 1.0
    %v4174 = vmul.f32 %v4158, %v4172
    %v4175 = vmul.f32 %v4159, %v4173
    %v4176 = vpack.c.bf16 %v4175, %v4174
    %s4177 = scalar_lea.vmem %s5, 32
    %v4178 = vld [vmem:[%s4177] sm:$0xf]
    %v4179 = vld [vmem:[%s4177 + $0x4] sm:$0xf]
    %v4180 = vld [vmem:[%s4177 + $0x8] sm:$0xf]
    %v4181 = vld [vmem:[%s4177 + $0xc] sm:$0xf]
    %v4182 = vld [vmem:[%s4177 + $0x10] sm:$0xf]
    %v4183 = vld [vmem:[%s4177 + $0x14] sm:$0xf]
    %v4184 = vld [vmem:[%s4177 + $0x18] sm:$0xf]
    %v4185 = vld [vmem:[%s4177 + $0x1c] sm:$0xf]
    %v4186 = vlaneseq
    %v4187 = vshrl.u32 %v4186, 7
    %v4188 = vsub.s32 3, %v4187
    %v4189 = vrot.slane %v2177, %v4188
    %v4198 = vunpack.c.l.b16 %v4178
    %v4199 = vunpack.c.l.b16 %v4179
    %v4200 = vunpack.c.l.b16 %v4180
    %v4201 = vunpack.c.l.b16 %v4181
    %v4202 = vunpack.c.l.b16 %v4182
    %v4203 = vunpack.c.l.b16 %v4183
    %v4204 = vunpack.c.l.b16 %v4184
    %v4205 = vunpack.c.l.b16 %v4185
    %v4206 = vpack.c.b16 %v4199, %v4198
    %v4207 = vpack.c.b16 %v4201, %v4200
    %v4208 = vpack.c.b16 %v4203, %v4202
    %v4209 = vpack.c.b16 %v4205, %v4204
    %v4215 = vsel %vm2091, %v4176, 0
    %4217 = vmatprep.subr.bf16.mxu0 0
    %4218 = vmatpush1.bf16.msra.mxu0 %v4206
    %4219 = vmatprep.subr.bf16.mxu0 0
    %4220 = vmatpush1.bf16.msra.mxu0 %v4207
    %4221 = vmatprep.subr.bf16.mxu0 0
    %4222 = vmatpush1.bf16.msra.mxu0 %v4208
    %4223 = vmatprep.subr.bf16.mxu0 0
    %4224 = vmatpush1.bf16.msra.mxu0 %v4209
    %4225 = vmatprep.subr.bf16.mxu0 0
    %4226 = vmatpush1.bf16.msra.mxu0 0
    %4227 = vmatprep.subr.bf16.mxu0 0
    %4228 = vmatpush1.bf16.msra.mxu0 0
    %4229 = vmatprep.subr.bf16.mxu0 0
    %4230 = vmatpush1.bf16.msra.mxu0 0
    %4231 = vmatprep.subr.bf16.mxu0 0
    %4232 = vmatpush1.bf16.msra.mxu0 0
    %4233 = vmatprep.subr.bf16.mxu0 0
    %4234 = vmatpush1.bf16.msra.mxu0 0
    %4235 = vmatprep.subr.bf16.mxu0 0
    %4236 = vmatpush1.bf16.msra.mxu0 0
    %4237 = vmatprep.subr.bf16.mxu0 0
    %4238 = vmatpush1.bf16.msra.mxu0 0
    %4239 = vmatprep.subr.bf16.mxu0 0
    %4240 = vmatpush1.bf16.msra.mxu0 0
    %4241 = vmatprep.subr.bf16.mxu0 0
    %4242 = vmatpush1.bf16.msra.mxu0 0
    %4243 = vmatprep.subr.bf16.mxu0 0
    %4244 = vmatpush1.bf16.msra.mxu0 0
    %4245 = vmatprep.subr.bf16.mxu0 0
    %4246 = vmatpush1.bf16.msra.mxu0 0
    %4247 = vmatprep.subr.bf16.mxu0 0
    %4248 = vmatpush1.bf16.msra.mxu0 0
    %4249 = vmatprep.mubr.bf16.mxu0 0
    %4250 = vmatmul.mubr.bf16.gmra.mrb[0].mxu0 %v4215
    %v4251 = vpop.f32.mrb[0].mxu0
    %v4252 = vadd.f32 %v4189, %v4251
    %v4253 = vpop.f32.mrb[0].mxu0
    %v4254 = vpop.f32.mrb[0].mxu0
    %v4255 = vadd.f32 %v4189, %v4254
    %v4256 = vpop.f32.mrb[0].mxu0
    %4257 = vdwg.mxu0
    %v4258 = vadd.f32 %v4086, %v4252
    %v4259 = vadd.f32 %v4087, %v4255
    %v4260 = vsel %vm95, %v4258, 0.0
    %4261 = vadd.xlane.f32.xlu0 %v4260
    %v4262 = vpop.xlane.xlu0 %4261
    %v4263 = vsel %vm95, %v4259, 0.0
    %4264 = vadd.xlane.f32.xlu0 %v4263
    %v4265 = vpop.xlane.xlu0 %4264
    %v4266 = vmul.f32 %v4262, %v1935
    %v4267 = vmul.f32 %v4265, %v1935
    %v4268 = vsub.f32 %v4258, %v4266
    %v4269 = vsub.f32 %v4259, %v4267
    %v4270 = vmul.f32 %v4268, %v4268
    %v4271 = vmul.f32 %v4269, %v4269
    %v4272 = vsel %vm95, %v4270, 0.0
    %4273 = vadd.xlane.f32.xlu0 %v4272
    %v4274 = vpop.xlane.xlu0 %4273
    %v4275 = vsel %vm95, %v4271, 0.0
    %4276 = vadd.xlane.f32.xlu0 %v4275
    %v4277 = vpop.xlane.xlu0 %4276
    %v4278 = vmul.f32 %v4274, %v1935
    %v4279 = vmul.f32 %v4277, %v1935
    %v4280 = vadd.f32 %v4278, 1e-05
    %v4281 = vadd.f32 %v4279, 1e-05
    %v4282 = vrsqrt.pop %v4280
    %v4283 = vrsqrt.pop %v4281
    %v4284 = vmul.f32 %v4268, %v4282
    %v4285 = vmul.f32 %v4269, %v4283
    %v4286 = vlaneseq
    %v4287 = vshrl.u32 %v4286, 7
    %v4288 = vsub.s32 4, %v4287
    %v4289 = vrot.slane %v2177, %v4288
    %v4290 = vmul.f32 %v4284, %v4289
    %v4291 = vmul.f32 %v4285, %v4289
    %v4292 = vlaneseq
    %v4293 = vshrl.u32 %v4292, 7
    %v4294 = vsub.s32 5, %v4293
    %v4295 = vrot.slane %v2177, %v4294
    %v4296 = vadd.f32 %v4290, %v4295
    %v4297 = vadd.f32 %v4291, %v4295
    %v4298 = vld [vmem:[%s9] sm:$0xff]
    %v4299 = vld [vmem:[%s9 + $0x8] sm:$0xff]
    %v4300 = vld [vmem:[%s9 + $0x10] sm:$0xff]
    %v4301 = vld [vmem:[%s9 + $0x18] sm:$0xff]
    %v4302 = vld [vmem:[%s10] sm:$0x1]
    %v4304 = vlaneseq
    %v4305 = vshrl.u32 %v4304, 7
    %v4306 = vsub.s32 0, %v4305
    %v4307 = vrot.slane %v4302, %v4306
    %v4311 = vrot.slane %v4297, 7
    %vm4312 = vcmask 1041409
    %v4313 = vsel %vm4312, %v4311, %v4296
    %v4314 = vsel %vm95, %v4313, 0
    %4316 = vmatprep.subr.mxu0 0.0
    %4317 = vmatpush1.msra.mxu0 %v4298
    %4318 = vmatprep.subr.mxu0 0.0
    %4319 = vmatpush1.msra.mxu0 %v4299
    %4320 = vmatprep.subr.mxu0 0.0
    %4321 = vmatpush1.msra.mxu0 %v4300
    %4322 = vmatprep.subr.mxu0 0.0
    %4323 = vmatpush1.msra.mxu0 %v4301
    %4324 = vmatprep.subr.mxu0 0.0
    %4325 = vmatpush1.msra.mxu0 0.0
    %4326 = vmatprep.subr.mxu0 0.0
    %4327 = vmatpush1.msra.mxu0 0.0
    %4328 = vmatprep.subr.mxu0 0.0
    %4329 = vmatpush1.msra.mxu0 0.0
    %4330 = vmatprep.subr.mxu0 0.0
    %4331 = vmatpush1.msra.mxu0 0.0
    %4332 = vmatprep.subr.mxu0 0.0
    %4333 = vmatpush1.msra.mxu0 0.0
    %4334 = vmatprep.subr.mxu0 0.0
    %4335 = vmatpush1.msra.mxu0 0.0
    %4336 = vmatprep.subr.mxu0 0.0
    %4337 = vmatpush1.msra.mxu0 0.0
    %4338 = vmatprep.subr.mxu0 0.0
    %4339 = vmatpush1.msra.mxu0 0.0
    %4340 = vmatprep.subr.mxu0 0.0
    %4341 = vmatpush1.msra.mxu0 0.0
    %4342 = vmatprep.subr.mxu0 0.0
    %4343 = vmatpush1.msra.mxu0 0.0
    %4344 = vmatprep.subr.mxu0 0.0
    %4345 = vmatpush1.msra.mxu0 0.0
    %4346 = vmatprep.subr.mxu0 0.0
    %4347 = vmatpush1.msra.mxu0 0.0
    %4348 = vmatprep.subr.mxu0 0.0
    %4349 = vmatpush1.msra.mxu0 0.0
    %4350 = vmatprep.subr.mxu0 0.0
    %4351 = vmatpush1.msra.mxu0 0.0
    %4352 = vmatprep.subr.mxu0 0.0
    %4353 = vmatpush1.msra.mxu0 0.0
    %4354 = vmatprep.subr.mxu0 0.0
    %4355 = vmatpush1.msra.mxu0 0.0
    %4356 = vmatprep.subr.mxu0 0.0
    %4357 = vmatpush1.msra.mxu0 0.0
    %4358 = vmatprep.subr.mxu0 0.0
    %4359 = vmatpush1.msra.mxu0 0.0
    %4360 = vmatprep.subr.mxu0 0.0
    %4361 = vmatpush1.msra.mxu0 0.0
    %4362 = vmatprep.subr.mxu0 0.0
    %4363 = vmatpush1.msra.mxu0 0.0
    %4364 = vmatprep.subr.mxu0 0.0
    %4365 = vmatpush1.msra.mxu0 0.0
    %4366 = vmatprep.subr.mxu0 0.0
    %4367 = vmatpush1.msra.mxu0 0.0
    %4368 = vmatprep.subr.mxu0 0.0
    %4369 = vmatpush1.msra.mxu0 0.0
    %4370 = vmatprep.subr.mxu0 0.0
    %4371 = vmatpush1.msra.mxu0 0.0
    %4372 = vmatprep.subr.mxu0 0.0
    %4373 = vmatpush1.msra.mxu0 0.0
    %4374 = vmatprep.subr.mxu0 0.0
    %4375 = vmatpush1.msra.mxu0 0.0
    %4376 = vmatprep.subr.mxu0 0.0
    %4377 = vmatpush1.msra.mxu0 0.0
    %4378 = vmatprep.subr.mxu0 0.0
    %4379 = vmatpush1.msra.mxu0 0.0
    %4380 = vmatprep.mubr.f32.mxu0 0.0
    %4381 = vmatmul.mubr.f32.gmra.mrb[0].mxu0 %v4314
    %v4382 = vpop.f32.mrb[0].mxu0
    %v4383 = vadd.f32 %v4307, %v4382
    %v4384 = vpop.f32.mrb[0].mxu0
    %4385 = vdwg.mxu0
    %vm4386 = vcmask 123904
    %v4387 = vsel %vm4386, %v4383, 0.0
    %4388 = vadd.xlane.f32.xlu0 %v4387
    %v4389 = vpop.xlane.xlu0 %4388
    %v4390 = vrcp.pop 16.0
    %v4391 = vmul.f32 %v4389, %v4390
    %v4392 = vsub.f32 %v4383, %v4391
    %v4393 = vmul.f32 %v4392, %v4392
    %v4394 = vsel %vm4386, %v4393, 0.0
    %4395 = vadd.xlane.f32.xlu0 %v4394
    %v4396 = vpop.xlane.xlu0 %4395
    %v4397 = vmul.f32 %v4396, %v4390
    %v4398 = vadd.f32 %v4397, 1e-12
    %v4399 = vrsqrt.pop %v4398
    %v4400 = vmul.f32 %v4392, %v4399
    %4401 = vst.msk [vmem:[#allocation2] sm:$0x3] %vm4386, %v4400
    // Predicated region
    $region46: #{proj_encoder_wd_forward.1} parent=1 // pred_check
      _
    $region47: #{proj_encoder_wd_forward.1} parent=1 // pred_check_branch
      %4403 = sbr.rel (0) target = $region49
    $region48: #{proj_encoder_wd_forward.1} parent=1 // pred_region
      %s4405 = ssub.s32 32, 32
      %4406 = vsyncadd [#allocation3], %s4405
      %s4408 = sshll.u32 [#allocation2], 4
      %s4409 = int_to_ptr.vmem [resolvable:$true] %s4408
      %4411 = dma.vmem_to_hbm [thread:$0]  %s4409, 32, %s11, [#allocation3]
    $region49: #{proj_encoder_wd_forward.1} parent=1 // pred_fallthru
      _
    // Predicated region
    $region50: #{proj_encoder_wd_forward.1} parent=1 // pred_check
      _
    $region51: #{proj_encoder_wd_forward.1} parent=1 // pred_check_branch
      %4413 = sbr.rel (0) target = $region53
    $region52: #{proj_encoder_wd_forward.1} parent=1 // pred_region
      %4414 = dma.done [#allocation3], 32
    $region53: #{proj_encoder_wd_forward.1} parent=1 // pred_fallthru
      _
    %4415 = vsyncpa [#allocation3], 1

</llo_original>
